<compile_context>
chip_gen: v5e
topology: v5e:2x2
jax: 0.10.0
libtpu: 0.0.40
codegen_flags: <defaults>
</compile_context>

<pallas_src>
import jax
import jax.numpy as jnp
from jax.experimental import pallas as pl
from jax.experimental.pallas import tpu as pltpu


def _layer1_partial_kernel(x_ref, w1_ref, o_ref, acc_ref):
    """Phase 1: partial (pre-bias, pre-ReLU) layer-1 matmul.

    grid = (p_split, nk).  The leading 'parallel' axis splits the K reduction
    into independent halves (one per v7x TensorCore); the inner 'arbitrary'
    axis streams contiguous (tk1, 2048) bf16 W1 tiles and accumulates in f32
    scratch.  Each half writes its partial sum to its own output slot; the
    cross-half reduction + bias + ReLU happen in phase 2.
    """
    k = pl.program_id(1)

    @pl.when(k == 0)
    def _():
        acc_ref[...] = jnp.zeros_like(acc_ref)

    acc_ref[...] += jnp.dot(
        x_ref[...], w1_ref[...], preferred_element_type=jnp.float32
    )

    @pl.when(k == pl.num_programs(1) - 1)
    def _():
        o_ref[...] = acc_ref[...][None].astype(o_ref.dtype)


def _layers23_kernel(h1p_ref, b1_ref, w2_ref, b2_ref, w3_ref, b3_ref, o_ref):
    """Phase 2: reduce K-split partials, bias+ReLU, then layers 2 and 3.

    All operands are VMEM-resident (single grid step)."""
    h1 = jnp.sum(h1p_ref[...], axis=0) + b1_ref[...]
    h1 = jnp.maximum(h1, 0.0).astype(w2_ref.dtype)
    h2 = jnp.dot(h1, w2_ref[...], preferred_element_type=jnp.float32)
    h2 = jnp.maximum(h2 + b2_ref[...], 0.0).astype(w3_ref.dtype)
    logits = jnp.dot(h2, w3_ref[...], preferred_element_type=jnp.float32)
    o_ref[...] = (logits + b3_ref[...]).astype(o_ref.dtype)


def fused_mlp(x2d, w1, b1, w2, b2, w3, b3, *, tk1=512, p_split=2,
              weight_dtype=jnp.bfloat16):
    """x2d: [M, 4096] f32; returns logits [M, 62] f32 via two pallas_calls."""
    M, K1 = x2d.shape
    K1w, N1 = w1.shape
    N1w, N2 = w2.shape
    N2w, N3 = w3.shape
    assert K1 == K1w and N1 == N1w and N2 == N2w
    assert b1.shape == (N1,) and b2.shape == (N2,) and b3.shape == (N3,)
    assert K1 % (p_split * tk1) == 0, "p_split * tk1 must divide K1"
    nk = K1 // (p_split * tk1)

    # bf16 weight / activation streaming; f32 MXU accumulation in the kernels.
    xs = x2d.astype(weight_dtype)
    w1s = w1.astype(weight_dtype)
    w2s = w2.astype(weight_dtype)

    # Lane-dense final output: pad W3 / b3 columns up to a multiple of 128.
    Np = ((N3 + 127) // 128) * 128
    w3s = jnp.zeros((N2, Np), weight_dtype).at[:, :N3].set(w3.astype(weight_dtype))
    b3p = jnp.zeros((Np,), b3.dtype).at[:N3].set(b3)

    b1r = b1.reshape(1, N1)
    b2r = b2.reshape(1, N2)
    b3r = b3p.reshape(1, Np)

    itemsz = jnp.dtype(weight_dtype).itemsize

    # ---- Phase 1: layer-1 partial matmul (dominant, weight-stream bound) ----
    ce1 = pl.CostEstimate(
        flops=2 * M * K1 * N1,
        transcendentals=0,
        bytes_accessed=K1 * N1 * itemsz + M * K1 * itemsz + p_split * M * N1 * 4,
    )
    h1_partial = pl.pallas_call(
        _layer1_partial_kernel,
        out_shape=jax.ShapeDtypeStruct((p_split, M, N1), jnp.float32),
        grid_spec=pltpu.PrefetchScalarGridSpec(
            num_scalar_prefetch=0,
            grid=(p_split, nk),
            in_specs=[
                # x tile at global K block p*nk + k (tiny, bf16)
                pl.BlockSpec((M, tk1), lambda p, k: (0, p * nk + k)),
                # W1 tile: full-width rows -> contiguous ~2 MiB bf16 DMA
                pl.BlockSpec((tk1, N1), lambda p, k: (p * nk + k, 0)),
            ],
            out_specs=pl.BlockSpec((1, M, N1), lambda p, k: (p, 0, 0)),
            scratch_shapes=[pltpu.VMEM((M, N1), jnp.float32)],
        ),
        compiler_params=pltpu.CompilerParams(
            dimension_semantics=("parallel", "arbitrary"),
        ),
        cost_estimate=ce1,
    )(xs, w1s)

    # ---- Phase 2: reduce partials + layers 2/3 (all VMEM-resident, 1 step) --
    ce2 = pl.CostEstimate(
        flops=2 * M * (N1 * N2 + N2 * Np),
        transcendentals=0,
        bytes_accessed=(N1 * N2 + N2 * Np) * itemsz
        + p_split * M * N1 * 4 + M * Np * 4,
    )
    out = pl.pallas_call(
        _layers23_kernel,
        out_shape=jax.ShapeDtypeStruct((M, Np), jnp.float32),
        cost_estimate=ce2,
    )(h1_partial, b1r, w2s, b2r, w3s, b3r)
    return out[:, :N3]


def init_params(key):
    """Deterministic parameter init matching the PyTorch module's shapes."""
    dims = [(64 * 64, 2048), (2048, 512), (512, 62)]
    params = []
    for fan_in, fan_out in dims:
        kw, kb, key = jax.random.split(key, 3)
        bound = 1.0 / jnp.sqrt(fan_in)
        w = jax.random.uniform(kw, (fan_in, fan_out), jnp.float32, -bound, bound)
        b = jax.random.uniform(kb, (fan_out,), jnp.float32, -bound, bound)
        params.append((w, b))
    return params


def neural_network_forward(x, params):
    """x: [batch, 64, 64] (or [batch, 1, 64, 64]); returns logits [batch, 62]."""
    batch = x.shape[0]
    h = x.reshape(batch, -1)  # nn.Flatten()
    (w1, b1), (w2, b2), (w3, b3) = params
    return fused_mlp(h, w1, b1, w2, b2, w3, b3)


if __name__ == "__main__":
    key = jax.random.PRNGKey(0)
    kx, kp = jax.random.split(key)

    # Small batch; forward implies 64x64 single-channel images -> 4096 features.
    x = jax.random.normal(kx, (2, 64, 64), dtype=jnp.float32)
    params = init_params(kp)

    logits = neural_network_forward(x, params)
    logits = jax.block_until_ready(logits)

    # Reference with the same bf16 weight stream / f32 accumulation numerics.
    (w1, b1), (w2, b2), (w3, b3) = params
    h = x.reshape(2, -1).astype(jnp.bfloat16)
    h = jnp.dot(h, w1.astype(jnp.bfloat16),
                preferred_element_type=jnp.float32) + b1
    h = jnp.maximum(h, 0.0).astype(jnp.bfloat16)
    h = jnp.dot(h, w2.astype(jnp.bfloat16),
                preferred_element_type=jnp.float32) + b2
    h = jnp.maximum(h, 0.0).astype(jnp.bfloat16)
    ref = jnp.dot(h, w3.astype(jnp.bfloat16),
                  preferred_element_type=jnp.float32) + b3

    assert logits.shape == (2, 62)
    assert jnp.allclose(logits, ref, atol=2e-2, rtol=2e-2), float(
        jnp.max(jnp.abs(logits - ref)))

    print("KERNEL_OK")
</pallas_src>

<mosaic_0001>
module attributes {stable_mosaic.version = 11 : i64} {
  func.func @_layer1_partial_kernel(%arg0: i32, %arg1: i32, %arg2: memref<2x512xbf16, #tpu.memory_space<vmem>>, %arg3: memref<512x2048xbf16, #tpu.memory_space<vmem>>, %arg4: memref<1x2x2048xf32, #tpu.memory_space<vmem>>, %arg5: memref<2x2048xf32, #tpu.memory_space<vmem>>) attributes {dimension_semantics = [#tpu.dimension_semantics<parallel>, #tpu.dimension_semantics<arbitrary>], iteration_bounds = array<i64: 2, 4>, scalar_prefetch = 0 : i64, scratch_operands = 1 : i64, tpu.core_type = #tpu.core_type<tc>, window_params = [{transform_indices = @transform_0, window_bounds = array<i64: 2, 512>}, {transform_indices = @transform_1, window_bounds = array<i64: 512, 2048>}, {transform_indices = @transform_2, window_bounds = array<i64: 1, 2, 2048>}]} {
    %c0_i32 = arith.constant 0 : i32
    %0 = arith.cmpi eq, %arg1, %c0_i32 : i32
    %1 = arith.extui %0 : i1 to i32
    %c0_i32_0 = arith.constant 0 : i32
    %2 = arith.cmpi ne, %1, %c0_i32_0 : i32
    scf.if %2 {
      %cst_9 = arith.constant 0.000000e+00 : f32
      %12 = vector.broadcast %cst_9 : f32 to vector<2x2048xf32>
      %c0_10 = arith.constant 0 : index
      %c0_11 = arith.constant 0 : index
      %13 = vector.load %arg5[%c0_10, %c0_11] : memref<2x2048xf32, #tpu.memory_space<vmem>>, vector<2x2048xf32>
      tpu.vector_store %arg5[%c0_10, %c0_11], %12 {strides = array<i32>} : memref<2x2048xf32, #tpu.memory_space<vmem>>, vector<2x2048xf32>,
    } else {
    }
    %c0 = arith.constant 0 : index
    %c0_1 = arith.constant 0 : index
    %3 = vector.load %arg5[%c0, %c0_1] : memref<2x2048xf32, #tpu.memory_space<vmem>>, vector<2x2048xf32>
    %c0_2 = arith.constant 0 : index
    %c0_3 = arith.constant 0 : index
    %4 = vector.load %arg2[%c0_2, %c0_3] : memref<2x512xbf16, #tpu.memory_space<vmem>>, vector<2x512xbf16>
    %c0_4 = arith.constant 0 : index
    %c0_5 = arith.constant 0 : index
    %5 = vector.load %arg3[%c0_4, %c0_5] : memref<512x2048xbf16, #tpu.memory_space<vmem>>, vector<512x2048xbf16>
    %cst = arith.constant dense<0.000000e+00> : vector<2x2048xf32>
    %6 = tpu.matmul %4, %5, %cst {dimension_numbers = #tpu.dot_dimension_numbers<[1], [0], [0], [1], [0, 0, 1, 1], [], []>} : vector<2x512xbf16>, vector<512x2048xbf16>, vector<2x2048xf32> -> vector<2x2048xf32>
    %7 = arith.addf %3, %6 : vector<2x2048xf32>
    %c0_6 = arith.constant 0 : index
    %c0_7 = arith.constant 0 : index
    %8 = vector.load %arg5[%c0_6, %c0_7] : memref<2x2048xf32, #tpu.memory_space<vmem>>, vector<2x2048xf32>
    tpu.vector_store %arg5[%c0_6, %c0_7], %7 {strides = array<i32>} : memref<2x2048xf32, #tpu.memory_space<vmem>>, vector<2x2048xf32>,
    %c3_i32 = arith.constant 3 : i32
    %9 = arith.cmpi eq, %arg1, %c3_i32 : i32
    %10 = arith.extui %9 : i1 to i32
    %c0_i32_8 = arith.constant 0 : i32
    %11 = arith.cmpi ne, %10, %c0_i32_8 : i32
    scf.if %11 {
      %c0_9 = arith.constant 0 : index
      %c0_10 = arith.constant 0 : index
      %12 = vector.load %arg5[%c0_9, %c0_10] : memref<2x2048xf32, #tpu.memory_space<vmem>>, vector<2x2048xf32>
      %13 = vector.shape_cast %12 : vector<2x2048xf32> to vector<1x2x2048xf32>
      %c0_11 = arith.constant 0 : index
      %c0_12 = arith.constant 0 : index
      %c0_13 = arith.constant 0 : index
      %14 = vector.load %arg4[%c0_11, %c0_12, %c0_13] : memref<1x2x2048xf32, #tpu.memory_space<vmem>>, vector<1x2x2048xf32>
      tpu.vector_store %arg4[%c0_11, %c0_12, %c0_13], %13 {strides = array<i32>} : memref<1x2x2048xf32, #tpu.memory_space<vmem>>, vector<1x2x2048xf32>,
    } else {
    }
    return
  }
  func.func @transform_0(%arg0: i32, %arg1: i32) -> (i32, i32) {
    %c4_i32 = arith.constant 4 : i32
    %0 = arith.muli %arg0, %c4_i32 : i32
    %1 = arith.addi %0, %arg1 : i32
    %c0_i32 = arith.constant 0 : i32
    %c0_i32_0 = arith.constant 0 : i32
    return %c0_i32, %1 : i32, i32
  }
  func.func @transform_1(%arg0: i32, %arg1: i32) -> (i32, i32) {
    %c4_i32 = arith.constant 4 : i32
    %0 = arith.muli %arg0, %c4_i32 : i32
    %1 = arith.addi %0, %arg1 : i32
    %c0_i32 = arith.constant 0 : i32
    %c0_i32_0 = arith.constant 0 : i32
    return %1, %c0_i32 : i32, i32
  }
  func.func @transform_2(%arg0: i32, %arg1: i32) -> (i32, i32, i32) {
    %c0_i32 = arith.constant 0 : i32
    %c0_i32_0 = arith.constant 0 : i32
    %c0_i32_1 = arith.constant 0 : i32
    return %arg0, %c0_i32, %c0_i32_0 : i32, i32, i32
  }
}

</mosaic_0001>

<llo_original>
// kernel: tpu_custom_call.1
$region0: #{tpu_custom_call.1}
  #allocation0 [shape = 'u32[]', space=smem, size = 0x4, offset = 0x4, fixed_abs, tag = 'smem constant byte address 0x4 - core index']
  #allocation1 [shape = 'u32[72,128]{1,0:T(1,128)}', space=vmem, size = 0x9000, scoped, tag = 'internal scratch']
  #allocation2 [shape = 'f32[2,2048]{1,0:T(2,128)}', space=vmem, size = 0x4000, scoped, tag = 'scratch operand']
  %s0 = inlined_call_operand.hbm [shape: bf16[2,4096], index: 0, kind: input, shape index: {}]
  %s1 = inlined_call_operand.hbm [shape: bf16[4096,2048], index: 1, kind: input, shape index: {}]
  %s2 = inlined_call_operand.hbm [shape: f32[2,2,2048], index: 2, kind: output, shape index: {}]
  %s3 = sld [smem:[#allocation0]]
  $region57: #{tpu_custom_call.1} parent=0
    _
  %s5 = ssub.s32 1, %s3
  %s6 = scalar_select 0, %s5, %s3
  $region1: #{tpu_custom_call.1} parent=0
    #allocation3 [shape = 'u8[4096]{0}', space=vmem, size = 0x1000, scoped, tag = 'input window, operand 0']
    #allocation4 [shape = 's32[2]{0}', space=sflag, size = 0x8, scoped, tag = 'scoped memory for tpu_custom_call.1']
    #allocation5 [shape = 's32[2]{0}', space=sflag, size = 0x8, scoped, tag = 'scoped memory for tpu_custom_call.1']
    #allocation6 [shape = 'u8[4194304]{0}', space=vmem, size = 0x400000, scoped, tag = 'input window, operand 1']
    #allocation7 [shape = 's32[2]{0}', space=sflag, size = 0x8, scoped, tag = 'scoped memory for tpu_custom_call.1']
    #allocation8 [shape = 'u8[32768]{0}', space=vmem, size = 0x8000, scoped, tag = 'output window, operand 0']
    %7 = vsyncpa [#allocation4], 0
    %s8 = scalar_lea.sflag [#allocation4], 1
    %9 = vsyncpa %s8, 0
    %10 = vsyncpa [#allocation7], 0
    %s11 = scalar_lea.sflag [#allocation7], 1
    %12 = vsyncpa %s11, 0
    %13 = vsyncpa [#allocation5], 0
    %s14 = scalar_lea.sflag [#allocation5], 1
    %15 = vsyncpa %s14, 0
    loop: start=0, step=1, limit=10
    $region2: #{tpu_custom_call.1} parent=1 // loop_pre_header
      _
    $region3: #{tpu_custom_call.1} parent=1 // loop_header
      %s17 = sphi 0, %s21
      %p18 = scmp.ge.s32.totalorder %s17, 10
      %s24 = sphi 0, %s36
      %s25 = sphi 0, %s32
      %s26 = sphi 0, %s24
      %s27 = sphi 0, %s25
      %s28 = sphi 0, %s26
      %s29 = sphi 0, %s27
      %s43 = sphi 0, %s45
      %s46 = sphi 0, %s43
      %s47 = sphi 0, %s46
      %s63 = sphi 0, %s47
      %s73 = sphi 0, %s75
      %s76 = sphi 0, %s73
      %s77 = sphi 0, %s76
      %s93 = sphi 0, %s77
      %s99 = sphi 0, %s101
      %s102 = sphi 0, %s99
      %s103 = sphi 0, %s102
      %s119 = sphi 0, %s103
    $region4: #{tpu_custom_call.1} parent=1 // loop_header_branch
      %20 = sbr.rel (%p18) target = $region8
    $region5: #{tpu_custom_call.1} parent=1 // loop_body
      %s22 = ssub.s32 %s17, 1
      %s23 = ssub.s32 %s17, 2
      %s30 = sadd.s32 1, %s25
      %p31 = scmp.ge.s32.totalorder %s30, 4
      %s32 = scalar_select %p31, 0, %s30
      %s33 = sadd.s32 1, %s24
      %s34 = scalar_select %p31, %s33, %s24
      %p35 = scmp.ge.s32.totalorder %s34, 2
      %s36 = scalar_select %p35, 0, %s34
      %s37 = smul.u32 %s24, 4
      %s38 = sadd.s32 %s37, %s25
      %s39 = smul.u32 %s36, 4
      %s40 = sadd.s32 %s39, %s32
      %s41 = ssub.s32 %s38, %s40
      %p42 = scmp.eq.s32.totalorder %s41, 0
      %s44 = sadd.s32 %s43, 1
      %s45 = scalar_select %p42, %s43, %s44
      %p48 = pneg %p42
      %p49 = scmp.eq.s32.totalorder %s17, 7
      %p50 = por %p48, %p49
      %p51 = scmp.ne.s32.totalorder %s43, %s46
      %p52 = scmp.eq.s32.totalorder %s17, 0
      %p53 = por %p51, %p52
      %p54 = scmp.ne.s32.totalorder %s43, %s46
      %p55 = scmp.eq.s32.totalorder %s22, 7
      %p56 = por %p54, %p55
      %p57 = scmp.ne.s32.totalorder %s46, %s47
      %p58 = scmp.eq.s32.totalorder %s22, 0
      %p59 = por %p57, %p58
      %p60 = scmp.ne.s32.totalorder %s46, %s47
      %p61 = scmp.eq.s32.totalorder %s23, 7
      %p62 = por %p60, %p61
      %p64 = scmp.ne.s32.totalorder %s47, %s63
      %p65 = scmp.eq.s32.totalorder %s23, 0
      %p66 = por %p64, %p65
      %s67 = smul.u32 %s24, 4
      %s68 = sadd.s32 %s67, %s25
      %s69 = smul.u32 %s36, 4
      %s70 = sadd.s32 %s69, %s32
      %s71 = ssub.s32 %s68, %s70
      %p72 = scmp.eq.s32.totalorder %s71, 0
      %s74 = sadd.s32 %s73, 1
      %s75 = scalar_select %p72, %s73, %s74
      %p78 = pneg %p72
      %p79 = scmp.eq.s32.totalorder %s17, 7
      %p80 = por %p78, %p79
      %p81 = scmp.ne.s32.totalorder %s73, %s76
      %p82 = scmp.eq.s32.totalorder %s17, 0
      %p83 = por %p81, %p82
      %p84 = scmp.ne.s32.totalorder %s73, %s76
      %p85 = scmp.eq.s32.totalorder %s22, 7
      %p86 = por %p84, %p85
      %p87 = scmp.ne.s32.totalorder %s76, %s77
      %p88 = scmp.eq.s32.totalorder %s22, 0
      %p89 = por %p87, %p88
      %p90 = scmp.ne.s32.totalorder %s76, %s77
      %p91 = scmp.eq.s32.totalorder %s23, 7
      %p92 = por %p90, %p91
      %p94 = scmp.ne.s32.totalorder %s77, %s93
      %p95 = scmp.eq.s32.totalorder %s23, 0
      %p96 = por %p94, %p95
      %s97 = ssub.s32 %s24, %s36
      %p98 = scmp.eq.s32.totalorder %s97, 0
      %s100 = sadd.s32 %s99, 1
      %s101 = scalar_select %p98, %s99, %s100
      %p104 = pneg %p98
      %p105 = scmp.eq.s32.totalorder %s17, 7
      %p106 = por %p104, %p105
      %p107 = scmp.ne.s32.totalorder %s99, %s102
      %p108 = scmp.eq.s32.totalorder %s17, 0
      %p109 = por %p107, %p108
      %p110 = scmp.ne.s32.totalorder %s99, %s102
      %p111 = scmp.eq.s32.totalorder %s22, 7
      %p112 = por %p110, %p111
      %p113 = scmp.ne.s32.totalorder %s102, %s103
      %p114 = scmp.eq.s32.totalorder %s22, 0
      %p115 = por %p113, %p114
      %p116 = scmp.ne.s32.totalorder %s102, %s103
      %p117 = scmp.eq.s32.totalorder %s23, 7
      %p118 = por %p116, %p117
      %p120 = scmp.ne.s32.totalorder %s103, %s119
      %p121 = scmp.eq.s32.totalorder %s23, 0
      %p122 = por %p120, %p121
      %p123 = scmp.le.s32.totalorder 1, %s17
      %p124 = scmp.lt.s32.totalorder %s17, 9
      %p125 = pnand %p123, %p124
      %p126 = pneg %p125
      // Predicated region
      $region9: #{tpu_custom_call.1} parent=5 // pred_check
        _
      $region10: #{tpu_custom_call.1} parent=5 // pred_check_branch
        %128 = sbr.rel (%p125) target = $region12
      $region11: #{tpu_custom_call.1} parent=5 // pred_region
        %s129 = ssub.s32 %s17, 1
      $region12: #{tpu_custom_call.1} parent=5 // pred_fallthru
        _
      %p130 = scmp.lt.s32.totalorder %s17, 8
      // Predicated region
      $region13: #{tpu_custom_call.1} parent=5 // pred_check
        %p131 = pneg %p130
      $region14: #{tpu_custom_call.1} parent=5 // pred_check_branch
        %133 = sbr.rel (%p131) target = $region16
      $region15: #{tpu_custom_call.1} parent=5 // pred_region
        // Predicated region
        $region17: #{tpu_custom_call.1} parent=15 // pred_check
          %p134 = pneg %p53
        $region18: #{tpu_custom_call.1} parent=15 // pred_check_branch
          %136 = sbr.rel (%p134) target = $region20
        $region19: #{tpu_custom_call.1} parent=15 // pred_region
          %s137 = sand.u32 %s43, 1
          %s138 = scalar_lea.sflag [#allocation4], %s137
          %s139 = sand.u32 %s43, 1
          %s140 = smul.addr %s139, 4
          %s141 = scalar_lea.vmem [#allocation3], %s140
          %s142 = smul.u32 %s24, 4
          %s143 = sadd.s32 %s142, %s25
          %s144 = smul.u32 4, %s143
          %146 = vsyncadd %s138, 0
          %s147 = scalar_lea.hbm %s0, %s144
          %s149 = sshll.u32 %s147, 4
          %s150 = int_to_ptr.hbm [resolvable:$true] %s149
          %s151 = sshll.u32 %s141, 4
          %s152 = int_to_ptr.vmem [resolvable:$true] %s151
          %154 = dma.hbm_to_vmem [thread:$0]  %s150, 64, %s152, %s138
        $region20: #{tpu_custom_call.1} parent=15 // pred_fallthru
          _
        // Predicated region
        $region21: #{tpu_custom_call.1} parent=15 // pred_check
          %p155 = pneg %p83
        $region22: #{tpu_custom_call.1} parent=15 // pred_check_branch
          %157 = sbr.rel (%p155) target = $region24
        $region23: #{tpu_custom_call.1} parent=15 // pred_region
          %s158 = sand.u32 %s73, 1
          %s159 = scalar_lea.sflag [#allocation7], %s158
          %s160 = sand.u32 %s73, 1
          %s161 = smul.addr %s160, 4096
          %s162 = scalar_lea.vmem [#allocation6], %s161
          %s163 = smul.u32 %s24, 4
          %s164 = sadd.s32 %s163, %s25
          %s165 = smul.u32 64, %s164
          %167 = vsyncadd %s159, 0
          %s168 = smul.addr %s165, 16
          %s169 = smul.addr %s168, 4
          %s170 = scalar_lea.hbm %s1, %s169
          %s171 = sshll.u32 %s170, 4
          %s172 = int_to_ptr.hbm [resolvable:$true] %s171
          %s173 = sshll.u32 %s162, 4
          %s174 = int_to_ptr.vmem [resolvable:$true] %s173
          %179 = dma.hbm_to_vmem [thread:$0]  %s172, 65536, %s174, %s159, 1024, 1024, 64
        $region24: #{tpu_custom_call.1} parent=15 // pred_fallthru
          _
      $region16: #{tpu_custom_call.1} parent=5 // pred_fallthru
        _
      %p180 = scmp.le.s32.totalorder 1, %s17
      %p181 = scmp.lt.s32.totalorder %s17, 9
      %p182 = pnand %p180, %p181
      %p183 = pneg %p182
      // Predicated region
      $region25: #{tpu_custom_call.1} parent=5 // pred_check
        _
      $region26: #{tpu_custom_call.1} parent=5 // pred_check_branch
        %185 = sbr.rel (%p182) target = $region28
      $region27: #{tpu_custom_call.1} parent=5 // pred_region
        %s186 = ssub.s32 %s17, 1
        %s187 = sand.u32 %s46, 1
        %s188 = scalar_lea.sflag [#allocation4], %s187
        %s189 = sand.u32 %s46, 1
        %s190 = smul.addr %s189, 4
        %s191 = scalar_lea.vmem [#allocation3], %s190
        // Predicated region
        $region29: #{tpu_custom_call.1} parent=27 // pred_check
          %p192 = pneg %p59
        $region30: #{tpu_custom_call.1} parent=27 // pred_check_branch
          %194 = sbr.rel (%p192) target = $region32
        $region31: #{tpu_custom_call.1} parent=27 // pred_region
          %196 = dma.done %s188, 64
        $region32: #{tpu_custom_call.1} parent=27 // pred_fallthru
          _
        %s197 = sand.u32 %s76, 1
        %s198 = scalar_lea.sflag [#allocation7], %s197
        %s199 = sand.u32 %s76, 1
        %s200 = smul.addr %s199, 4096
        %s201 = scalar_lea.vmem [#allocation6], %s200
        // Predicated region
        $region33: #{tpu_custom_call.1} parent=27 // pred_check
          %p202 = pneg %p89
        $region34: #{tpu_custom_call.1} parent=27 // pred_check_branch
          %204 = sbr.rel (%p202) target = $region36
        $region35: #{tpu_custom_call.1} parent=27 // pred_region
          %206 = dma.done %s198, 65536
        $region36: #{tpu_custom_call.1} parent=27 // pred_fallthru
          _
        %s207 = sand.u32 %s46, 1
        %s208 = scalar_lea.sflag [#allocation4], %s207
        %s209 = sand.u32 %s46, 1
        %s210 = smul.addr %s209, 4
        %s211 = scalar_lea.vmem [#allocation3], %s210
        %p212 = pneg %p59
        %p213 = pneg %p56
        %s214 = sand.u32 %s76, 1
        %s215 = scalar_lea.sflag [#allocation7], %s214
        %s216 = sand.u32 %s76, 1
        %s217 = smul.addr %s216, 4096
        %s218 = scalar_lea.vmem [#allocation6], %s217
        %p219 = pneg %p89
        %p220 = pneg %p86
        %p221 = pneg %p115
        %p222 = pneg %p112
        %s223 = sand.u32 %s102, 1
        %s224 = scalar_lea.sflag [#allocation5], %s223
        %s225 = sand.u32 %s102, 1
        %s226 = smul.addr %s225, 32
        %s227 = scalar_lea.vmem [#allocation8], %s226
        %s228 = smul.u32 %s26, 4
        %s229 = sadd.s32 %s228, %s27
        %s230 = smul.u32 4, %s229
        %s231 = smul.u32 %s26, 4
        %s232 = sadd.s32 %s231, %s27
        %s233 = smul.u32 64, %s232
        %p234 = scmp.eq.s32.totalorder %s27, 0
        // Predicated region
        $region37: #{tpu_custom_call.1} parent=27 // pred_check
          %p235 = pneg %p234
        $region38: #{tpu_custom_call.1} parent=27 // pred_check_branch
          %237 = sbr.rel (%p235) target = $region40
        $region39: #{tpu_custom_call.1} parent=27 // pred_region
          %238 = vst [vmem:[#allocation2] sm:$0xff] 0.0
          %239 = vst [vmem:[#allocation2 + $0x8] sm:$0xff] 0.0
          %240 = vst [vmem:[#allocation2 + $0x10] sm:$0xff] 0.0
          %241 = vst [vmem:[#allocation2 + $0x18] sm:$0xff] 0.0
        $region40: #{tpu_custom_call.1} parent=27 // pred_fallthru
          _
        %v242 = vld [vmem:[#allocation2] sm:$0xff]
        %v243 = vld [vmem:[#allocation2 + $0x8] sm:$0xff]
        %v244 = vld [vmem:[#allocation2 + $0x10] sm:$0xff]
        %v245 = vld [vmem:[#allocation2 + $0x18] sm:$0xff]
        %v246 = vld [vmem:[%s191] sm:$0xf]
        %v247 = vld [vmem:[%s201] sm:$0xff]
        %v248 = vld [vmem:[%s201 + $0x8] sm:$0xff]
        %v249 = vld [vmem:[%s201 + $0x10] sm:$0xff]
        %v250 = vld [vmem:[%s201 + $0x18] sm:$0xff]
        %v251 = vld [vmem:[%s201 + $0x20] sm:$0xff]
        %v252 = vld [vmem:[%s201 + $0x28] sm:$0xff]
        %v253 = vld [vmem:[%s201 + $0x30] sm:$0xff]
        %v254 = vld [vmem:[%s201 + $0x38] sm:$0xff]
        %v255 = vld [vmem:[%s201 + $0x40] sm:$0xff]
        %v256 = vld [vmem:[%s201 + $0x48] sm:$0xff]
        %v257 = vld [vmem:[%s201 + $0x50] sm:$0xff]
        %v258 = vld [vmem:[%s201 + $0x58] sm:$0xff]
        %v259 = vld [vmem:[%s201 + $0x60] sm:$0xff]
        %v260 = vld [vmem:[%s201 + $0x68] sm:$0xff]
        %v261 = vld [vmem:[%s201 + $0x70] sm:$0xff]
        %v262 = vld [vmem:[%s201 + $0x78] sm:$0xff]
        %v263 = vld [vmem:[%s201 + $0x80] sm:$0xff]
        %v264 = vld [vmem:[%s201 + $0x88] sm:$0xff]
        %v265 = vld [vmem:[%s201 + $0x90] sm:$0xff]
        %v266 = vld [vmem:[%s201 + $0x98] sm:$0xff]
        %v267 = vld [vmem:[%s201 + $0xa0] sm:$0xff]
        %v268 = vld [vmem:[%s201 + $0xa8] sm:$0xff]
        %v269 = vld [vmem:[%s201 + $0xb0] sm:$0xff]
        %v270 = vld [vmem:[%s201 + $0xb8] sm:$0xff]
        %v271 = vld [vmem:[%s201 + $0xc0] sm:$0xff]
        %v272 = vld [vmem:[%s201 + $0xc8] sm:$0xff]
        %v273 = vld [vmem:[%s201 + $0xd0] sm:$0xff]
        %v274 = vld [vmem:[%s201 + $0xd8] sm:$0xff]
        %v275 = vld [vmem:[%s201 + $0xe0] sm:$0xff]
        %v276 = vld [vmem:[%s201 + $0xe8] sm:$0xff]
        %v277 = vld [vmem:[%s201 + $0xf0] sm:$0xff]
        %v278 = vld [vmem:[%s201 + $0xf8] sm:$0xff]
        %v279 = vld [vmem:[%s201 + $0x100] sm:$0xff]
        %v280 = vld [vmem:[%s201 + $0x108] sm:$0xff]
        %v281 = vld [vmem:[%s201 + $0x110] sm:$0xff]
        %v282 = vld [vmem:[%s201 + $0x118] sm:$0xff]
        %v283 = vld [vmem:[%s201 + $0x120] sm:$0xff]
        %v284 = vld [vmem:[%s201 + $0x128] sm:$0xff]
        %v285 = vld [vmem:[%s201 + $0x130] sm:$0xff]
        %v286 = vld [vmem:[%s201 + $0x138] sm:$0xff]
        %v287 = vld [vmem:[%s201 + $0x140] sm:$0xff]
        %v288 = vld [vmem:[%s201 + $0x148] sm:$0xff]
        %v289 = vld [vmem:[%s201 + $0x150] sm:$0xff]
        %v290 = vld [vmem:[%s201 + $0x158] sm:$0xff]
        %v291 = vld [vmem:[%s201 + $0x160] sm:$0xff]
        %v292 = vld [vmem:[%s201 + $0x168] sm:$0xff]
        %v293 = vld [vmem:[%s201 + $0x170] sm:$0xff]
        %v294 = vld [vmem:[%s201 + $0x178] sm:$0xff]
        %v295 = vld [vmem:[%s201 + $0x180] sm:$0xff]
        %v296 = vld [vmem:[%s201 + $0x188] sm:$0xff]
        %v297 = vld [vmem:[%s201 + $0x190] sm:$0xff]
        %v298 = vld [vmem:[%s201 + $0x198] sm:$0xff]
        %v299 = vld [vmem:[%s201 + $0x1a0] sm:$0xff]
        %v300 = vld [vmem:[%s201 + $0x1a8] sm:$0xff]
        %v301 = vld [vmem:[%s201 + $0x1b0] sm:$0xff]
        %v302 = vld [vmem:[%s201 + $0x1b8] sm:$0xff]
        %v303 = vld [vmem:[%s201 + $0x1c0] sm:$0xff]
        %v304 = vld [vmem:[%s201 + $0x1c8] sm:$0xff]
        %v305 = vld [vmem:[%s201 + $0x1d0] sm:$0xff]
        %v306 = vld [vmem:[%s201 + $0x1d8] sm:$0xff]
        %v307 = vld [vmem:[%s201 + $0x1e0] sm:$0xff]
        %v308 = vld [vmem:[%s201 + $0x1e8] sm:$0xff]
        %v309 = vld [vmem:[%s201 + $0x1f0] sm:$0xff]
        %v310 = vld [vmem:[%s201 + $0x1f8] sm:$0xff]
        %v311 = vld [vmem:[%s201 + $0x200] sm:$0xff]
        %v312 = vld [vmem:[%s201 + $0x208] sm:$0xff]
        %v313 = vld [vmem:[%s201 + $0x210] sm:$0xff]
        %v314 = vld [vmem:[%s201 + $0x218] sm:$0xff]
        %v315 = vld [vmem:[%s201 + $0x220] sm:$0xff]
        %v316 = vld [vmem:[%s201 + $0x228] sm:$0xff]
        %v317 = vld [vmem:[%s201 + $0x230] sm:$0xff]
        %v318 = vld [vmem:[%s201 + $0x238] sm:$0xff]
        %v319 = vld [vmem:[%s201 + $0x240] sm:$0xff]
        %v320 = vld [vmem:[%s201 + $0x248] sm:$0xff]
        %v321 = vld [vmem:[%s201 + $0x250] sm:$0xff]
        %v322 = vld [vmem:[%s201 + $0x258] sm:$0xff]
        %v323 = vld [vmem:[%s201 + $0x260] sm:$0xff]
        %v324 = vld [vmem:[%s201 + $0x268] sm:$0xff]
        %v325 = vld [vmem:[%s201 + $0x270] sm:$0xff]
        %v326 = vld [vmem:[%s201 + $0x278] sm:$0xff]
        %v327 = vld [vmem:[%s201 + $0x280] sm:$0xff]
        %v328 = vld [vmem:[%s201 + $0x288] sm:$0xff]
        %v329 = vld [vmem:[%s201 + $0x290] sm:$0xff]
        %v330 = vld [vmem:[%s201 + $0x298] sm:$0xff]
        %v331 = vld [vmem:[%s201 + $0x2a0] sm:$0xff]
        %v332 = vld [vmem:[%s201 + $0x2a8] sm:$0xff]
        %v333 = vld [vmem:[%s201 + $0x2b0] sm:$0xff]
        %v334 = vld [vmem:[%s201 + $0x2b8] sm:$0xff]
        %v335 = vld [vmem:[%s201 + $0x2c0] sm:$0xff]
        %v336 = vld [vmem:[%s201 + $0x2c8] sm:$0xff]
        %v337 = vld [vmem:[%s201 + $0x2d0] sm:$0xff]
        %v338 = vld [vmem:[%s201 + $0x2d8] sm:$0xff]
        %v339 = vld [vmem:[%s201 + $0x2e0] sm:$0xff]
        %v340 = vld [vmem:[%s201 + $0x2e8] sm:$0xff]
        %v341 = vld [vmem:[%s201 + $0x2f0] sm:$0xff]
        %v342 = vld [vmem:[%s201 + $0x2f8] sm:$0xff]
        %v343 = vld [vmem:[%s201 + $0x300] sm:$0xff]
        %v344 = vld [vmem:[%s201 + $0x308] sm:$0xff]
        %v345 = vld [vmem:[%s201 + $0x310] sm:$0xff]
        %v346 = vld [vmem:[%s201 + $0x318] sm:$0xff]
        %v347 = vld [vmem:[%s201 + $0x320] sm:$0xff]
        %v348 = vld [vmem:[%s201 + $0x328] sm:$0xff]
        %v349 = vld [vmem:[%s201 + $0x330] sm:$0xff]
        %v350 = vld [vmem:[%s201 + $0x338] sm:$0xff]
        %v351 = vld [vmem:[%s201 + $0x340] sm:$0xff]
        %v352 = vld [vmem:[%s201 + $0x348] sm:$0xff]
        %v353 = vld [vmem:[%s201 + $0x350] sm:$0xff]
        %v354 = vld [vmem:[%s201 + $0x358] sm:$0xff]
        %v355 = vld [vmem:[%s201 + $0x360] sm:$0xff]
        %v356 = vld [vmem:[%s201 + $0x368] sm:$0xff]
        %v357 = vld [vmem:[%s201 + $0x370] sm:$0xff]
        %v358 = vld [vmem:[%s201 + $0x378] sm:$0xff]
        %v359 = vld [vmem:[%s201 + $0x380] sm:$0xff]
        %v360 = vld [vmem:[%s201 + $0x388] sm:$0xff]
        %v361 = vld [vmem:[%s201 + $0x390] sm:$0xff]
        %v362 = vld [vmem:[%s201 + $0x398] sm:$0xff]
        %v363 = vld [vmem:[%s201 + $0x3a0] sm:$0xff]
        %v364 = vld [vmem:[%s201 + $0x3a8] sm:$0xff]
        %v365 = vld [vmem:[%s201 + $0x3b0] sm:$0xff]
        %v366 = vld [vmem:[%s201 + $0x3b8] sm:$0xff]
        %v367 = vld [vmem:[%s201 + $0x3c0] sm:$0xff]
        %v368 = vld [vmem:[%s201 + $0x3c8] sm:$0xff]
        %v369 = vld [vmem:[%s201 + $0x3d0] sm:$0xff]
        %v370 = vld [vmem:[%s201 + $0x3d8] sm:$0xff]
        %v371 = vld [vmem:[%s201 + $0x3e0] sm:$0xff]
        %v372 = vld [vmem:[%s201 + $0x3e8] sm:$0xff]
        %v373 = vld [vmem:[%s201 + $0x3f0] sm:$0xff]
        %v374 = vld [vmem:[%s201 + $0x3f8] sm:$0xff]
        %v375 = vld [vmem:[%s201 + $0x400] sm:$0xff]
        %v376 = vld [vmem:[%s201 + $0x408] sm:$0xff]
        %v377 = vld [vmem:[%s201 + $0x410] sm:$0xff]
        %v378 = vld [vmem:[%s201 + $0x418] sm:$0xff]
        %v379 = vld [vmem:[%s201 + $0x420] sm:$0xff]
        %v380 = vld [vmem:[%s201 + $0x428] sm:$0xff]
        %v381 = vld [vmem:[%s201 + $0x430] sm:$0xff]
        %v382 = vld [vmem:[%s201 + $0x438] sm:$0xff]
        %v383 = vld [vmem:[%s201 + $0x440] sm:$0xff]
        %v384 = vld [vmem:[%s201 + $0x448] sm:$0xff]
        %v385 = vld [vmem:[%s201 + $0x450] sm:$0xff]
        %v386 = vld [vmem:[%s201 + $0x458] sm:$0xff]
        %v387 = vld [vmem:[%s201 + $0x460] sm:$0xff]
        %v388 = vld [vmem:[%s201 + $0x468] sm:$0xff]
        %v389 = vld [vmem:[%s201 + $0x470] sm:$0xff]
        %v390 = vld [vmem:[%s201 + $0x478] sm:$0xff]
        %v391 = vld [vmem:[%s201 + $0x480] sm:$0xff]
        %v392 = vld [vmem:[%s201 + $0x488] sm:$0xff]
        %v393 = vld [vmem:[%s201 + $0x490] sm:$0xff]
        %v394 = vld [vmem:[%s201 + $0x498] sm:$0xff]
        %v395 = vld [vmem:[%s201 + $0x4a0] sm:$0xff]
        %v396 = vld [vmem:[%s201 + $0x4a8] sm:$0xff]
        %v397 = vld [vmem:[%s201 + $0x4b0] sm:$0xff]
        %v398 = vld [vmem:[%s201 + $0x4b8] sm:$0xff]
        %v399 = vld [vmem:[%s201 + $0x4c0] sm:$0xff]
        %v400 = vld [vmem:[%s201 + $0x4c8] sm:$0xff]
        %v401 = vld [vmem:[%s201 + $0x4d0] sm:$0xff]
        %v402 = vld [vmem:[%s201 + $0x4d8] sm:$0xff]
        %v403 = vld [vmem:[%s201 + $0x4e0] sm:$0xff]
        %v404 = vld [vmem:[%s201 + $0x4e8] sm:$0xff]
        %v405 = vld [vmem:[%s201 + $0x4f0] sm:$0xff]
        %v406 = vld [vmem:[%s201 + $0x4f8] sm:$0xff]
        %v407 = vld [vmem:[%s201 + $0x500] sm:$0xff]
        %v408 = vld [vmem:[%s201 + $0x508] sm:$0xff]
        %v409 = vld [vmem:[%s201 + $0x510] sm:$0xff]
        %v410 = vld [vmem:[%s201 + $0x518] sm:$0xff]
        %v411 = vld [vmem:[%s201 + $0x520] sm:$0xff]
        %v412 = vld [vmem:[%s201 + $0x528] sm:$0xff]
        %v413 = vld [vmem:[%s201 + $0x530] sm:$0xff]
        %v414 = vld [vmem:[%s201 + $0x538] sm:$0xff]
        %v415 = vld [vmem:[%s201 + $0x540] sm:$0xff]
        %v416 = vld [vmem:[%s201 + $0x548] sm:$0xff]
        %v417 = vld [vmem:[%s201 + $0x550] sm:$0xff]
        %v418 = vld [vmem:[%s201 + $0x558] sm:$0xff]
        %v419 = vld [vmem:[%s201 + $0x560] sm:$0xff]
        %v420 = vld [vmem:[%s201 + $0x568] sm:$0xff]
        %v421 = vld [vmem:[%s201 + $0x570] sm:$0xff]
        %v422 = vld [vmem:[%s201 + $0x578] sm:$0xff]
        %v423 = vld [vmem:[%s201 + $0x580] sm:$0xff]
        %v424 = vld [vmem:[%s201 + $0x588] sm:$0xff]
        %v425 = vld [vmem:[%s201 + $0x590] sm:$0xff]
        %v426 = vld [vmem:[%s201 + $0x598] sm:$0xff]
        %v427 = vld [vmem:[%s201 + $0x5a0] sm:$0xff]
        %v428 = vld [vmem:[%s201 + $0x5a8] sm:$0xff]
        %v429 = vld [vmem:[%s201 + $0x5b0] sm:$0xff]
        %v430 = vld [vmem:[%s201 + $0x5b8] sm:$0xff]
        %v431 = vld [vmem:[%s201 + $0x5c0] sm:$0xff]
        %v432 = vld [vmem:[%s201 + $0x5c8] sm:$0xff]
        %v433 = vld [vmem:[%s201 + $0x5d0] sm:$0xff]
        %v434 = vld [vmem:[%s201 + $0x5d8] sm:$0xff]
        %v435 = vld [vmem:[%s201 + $0x5e0] sm:$0xff]
        %v436 = vld [vmem:[%s201 + $0x5e8] sm:$0xff]
        %v437 = vld [vmem:[%s201 + $0x5f0] sm:$0xff]
        %v438 = vld [vmem:[%s201 + $0x5f8] sm:$0xff]
        %v439 = vld [vmem:[%s201 + $0x600] sm:$0xff]
        %v440 = vld [vmem:[%s201 + $0x608] sm:$0xff]
        %v441 = vld [vmem:[%s201 + $0x610] sm:$0xff]
        %v442 = vld [vmem:[%s201 + $0x618] sm:$0xff]
        %v443 = vld [vmem:[%s201 + $0x620] sm:$0xff]
        %v444 = vld [vmem:[%s201 + $0x628] sm:$0xff]
        %v445 = vld [vmem:[%s201 + $0x630] sm:$0xff]
        %v446 = vld [vmem:[%s201 + $0x638] sm:$0xff]
        %v447 = vld [vmem:[%s201 + $0x640] sm:$0xff]
        %v448 = vld [vmem:[%s201 + $0x648] sm:$0xff]
        %v449 = vld [vmem:[%s201 + $0x650] sm:$0xff]
        %v450 = vld [vmem:[%s201 + $0x658] sm:$0xff]
        %v451 = vld [vmem:[%s201 + $0x660] sm:$0xff]
        %v452 = vld [vmem:[%s201 + $0x668] sm:$0xff]
        %v453 = vld [vmem:[%s201 + $0x670] sm:$0xff]
        %v454 = vld [vmem:[%s201 + $0x678] sm:$0xff]
        %v455 = vld [vmem:[%s201 + $0x680] sm:$0xff]
        %v456 = vld [vmem:[%s201 + $0x688] sm:$0xff]
        %v457 = vld [vmem:[%s201 + $0x690] sm:$0xff]
        %v458 = vld [vmem:[%s201 + $0x698] sm:$0xff]
        %v459 = vld [vmem:[%s201 + $0x6a0] sm:$0xff]
        %v460 = vld [vmem:[%s201 + $0x6a8] sm:$0xff]
        %v461 = vld [vmem:[%s201 + $0x6b0] sm:$0xff]
        %v462 = vld [vmem:[%s201 + $0x6b8] sm:$0xff]
        %v463 = vld [vmem:[%s201 + $0x6c0] sm:$0xff]
        %v464 = vld [vmem:[%s201 + $0x6c8] sm:$0xff]
        %v465 = vld [vmem:[%s201 + $0x6d0] sm:$0xff]
        %v466 = vld [vmem:[%s201 + $0x6d8] sm:$0xff]
        %v467 = vld [vmem:[%s201 + $0x6e0] sm:$0xff]
        %v468 = vld [vmem:[%s201 + $0x6e8] sm:$0xff]
        %v469 = vld [vmem:[%s201 + $0x6f0] sm:$0xff]
        %v470 = vld [vmem:[%s201 + $0x6f8] sm:$0xff]
        %v471 = vld [vmem:[%s201 + $0x700] sm:$0xff]
        %v472 = vld [vmem:[%s201 + $0x708] sm:$0xff]
        %v473 = vld [vmem:[%s201 + $0x710] sm:$0xff]
        %v474 = vld [vmem:[%s201 + $0x718] sm:$0xff]
        %v475 = vld [vmem:[%s201 + $0x720] sm:$0xff]
        %v476 = vld [vmem:[%s201 + $0x728] sm:$0xff]
        %v477 = vld [vmem:[%s201 + $0x730] sm:$0xff]
        %v478 = vld [vmem:[%s201 + $0x738] sm:$0xff]
        %v479 = vld [vmem:[%s201 + $0x740] sm:$0xff]
        %v480 = vld [vmem:[%s201 + $0x748] sm:$0xff]
        %v481 = vld [vmem:[%s201 + $0x750] sm:$0xff]
        %v482 = vld [vmem:[%s201 + $0x758] sm:$0xff]
        %v483 = vld [vmem:[%s201 + $0x760] sm:$0xff]
        %v484 = vld [vmem:[%s201 + $0x768] sm:$0xff]
        %v485 = vld [vmem:[%s201 + $0x770] sm:$0xff]
        %v486 = vld [vmem:[%s201 + $0x778] sm:$0xff]
        %v487 = vld [vmem:[%s201 + $0x780] sm:$0xff]
        %v488 = vld [vmem:[%s201 + $0x788] sm:$0xff]
        %v489 = vld [vmem:[%s201 + $0x790] sm:$0xff]
        %v490 = vld [vmem:[%s201 + $0x798] sm:$0xff]
        %v491 = vld [vmem:[%s201 + $0x7a0] sm:$0xff]
        %v492 = vld [vmem:[%s201 + $0x7a8] sm:$0xff]
        %v493 = vld [vmem:[%s201 + $0x7b0] sm:$0xff]
        %v494 = vld [vmem:[%s201 + $0x7b8] sm:$0xff]
        %v495 = vld [vmem:[%s201 + $0x7c0] sm:$0xff]
        %v496 = vld [vmem:[%s201 + $0x7c8] sm:$0xff]
        %v497 = vld [vmem:[%s201 + $0x7d0] sm:$0xff]
        %v498 = vld [vmem:[%s201 + $0x7d8] sm:$0xff]
        %v499 = vld [vmem:[%s201 + $0x7e0] sm:$0xff]
        %v500 = vld [vmem:[%s201 + $0x7e8] sm:$0xff]
        %v501 = vld [vmem:[%s201 + $0x7f0] sm:$0xff]
        %v502 = vld [vmem:[%s201 + $0x7f8] sm:$0xff]
        %v503 = vld [vmem:[%s201 + $0x800] sm:$0xff]
        %v504 = vld [vmem:[%s201 + $0x808] sm:$0xff]
        %v505 = vld [vmem:[%s201 + $0x810] sm:$0xff]
        %v506 = vld [vmem:[%s201 + $0x818] sm:$0xff]
        %v507 = vld [vmem:[%s201 + $0x820] sm:$0xff]
        %v508 = vld [vmem:[%s201 + $0x828] sm:$0xff]
        %v509 = vld [vmem:[%s201 + $0x830] sm:$0xff]
        %v510 = vld [vmem:[%s201 + $0x838] sm:$0xff]
        %v511 = vld [vmem:[%s201 + $0x840] sm:$0xff]
        %v512 = vld [vmem:[%s201 + $0x848] sm:$0xff]
        %v513 = vld [vmem:[%s201 + $0x850] sm:$0xff]
        %v514 = vld [vmem:[%s201 + $0x858] sm:$0xff]
        %v515 = vld [vmem:[%s201 + $0x860] sm:$0xff]
        %v516 = vld [vmem:[%s201 + $0x868] sm:$0xff]
        %v517 = vld [vmem:[%s201 + $0x870] sm:$0xff]
        %v518 = vld [vmem:[%s201 + $0x878] sm:$0xff]
        %v519 = vld [vmem:[%s201 + $0x880] sm:$0xff]
        %v520 = vld [vmem:[%s201 + $0x888] sm:$0xff]
        %v521 = vld [vmem:[%s201 + $0x890] sm:$0xff]
        %v522 = vld [vmem:[%s201 + $0x898] sm:$0xff]
        %v523 = vld [vmem:[%s201 + $0x8a0] sm:$0xff]
        %v524 = vld [vmem:[%s201 + $0x8a8] sm:$0xff]
        %v525 = vld [vmem:[%s201 + $0x8b0] sm:$0xff]
        %v526 = vld [vmem:[%s201 + $0x8b8] sm:$0xff]
        %v527 = vld [vmem:[%s201 + $0x8c0] sm:$0xff]
        %v528 = vld [vmem:[%s201 + $0x8c8] sm:$0xff]
        %v529 = vld [vmem:[%s201 + $0x8d0] sm:$0xff]
        %v530 = vld [vmem:[%s201 + $0x8d8] sm:$0xff]
        %v531 = vld [vmem:[%s201 + $0x8e0] sm:$0xff]
        %v532 = vld [vmem:[%s201 + $0x8e8] sm:$0xff]
        %v533 = vld [vmem:[%s201 + $0x8f0] sm:$0xff]
        %v534 = vld [vmem:[%s201 + $0x8f8] sm:$0xff]
        %v535 = vld [vmem:[%s201 + $0x900] sm:$0xff]
        %v536 = vld [vmem:[%s201 + $0x908] sm:$0xff]
        %v537 = vld [vmem:[%s201 + $0x910] sm:$0xff]
        %v538 = vld [vmem:[%s201 + $0x918] sm:$0xff]
        %v539 = vld [vmem:[%s201 + $0x920] sm:$0xff]
        %v540 = vld [vmem:[%s201 + $0x928] sm:$0xff]
        %v541 = vld [vmem:[%s201 + $0x930] sm:$0xff]
        %v542 = vld [vmem:[%s201 + $0x938] sm:$0xff]
        %v543 = vld [vmem:[%s201 + $0x940] sm:$0xff]
        %v544 = vld [vmem:[%s201 + $0x948] sm:$0xff]
        %v545 = vld [vmem:[%s201 + $0x950] sm:$0xff]
        %v546 = vld [vmem:[%s201 + $0x958] sm:$0xff]
        %v547 = vld [vmem:[%s201 + $0x960] sm:$0xff]
        %v548 = vld [vmem:[%s201 + $0x968] sm:$0xff]
        %v549 = vld [vmem:[%s201 + $0x970] sm:$0xff]
        %v550 = vld [vmem:[%s201 + $0x978] sm:$0xff]
        %v551 = vld [vmem:[%s201 + $0x980] sm:$0xff]
        %v552 = vld [vmem:[%s201 + $0x988] sm:$0xff]
        %v553 = vld [vmem:[%s201 + $0x990] sm:$0xff]
        %v554 = vld [vmem:[%s201 + $0x998] sm:$0xff]
        %v555 = vld [vmem:[%s201 + $0x9a0] sm:$0xff]
        %v556 = vld [vmem:[%s201 + $0x9a8] sm:$0xff]
        %v557 = vld [vmem:[%s201 + $0x9b0] sm:$0xff]
        %v558 = vld [vmem:[%s201 + $0x9b8] sm:$0xff]
        %v559 = vld [vmem:[%s201 + $0x9c0] sm:$0xff]
        %v560 = vld [vmem:[%s201 + $0x9c8] sm:$0xff]
        %v561 = vld [vmem:[%s201 + $0x9d0] sm:$0xff]
        %v562 = vld [vmem:[%s201 + $0x9d8] sm:$0xff]
        %v563 = vld [vmem:[%s201 + $0x9e0] sm:$0xff]
        %v564 = vld [vmem:[%s201 + $0x9e8] sm:$0xff]
        %v565 = vld [vmem:[%s201 + $0x9f0] sm:$0xff]
        %v566 = vld [vmem:[%s201 + $0x9f8] sm:$0xff]
        %v567 = vld [vmem:[%s201 + $0xa00] sm:$0xff]
        %v568 = vld [vmem:[%s201 + $0xa08] sm:$0xff]
        %v569 = vld [vmem:[%s201 + $0xa10] sm:$0xff]
        %v570 = vld [vmem:[%s201 + $0xa18] sm:$0xff]
        %v571 = vld [vmem:[%s201 + $0xa20] sm:$0xff]
        %v572 = vld [vmem:[%s201 + $0xa28] sm:$0xff]
        %v573 = vld [vmem:[%s201 + $0xa30] sm:$0xff]
        %v574 = vld [vmem:[%s201 + $0xa38] sm:$0xff]
        %v575 = vld [vmem:[%s201 + $0xa40] sm:$0xff]
        %v576 = vld [vmem:[%s201 + $0xa48] sm:$0xff]
        %v577 = vld [vmem:[%s201 + $0xa50] sm:$0xff]
        %v578 = vld [vmem:[%s201 + $0xa58] sm:$0xff]
        %v579 = vld [vmem:[%s201 + $0xa60] sm:$0xff]
        %v580 = vld [vmem:[%s201 + $0xa68] sm:$0xff]
        %v581 = vld [vmem:[%s201 + $0xa70] sm:$0xff]
        %v582 = vld [vmem:[%s201 + $0xa78] sm:$0xff]
        %v583 = vld [vmem:[%s201 + $0xa80] sm:$0xff]
        %v584 = vld [vmem:[%s201 + $0xa88] sm:$0xff]
        %v585 = vld [vmem:[%s201 + $0xa90] sm:$0xff]
        %v586 = vld [vmem:[%s201 + $0xa98] sm:$0xff]
        %v587 = vld [vmem:[%s201 + $0xaa0] sm:$0xff]
        %v588 = vld [vmem:[%s201 + $0xaa8] sm:$0xff]
        %v589 = vld [vmem:[%s201 + $0xab0] sm:$0xff]
        %v590 = vld [vmem:[%s201 + $0xab8] sm:$0xff]
        %v591 = vld [vmem:[%s201 + $0xac0] sm:$0xff]
        %v592 = vld [vmem:[%s201 + $0xac8] sm:$0xff]
        %v593 = vld [vmem:[%s201 + $0xad0] sm:$0xff]
        %v594 = vld [vmem:[%s201 + $0xad8] sm:$0xff]
        %v595 = vld [vmem:[%s201 + $0xae0] sm:$0xff]
        %v596 = vld [vmem:[%s201 + $0xae8] sm:$0xff]
        %v597 = vld [vmem:[%s201 + $0xaf0] sm:$0xff]
        %v598 = vld [vmem:[%s201 + $0xaf8] sm:$0xff]
        %v599 = vld [vmem:[%s201 + $0xb00] sm:$0xff]
        %v600 = vld [vmem:[%s201 + $0xb08] sm:$0xff]
        %v601 = vld [vmem:[%s201 + $0xb10] sm:$0xff]
        %v602 = vld [vmem:[%s201 + $0xb18] sm:$0xff]
        %v603 = vld [vmem:[%s201 + $0xb20] sm:$0xff]
        %v604 = vld [vmem:[%s201 + $0xb28] sm:$0xff]
        %v605 = vld [vmem:[%s201 + $0xb30] sm:$0xff]
        %v606 = vld [vmem:[%s201 + $0xb38] sm:$0xff]
        %v607 = vld [vmem:[%s201 + $0xb40] sm:$0xff]
        %v608 = vld [vmem:[%s201 + $0xb48] sm:$0xff]
        %v609 = vld [vmem:[%s201 + $0xb50] sm:$0xff]
        %v610 = vld [vmem:[%s201 + $0xb58] sm:$0xff]
        %v611 = vld [vmem:[%s201 + $0xb60] sm:$0xff]
        %v612 = vld [vmem:[%s201 + $0xb68] sm:$0xff]
        %v613 = vld [vmem:[%s201 + $0xb70] sm:$0xff]
        %v614 = vld [vmem:[%s201 + $0xb78] sm:$0xff]
        %v615 = vld [vmem:[%s201 + $0xb80] sm:$0xff]
        %v616 = vld [vmem:[%s201 + $0xb88] sm:$0xff]
        %v617 = vld [vmem:[%s201 + $0xb90] sm:$0xff]
        %v618 = vld [vmem:[%s201 + $0xb98] sm:$0xff]
        %v619 = vld [vmem:[%s201 + $0xba0] sm:$0xff]
        %v620 = vld [vmem:[%s201 + $0xba8] sm:$0xff]
        %v621 = vld [vmem:[%s201 + $0xbb0] sm:$0xff]
        %v622 = vld [vmem:[%s201 + $0xbb8] sm:$0xff]
        %v623 = vld [vmem:[%s201 + $0xbc0] sm:$0xff]
        %v624 = vld [vmem:[%s201 + $0xbc8] sm:$0xff]
        %v625 = vld [vmem:[%s201 + $0xbd0] sm:$0xff]
        %v626 = vld [vmem:[%s201 + $0xbd8] sm:$0xff]
        %v627 = vld [vmem:[%s201 + $0xbe0] sm:$0xff]
        %v628 = vld [vmem:[%s201 + $0xbe8] sm:$0xff]
        %v629 = vld [vmem:[%s201 + $0xbf0] sm:$0xff]
        %v630 = vld [vmem:[%s201 + $0xbf8] sm:$0xff]
        %v631 = vld [vmem:[%s201 + $0xc00] sm:$0xff]
        %v632 = vld [vmem:[%s201 + $0xc08] sm:$0xff]
        %v633 = vld [vmem:[%s201 + $0xc10] sm:$0xff]
        %v634 = vld [vmem:[%s201 + $0xc18] sm:$0xff]
        %v635 = vld [vmem:[%s201 + $0xc20] sm:$0xff]
        %v636 = vld [vmem:[%s201 + $0xc28] sm:$0xff]
        %v637 = vld [vmem:[%s201 + $0xc30] sm:$0xff]
        %v638 = vld [vmem:[%s201 + $0xc38] sm:$0xff]
        %v639 = vld [vmem:[%s201 + $0xc40] sm:$0xff]
        %v640 = vld [vmem:[%s201 + $0xc48] sm:$0xff]
        %v641 = vld [vmem:[%s201 + $0xc50] sm:$0xff]
        %v642 = vld [vmem:[%s201 + $0xc58] sm:$0xff]
        %v643 = vld [vmem:[%s201 + $0xc60] sm:$0xff]
        %v644 = vld [vmem:[%s201 + $0xc68] sm:$0xff]
        %v645 = vld [vmem:[%s201 + $0xc70] sm:$0xff]
        %v646 = vld [vmem:[%s201 + $0xc78] sm:$0xff]
        %v647 = vld [vmem:[%s201 + $0xc80] sm:$0xff]
        %v648 = vld [vmem:[%s201 + $0xc88] sm:$0xff]
        %v649 = vld [vmem:[%s201 + $0xc90] sm:$0xff]
        %v650 = vld [vmem:[%s201 + $0xc98] sm:$0xff]
        %v651 = vld [vmem:[%s201 + $0xca0] sm:$0xff]
        %v652 = vld [vmem:[%s201 + $0xca8] sm:$0xff]
        %v653 = vld [vmem:[%s201 + $0xcb0] sm:$0xff]
        %v654 = vld [vmem:[%s201 + $0xcb8] sm:$0xff]
        %v655 = vld [vmem:[%s201 + $0xcc0] sm:$0xff]
        %v656 = vld [vmem:[%s201 + $0xcc8] sm:$0xff]
        %v657 = vld [vmem:[%s201 + $0xcd0] sm:$0xff]
        %v658 = vld [vmem:[%s201 + $0xcd8] sm:$0xff]
        %v659 = vld [vmem:[%s201 + $0xce0] sm:$0xff]
        %v660 = vld [vmem:[%s201 + $0xce8] sm:$0xff]
        %v661 = vld [vmem:[%s201 + $0xcf0] sm:$0xff]
        %v662 = vld [vmem:[%s201 + $0xcf8] sm:$0xff]
        %v663 = vld [vmem:[%s201 + $0xd00] sm:$0xff]
        %v664 = vld [vmem:[%s201 + $0xd08] sm:$0xff]
        %v665 = vld [vmem:[%s201 + $0xd10] sm:$0xff]
        %v666 = vld [vmem:[%s201 + $0xd18] sm:$0xff]
        %v667 = vld [vmem:[%s201 + $0xd20] sm:$0xff]
        %v668 = vld [vmem:[%s201 + $0xd28] sm:$0xff]
        %v669 = vld [vmem:[%s201 + $0xd30] sm:$0xff]
        %v670 = vld [vmem:[%s201 + $0xd38] sm:$0xff]
        %v671 = vld [vmem:[%s201 + $0xd40] sm:$0xff]
        %v672 = vld [vmem:[%s201 + $0xd48] sm:$0xff]
        %v673 = vld [vmem:[%s201 + $0xd50] sm:$0xff]
        %v674 = vld [vmem:[%s201 + $0xd58] sm:$0xff]
        %v675 = vld [vmem:[%s201 + $0xd60] sm:$0xff]
        %v676 = vld [vmem:[%s201 + $0xd68] sm:$0xff]
        %v677 = vld [vmem:[%s201 + $0xd70] sm:$0xff]
        %v678 = vld [vmem:[%s201 + $0xd78] sm:$0xff]
        %v679 = vld [vmem:[%s201 + $0xd80] sm:$0xff]
        %v680 = vld [vmem:[%s201 + $0xd88] sm:$0xff]
        %v681 = vld [vmem:[%s201 + $0xd90] sm:$0xff]
        %v682 = vld [vmem:[%s201 + $0xd98] sm:$0xff]
        %v683 = vld [vmem:[%s201 + $0xda0] sm:$0xff]
        %v684 = vld [vmem:[%s201 + $0xda8] sm:$0xff]
        %v685 = vld [vmem:[%s201 + $0xdb0] sm:$0xff]
        %v686 = vld [vmem:[%s201 + $0xdb8] sm:$0xff]
        %v687 = vld [vmem:[%s201 + $0xdc0] sm:$0xff]
        %v688 = vld [vmem:[%s201 + $0xdc8] sm:$0xff]
        %v689 = vld [vmem:[%s201 + $0xdd0] sm:$0xff]
        %v690 = vld [vmem:[%s201 + $0xdd8] sm:$0xff]
        %v691 = vld [vmem:[%s201 + $0xde0] sm:$0xff]
        %v692 = vld [vmem:[%s201 + $0xde8] sm:$0xff]
        %v693 = vld [vmem:[%s201 + $0xdf0] sm:$0xff]
        %v694 = vld [vmem:[%s201 + $0xdf8] sm:$0xff]
        %v695 = vld [vmem:[%s201 + $0xe00] sm:$0xff]
        %v696 = vld [vmem:[%s201 + $0xe08] sm:$0xff]
        %v697 = vld [vmem:[%s201 + $0xe10] sm:$0xff]
        %v698 = vld [vmem:[%s201 + $0xe18] sm:$0xff]
        %v699 = vld [vmem:[%s201 + $0xe20] sm:$0xff]
        %v700 = vld [vmem:[%s201 + $0xe28] sm:$0xff]
        %v701 = vld [vmem:[%s201 + $0xe30] sm:$0xff]
        %v702 = vld [vmem:[%s201 + $0xe38] sm:$0xff]
        %v703 = vld [vmem:[%s201 + $0xe40] sm:$0xff]
        %v704 = vld [vmem:[%s201 + $0xe48] sm:$0xff]
        %v705 = vld [vmem:[%s201 + $0xe50] sm:$0xff]
        %v706 = vld [vmem:[%s201 + $0xe58] sm:$0xff]
        %v707 = vld [vmem:[%s201 + $0xe60] sm:$0xff]
        %v708 = vld [vmem:[%s201 + $0xe68] sm:$0xff]
        %v709 = vld [vmem:[%s201 + $0xe70] sm:$0xff]
        %v710 = vld [vmem:[%s201 + $0xe78] sm:$0xff]
        %v711 = vld [vmem:[%s201 + $0xe80] sm:$0xff]
        %v712 = vld [vmem:[%s201 + $0xe88] sm:$0xff]
        %v713 = vld [vmem:[%s201 + $0xe90] sm:$0xff]
        %v714 = vld [vmem:[%s201 + $0xe98] sm:$0xff]
        %v715 = vld [vmem:[%s201 + $0xea0] sm:$0xff]
        %v716 = vld [vmem:[%s201 + $0xea8] sm:$0xff]
        %v717 = vld [vmem:[%s201 + $0xeb0] sm:$0xff]
        %v718 = vld [vmem:[%s201 + $0xeb8] sm:$0xff]
        %v719 = vld [vmem:[%s201 + $0xec0] sm:$0xff]
        %v720 = vld [vmem:[%s201 + $0xec8] sm:$0xff]
        %v721 = vld [vmem:[%s201 + $0xed0] sm:$0xff]
        %v722 = vld [vmem:[%s201 + $0xed8] sm:$0xff]
        %v723 = vld [vmem:[%s201 + $0xee0] sm:$0xff]
        %v724 = vld [vmem:[%s201 + $0xee8] sm:$0xff]
        %v725 = vld [vmem:[%s201 + $0xef0] sm:$0xff]
        %v726 = vld [vmem:[%s201 + $0xef8] sm:$0xff]
        %v727 = vld [vmem:[%s201 + $0xf00] sm:$0xff]
        %v728 = vld [vmem:[%s201 + $0xf08] sm:$0xff]
        %v729 = vld [vmem:[%s201 + $0xf10] sm:$0xff]
        %v730 = vld [vmem:[%s201 + $0xf18] sm:$0xff]
        %v731 = vld [vmem:[%s201 + $0xf20] sm:$0xff]
        %v732 = vld [vmem:[%s201 + $0xf28] sm:$0xff]
        %v733 = vld [vmem:[%s201 + $0xf30] sm:$0xff]
        %v734 = vld [vmem:[%s201 + $0xf38] sm:$0xff]
        %v735 = vld [vmem:[%s201 + $0xf40] sm:$0xff]
        %v736 = vld [vmem:[%s201 + $0xf48] sm:$0xff]
        %v737 = vld [vmem:[%s201 + $0xf50] sm:$0xff]
        %v738 = vld [vmem:[%s201 + $0xf58] sm:$0xff]
        %v739 = vld [vmem:[%s201 + $0xf60] sm:$0xff]
        %v740 = vld [vmem:[%s201 + $0xf68] sm:$0xff]
        %v741 = vld [vmem:[%s201 + $0xf70] sm:$0xff]
        %v742 = vld [vmem:[%s201 + $0xf78] sm:$0xff]
        %v743 = vld [vmem:[%s201 + $0xf80] sm:$0xff]
        %v744 = vld [vmem:[%s201 + $0xf88] sm:$0xff]
        %v745 = vld [vmem:[%s201 + $0xf90] sm:$0xff]
        %v746 = vld [vmem:[%s201 + $0xf98] sm:$0xff]
        %v747 = vld [vmem:[%s201 + $0xfa0] sm:$0xff]
        %v748 = vld [vmem:[%s201 + $0xfa8] sm:$0xff]
        %v749 = vld [vmem:[%s201 + $0xfb0] sm:$0xff]
        %v750 = vld [vmem:[%s201 + $0xfb8] sm:$0xff]
        %v751 = vld [vmem:[%s201 + $0xfc0] sm:$0xff]
        %v752 = vld [vmem:[%s201 + $0xfc8] sm:$0xff]
        %v753 = vld [vmem:[%s201 + $0xfd0] sm:$0xff]
        %v754 = vld [vmem:[%s201 + $0xfd8] sm:$0xff]
        %v755 = vld [vmem:[%s201 + $0xfe0] sm:$0xff]
        %v756 = vld [vmem:[%s201 + $0xfe8] sm:$0xff]
        %v757 = vld [vmem:[%s201 + $0xff0] sm:$0xff]
        %v758 = vld [vmem:[%s201 + $0xff8] sm:$0xff]
        %760 = vst [vmem:[#allocation1] ss:$9 sm:$0xff] %v246
        %v761 = vld [vmem:[#allocation1] sm:$0xff]
        %v762 = vld [vmem:[#allocation1 + $0x9] sm:$0xff]
        %v763 = vld [vmem:[#allocation1 + $0x12] sm:$0xff]
        %v764 = vld [vmem:[#allocation1 + $0x1b] sm:$0xff]
        %v1281 = vunpack.c.l.b16 %v247
        %v1282 = vunpack.c.h.b16 %v247
        %v1283 = vunpack.c.l.b16 %v248
        %v1284 = vunpack.c.h.b16 %v248
        %v1285 = vunpack.c.l.b16 %v249
        %v1286 = vunpack.c.h.b16 %v249
        %v1287 = vunpack.c.l.b16 %v250
        %v1288 = vunpack.c.h.b16 %v250
        %v1289 = vunpack.c.l.b16 %v251
        %v1290 = vunpack.c.h.b16 %v251
        %v1291 = vunpack.c.l.b16 %v252
        %v1292 = vunpack.c.h.b16 %v252
        %v1293 = vunpack.c.l.b16 %v253
        %v1294 = vunpack.c.h.b16 %v253
        %v1295 = vunpack.c.l.b16 %v254
        %v1296 = vunpack.c.h.b16 %v254
        %v1297 = vunpack.c.l.b16 %v255
        %v1298 = vunpack.c.h.b16 %v255
        %v1299 = vunpack.c.l.b16 %v256
        %v1300 = vunpack.c.h.b16 %v256
        %v1301 = vunpack.c.l.b16 %v257
        %v1302 = vunpack.c.h.b16 %v257
        %v1303 = vunpack.c.l.b16 %v258
        %v1304 = vunpack.c.h.b16 %v258
        %v1305 = vunpack.c.l.b16 %v259
        %v1306 = vunpack.c.h.b16 %v259
        %v1307 = vunpack.c.l.b16 %v260
        %v1308 = vunpack.c.h.b16 %v260
        %v1309 = vunpack.c.l.b16 %v261
        %v1310 = vunpack.c.h.b16 %v261
        %v1311 = vunpack.c.l.b16 %v262
        %v1312 = vunpack.c.h.b16 %v262
        %v1313 = vunpack.c.l.b16 %v263
        %v1314 = vunpack.c.h.b16 %v263
        %v1315 = vunpack.c.l.b16 %v264
        %v1316 = vunpack.c.h.b16 %v264
        %v1317 = vunpack.c.l.b16 %v265
        %v1318 = vunpack.c.h.b16 %v265
        %v1319 = vunpack.c.l.b16 %v266
        %v1320 = vunpack.c.h.b16 %v266
        %v1321 = vunpack.c.l.b16 %v267
        %v1322 = vunpack.c.h.b16 %v267
        %v1323 = vunpack.c.l.b16 %v268
        %v1324 = vunpack.c.h.b16 %v268
        %v1325 = vunpack.c.l.b16 %v269
        %v1326 = vunpack.c.h.b16 %v269
        %v1327 = vunpack.c.l.b16 %v270
        %v1328 = vunpack.c.h.b16 %v270
        %v1329 = vunpack.c.l.b16 %v271
        %v1330 = vunpack.c.h.b16 %v271
        %v1331 = vunpack.c.l.b16 %v272
        %v1332 = vunpack.c.h.b16 %v272
        %v1333 = vunpack.c.l.b16 %v273
        %v1334 = vunpack.c.h.b16 %v273
        %v1335 = vunpack.c.l.b16 %v274
        %v1336 = vunpack.c.h.b16 %v274
        %v1337 = vunpack.c.l.b16 %v275
        %v1338 = vunpack.c.h.b16 %v275
        %v1339 = vunpack.c.l.b16 %v276
        %v1340 = vunpack.c.h.b16 %v276
        %v1341 = vunpack.c.l.b16 %v277
        %v1342 = vunpack.c.h.b16 %v277
        %v1343 = vunpack.c.l.b16 %v278
        %v1344 = vunpack.c.h.b16 %v278
        %v1345 = vunpack.c.l.b16 %v279
        %v1346 = vunpack.c.h.b16 %v279
        %v1347 = vunpack.c.l.b16 %v280
        %v1348 = vunpack.c.h.b16 %v280
        %v1349 = vunpack.c.l.b16 %v281
        %v1350 = vunpack.c.h.b16 %v281
        %v1351 = vunpack.c.l.b16 %v282
        %v1352 = vunpack.c.h.b16 %v282
        %v1353 = vunpack.c.l.b16 %v283
        %v1354 = vunpack.c.h.b16 %v283
        %v1355 = vunpack.c.l.b16 %v284
        %v1356 = vunpack.c.h.b16 %v284
        %v1357 = vunpack.c.l.b16 %v285
        %v1358 = vunpack.c.h.b16 %v285
        %v1359 = vunpack.c.l.b16 %v286
        %v1360 = vunpack.c.h.b16 %v286
        %v1361 = vunpack.c.l.b16 %v287
        %v1362 = vunpack.c.h.b16 %v287
        %v1363 = vunpack.c.l.b16 %v288
        %v1364 = vunpack.c.h.b16 %v288
        %v1365 = vunpack.c.l.b16 %v289
        %v1366 = vunpack.c.h.b16 %v289
        %v1367 = vunpack.c.l.b16 %v290
        %v1368 = vunpack.c.h.b16 %v290
        %v1369 = vunpack.c.l.b16 %v291
        %v1370 = vunpack.c.h.b16 %v291
        %v1371 = vunpack.c.l.b16 %v292
        %v1372 = vunpack.c.h.b16 %v292
        %v1373 = vunpack.c.l.b16 %v293
        %v1374 = vunpack.c.h.b16 %v293
        %v1375 = vunpack.c.l.b16 %v294
        %v1376 = vunpack.c.h.b16 %v294
        %v1377 = vunpack.c.l.b16 %v295
        %v1378 = vunpack.c.h.b16 %v295
        %v1379 = vunpack.c.l.b16 %v296
        %v1380 = vunpack.c.h.b16 %v296
        %v1381 = vunpack.c.l.b16 %v297
        %v1382 = vunpack.c.h.b16 %v297
        %v1383 = vunpack.c.l.b16 %v298
        %v1384 = vunpack.c.h.b16 %v298
        %v1385 = vunpack.c.l.b16 %v299
        %v1386 = vunpack.c.h.b16 %v299
        %v1387 = vunpack.c.l.b16 %v300
        %v1388 = vunpack.c.h.b16 %v300
        %v1389 = vunpack.c.l.b16 %v301
        %v1390 = vunpack.c.h.b16 %v301
        %v1391 = vunpack.c.l.b16 %v302
        %v1392 = vunpack.c.h.b16 %v302
        %v1393 = vunpack.c.l.b16 %v303
        %v1394 = vunpack.c.h.b16 %v303
        %v1395 = vunpack.c.l.b16 %v304
        %v1396 = vunpack.c.h.b16 %v304
        %v1397 = vunpack.c.l.b16 %v305
        %v1398 = vunpack.c.h.b16 %v305
        %v1399 = vunpack.c.l.b16 %v306
        %v1400 = vunpack.c.h.b16 %v306
        %v1401 = vunpack.c.l.b16 %v307
        %v1402 = vunpack.c.h.b16 %v307
        %v1403 = vunpack.c.l.b16 %v308
        %v1404 = vunpack.c.h.b16 %v308
        %v1405 = vunpack.c.l.b16 %v309
        %v1406 = vunpack.c.h.b16 %v309
        %v1407 = vunpack.c.l.b16 %v310
        %v1408 = vunpack.c.h.b16 %v310
        %v1409 = vunpack.c.l.b16 %v311
        %v1410 = vunpack.c.h.b16 %v311
        %v1411 = vunpack.c.l.b16 %v312
        %v1412 = vunpack.c.h.b16 %v312
        %v1413 = vunpack.c.l.b16 %v313
        %v1414 = vunpack.c.h.b16 %v313
        %v1415 = vunpack.c.l.b16 %v314
        %v1416 = vunpack.c.h.b16 %v314
        %v1417 = vunpack.c.l.b16 %v315
        %v1418 = vunpack.c.h.b16 %v315
        %v1419 = vunpack.c.l.b16 %v316
        %v1420 = vunpack.c.h.b16 %v316
        %v1421 = vunpack.c.l.b16 %v317
        %v1422 = vunpack.c.h.b16 %v317
        %v1423 = vunpack.c.l.b16 %v318
        %v1424 = vunpack.c.h.b16 %v318
        %v1425 = vunpack.c.l.b16 %v319
        %v1426 = vunpack.c.h.b16 %v319
        %v1427 = vunpack.c.l.b16 %v320
        %v1428 = vunpack.c.h.b16 %v320
        %v1429 = vunpack.c.l.b16 %v321
        %v1430 = vunpack.c.h.b16 %v321
        %v1431 = vunpack.c.l.b16 %v322
        %v1432 = vunpack.c.h.b16 %v322
        %v1433 = vunpack.c.l.b16 %v323
        %v1434 = vunpack.c.h.b16 %v323
        %v1435 = vunpack.c.l.b16 %v324
        %v1436 = vunpack.c.h.b16 %v324
        %v1437 = vunpack.c.l.b16 %v325
        %v1438 = vunpack.c.h.b16 %v325
        %v1439 = vunpack.c.l.b16 %v326
        %v1440 = vunpack.c.h.b16 %v326
        %v1441 = vunpack.c.l.b16 %v327
        %v1442 = vunpack.c.h.b16 %v327
        %v1443 = vunpack.c.l.b16 %v328
        %v1444 = vunpack.c.h.b16 %v328
        %v1445 = vunpack.c.l.b16 %v329
        %v1446 = vunpack.c.h.b16 %v329
        %v1447 = vunpack.c.l.b16 %v330
        %v1448 = vunpack.c.h.b16 %v330
        %v1449 = vunpack.c.l.b16 %v331
        %v1450 = vunpack.c.h.b16 %v331
        %v1451 = vunpack.c.l.b16 %v332
        %v1452 = vunpack.c.h.b16 %v332
        %v1453 = vunpack.c.l.b16 %v333
        %v1454 = vunpack.c.h.b16 %v333
        %v1455 = vunpack.c.l.b16 %v334
        %v1456 = vunpack.c.h.b16 %v334
        %v1457 = vunpack.c.l.b16 %v335
        %v1458 = vunpack.c.h.b16 %v335
        %v1459 = vunpack.c.l.b16 %v336
        %v1460 = vunpack.c.h.b16 %v336
        %v1461 = vunpack.c.l.b16 %v337
        %v1462 = vunpack.c.h.b16 %v337
        %v1463 = vunpack.c.l.b16 %v338
        %v1464 = vunpack.c.h.b16 %v338
        %v1465 = vunpack.c.l.b16 %v339
        %v1466 = vunpack.c.h.b16 %v339
        %v1467 = vunpack.c.l.b16 %v340
        %v1468 = vunpack.c.h.b16 %v340
        %v1469 = vunpack.c.l.b16 %v341
        %v1470 = vunpack.c.h.b16 %v341
        %v1471 = vunpack.c.l.b16 %v342
        %v1472 = vunpack.c.h.b16 %v342
        %v1473 = vunpack.c.l.b16 %v343
        %v1474 = vunpack.c.h.b16 %v343
        %v1475 = vunpack.c.l.b16 %v344
        %v1476 = vunpack.c.h.b16 %v344
        %v1477 = vunpack.c.l.b16 %v345
        %v1478 = vunpack.c.h.b16 %v345
        %v1479 = vunpack.c.l.b16 %v346
        %v1480 = vunpack.c.h.b16 %v346
        %v1481 = vunpack.c.l.b16 %v347
        %v1482 = vunpack.c.h.b16 %v347
        %v1483 = vunpack.c.l.b16 %v348
        %v1484 = vunpack.c.h.b16 %v348
        %v1485 = vunpack.c.l.b16 %v349
        %v1486 = vunpack.c.h.b16 %v349
        %v1487 = vunpack.c.l.b16 %v350
        %v1488 = vunpack.c.h.b16 %v350
        %v1489 = vunpack.c.l.b16 %v351
        %v1490 = vunpack.c.h.b16 %v351
        %v1491 = vunpack.c.l.b16 %v352
        %v1492 = vunpack.c.h.b16 %v352
        %v1493 = vunpack.c.l.b16 %v353
        %v1494 = vunpack.c.h.b16 %v353
        %v1495 = vunpack.c.l.b16 %v354
        %v1496 = vunpack.c.h.b16 %v354
        %v1497 = vunpack.c.l.b16 %v355
        %v1498 = vunpack.c.h.b16 %v355
        %v1499 = vunpack.c.l.b16 %v356
        %v1500 = vunpack.c.h.b16 %v356
        %v1501 = vunpack.c.l.b16 %v357
        %v1502 = vunpack.c.h.b16 %v357
        %v1503 = vunpack.c.l.b16 %v358
        %v1504 = vunpack.c.h.b16 %v358
        %v1505 = vunpack.c.l.b16 %v359
        %v1506 = vunpack.c.h.b16 %v359
        %v1507 = vunpack.c.l.b16 %v360
        %v1508 = vunpack.c.h.b16 %v360
        %v1509 = vunpack.c.l.b16 %v361
        %v1510 = vunpack.c.h.b16 %v361
        %v1511 = vunpack.c.l.b16 %v362
        %v1512 = vunpack.c.h.b16 %v362
        %v1513 = vunpack.c.l.b16 %v363
        %v1514 = vunpack.c.h.b16 %v363
        %v1515 = vunpack.c.l.b16 %v364
        %v1516 = vunpack.c.h.b16 %v364
        %v1517 = vunpack.c.l.b16 %v365
        %v1518 = vunpack.c.h.b16 %v365
        %v1519 = vunpack.c.l.b16 %v366
        %v1520 = vunpack.c.h.b16 %v366
        %v1521 = vunpack.c.l.b16 %v367
        %v1522 = vunpack.c.h.b16 %v367
        %v1523 = vunpack.c.l.b16 %v368
        %v1524 = vunpack.c.h.b16 %v368
        %v1525 = vunpack.c.l.b16 %v369
        %v1526 = vunpack.c.h.b16 %v369
        %v1527 = vunpack.c.l.b16 %v370
        %v1528 = vunpack.c.h.b16 %v370
        %v1529 = vunpack.c.l.b16 %v371
        %v1530 = vunpack.c.h.b16 %v371
        %v1531 = vunpack.c.l.b16 %v372
        %v1532 = vunpack.c.h.b16 %v372
        %v1533 = vunpack.c.l.b16 %v373
        %v1534 = vunpack.c.h.b16 %v373
        %v1535 = vunpack.c.l.b16 %v374
        %v1536 = vunpack.c.h.b16 %v374
        %v1537 = vunpack.c.l.b16 %v375
        %v1538 = vunpack.c.h.b16 %v375
        %v1539 = vunpack.c.l.b16 %v376
        %v1540 = vunpack.c.h.b16 %v376
        %v1541 = vunpack.c.l.b16 %v377
        %v1542 = vunpack.c.h.b16 %v377
        %v1543 = vunpack.c.l.b16 %v378
        %v1544 = vunpack.c.h.b16 %v378
        %v1545 = vunpack.c.l.b16 %v379
        %v1546 = vunpack.c.h.b16 %v379
        %v1547 = vunpack.c.l.b16 %v380
        %v1548 = vunpack.c.h.b16 %v380
        %v1549 = vunpack.c.l.b16 %v381
        %v1550 = vunpack.c.h.b16 %v381
        %v1551 = vunpack.c.l.b16 %v382
        %v1552 = vunpack.c.h.b16 %v382
        %v1553 = vunpack.c.l.b16 %v383
        %v1554 = vunpack.c.h.b16 %v383
        %v1555 = vunpack.c.l.b16 %v384
        %v1556 = vunpack.c.h.b16 %v384
        %v1557 = vunpack.c.l.b16 %v385
        %v1558 = vunpack.c.h.b16 %v385
        %v1559 = vunpack.c.l.b16 %v386
        %v1560 = vunpack.c.h.b16 %v386
        %v1561 = vunpack.c.l.b16 %v387
        %v1562 = vunpack.c.h.b16 %v387
        %v1563 = vunpack.c.l.b16 %v388
        %v1564 = vunpack.c.h.b16 %v388
        %v1565 = vunpack.c.l.b16 %v389
        %v1566 = vunpack.c.h.b16 %v389
        %v1567 = vunpack.c.l.b16 %v390
        %v1568 = vunpack.c.h.b16 %v390
        %v1569 = vunpack.c.l.b16 %v391
        %v1570 = vunpack.c.h.b16 %v391
        %v1571 = vunpack.c.l.b16 %v392
        %v1572 = vunpack.c.h.b16 %v392
        %v1573 = vunpack.c.l.b16 %v393
        %v1574 = vunpack.c.h.b16 %v393
        %v1575 = vunpack.c.l.b16 %v394
        %v1576 = vunpack.c.h.b16 %v394
        %v1577 = vunpack.c.l.b16 %v395
        %v1578 = vunpack.c.h.b16 %v395
        %v1579 = vunpack.c.l.b16 %v396
        %v1580 = vunpack.c.h.b16 %v396
        %v1581 = vunpack.c.l.b16 %v397
        %v1582 = vunpack.c.h.b16 %v397
        %v1583 = vunpack.c.l.b16 %v398
        %v1584 = vunpack.c.h.b16 %v398
        %v1585 = vunpack.c.l.b16 %v399
        %v1586 = vunpack.c.h.b16 %v399
        %v1587 = vunpack.c.l.b16 %v400
        %v1588 = vunpack.c.h.b16 %v400
        %v1589 = vunpack.c.l.b16 %v401
        %v1590 = vunpack.c.h.b16 %v401
        %v1591 = vunpack.c.l.b16 %v402
        %v1592 = vunpack.c.h.b16 %v402
        %v1593 = vunpack.c.l.b16 %v403
        %v1594 = vunpack.c.h.b16 %v403
        %v1595 = vunpack.c.l.b16 %v404
        %v1596 = vunpack.c.h.b16 %v404
        %v1597 = vunpack.c.l.b16 %v405
        %v1598 = vunpack.c.h.b16 %v405
        %v1599 = vunpack.c.l.b16 %v406
        %v1600 = vunpack.c.h.b16 %v406
        %v1601 = vunpack.c.l.b16 %v407
        %v1602 = vunpack.c.h.b16 %v407
        %v1603 = vunpack.c.l.b16 %v408
        %v1604 = vunpack.c.h.b16 %v408
        %v1605 = vunpack.c.l.b16 %v409
        %v1606 = vunpack.c.h.b16 %v409
        %v1607 = vunpack.c.l.b16 %v410
        %v1608 = vunpack.c.h.b16 %v410
        %v1609 = vunpack.c.l.b16 %v411
        %v1610 = vunpack.c.h.b16 %v411
        %v1611 = vunpack.c.l.b16 %v412
        %v1612 = vunpack.c.h.b16 %v412
        %v1613 = vunpack.c.l.b16 %v413
        %v1614 = vunpack.c.h.b16 %v413
        %v1615 = vunpack.c.l.b16 %v414
        %v1616 = vunpack.c.h.b16 %v414
        %v1617 = vunpack.c.l.b16 %v415
        %v1618 = vunpack.c.h.b16 %v415
        %v1619 = vunpack.c.l.b16 %v416
        %v1620 = vunpack.c.h.b16 %v416
        %v1621 = vunpack.c.l.b16 %v417
        %v1622 = vunpack.c.h.b16 %v417
        %v1623 = vunpack.c.l.b16 %v418
        %v1624 = vunpack.c.h.b16 %v418
        %v1625 = vunpack.c.l.b16 %v419
        %v1626 = vunpack.c.h.b16 %v419
        %v1627 = vunpack.c.l.b16 %v420
        %v1628 = vunpack.c.h.b16 %v420
        %v1629 = vunpack.c.l.b16 %v421
        %v1630 = vunpack.c.h.b16 %v421
        %v1631 = vunpack.c.l.b16 %v422
        %v1632 = vunpack.c.h.b16 %v422
        %v1633 = vunpack.c.l.b16 %v423
        %v1634 = vunpack.c.h.b16 %v423
        %v1635 = vunpack.c.l.b16 %v424
        %v1636 = vunpack.c.h.b16 %v424
        %v1637 = vunpack.c.l.b16 %v425
        %v1638 = vunpack.c.h.b16 %v425
        %v1639 = vunpack.c.l.b16 %v426
        %v1640 = vunpack.c.h.b16 %v426
        %v1641 = vunpack.c.l.b16 %v427
        %v1642 = vunpack.c.h.b16 %v427
        %v1643 = vunpack.c.l.b16 %v428
        %v1644 = vunpack.c.h.b16 %v428
        %v1645 = vunpack.c.l.b16 %v429
        %v1646 = vunpack.c.h.b16 %v429
        %v1647 = vunpack.c.l.b16 %v430
        %v1648 = vunpack.c.h.b16 %v430
        %v1649 = vunpack.c.l.b16 %v431
        %v1650 = vunpack.c.h.b16 %v431
        %v1651 = vunpack.c.l.b16 %v432
        %v1652 = vunpack.c.h.b16 %v432
        %v1653 = vunpack.c.l.b16 %v433
        %v1654 = vunpack.c.h.b16 %v433
        %v1655 = vunpack.c.l.b16 %v434
        %v1656 = vunpack.c.h.b16 %v434
        %v1657 = vunpack.c.l.b16 %v435
        %v1658 = vunpack.c.h.b16 %v435
        %v1659 = vunpack.c.l.b16 %v436
        %v1660 = vunpack.c.h.b16 %v436
        %v1661 = vunpack.c.l.b16 %v437
        %v1662 = vunpack.c.h.b16 %v437
        %v1663 = vunpack.c.l.b16 %v438
        %v1664 = vunpack.c.h.b16 %v438
        %v1665 = vunpack.c.l.b16 %v439
        %v1666 = vunpack.c.h.b16 %v439
        %v1667 = vunpack.c.l.b16 %v440
        %v1668 = vunpack.c.h.b16 %v440
        %v1669 = vunpack.c.l.b16 %v441
        %v1670 = vunpack.c.h.b16 %v441
        %v1671 = vunpack.c.l.b16 %v442
        %v1672 = vunpack.c.h.b16 %v442
        %v1673 = vunpack.c.l.b16 %v443
        %v1674 = vunpack.c.h.b16 %v443
        %v1675 = vunpack.c.l.b16 %v444
        %v1676 = vunpack.c.h.b16 %v444
        %v1677 = vunpack.c.l.b16 %v445
        %v1678 = vunpack.c.h.b16 %v445
        %v1679 = vunpack.c.l.b16 %v446
        %v1680 = vunpack.c.h.b16 %v446
        %v1681 = vunpack.c.l.b16 %v447
        %v1682 = vunpack.c.h.b16 %v447
        %v1683 = vunpack.c.l.b16 %v448
        %v1684 = vunpack.c.h.b16 %v448
        %v1685 = vunpack.c.l.b16 %v449
        %v1686 = vunpack.c.h.b16 %v449
        %v1687 = vunpack.c.l.b16 %v450
        %v1688 = vunpack.c.h.b16 %v450
        %v1689 = vunpack.c.l.b16 %v451
        %v1690 = vunpack.c.h.b16 %v451
        %v1691 = vunpack.c.l.b16 %v452
        %v1692 = vunpack.c.h.b16 %v452
        %v1693 = vunpack.c.l.b16 %v453
        %v1694 = vunpack.c.h.b16 %v453
        %v1695 = vunpack.c.l.b16 %v454
        %v1696 = vunpack.c.h.b16 %v454
        %v1697 = vunpack.c.l.b16 %v455
        %v1698 = vunpack.c.h.b16 %v455
        %v1699 = vunpack.c.l.b16 %v456
        %v1700 = vunpack.c.h.b16 %v456
        %v1701 = vunpack.c.l.b16 %v457
        %v1702 = vunpack.c.h.b16 %v457
        %v1703 = vunpack.c.l.b16 %v458
        %v1704 = vunpack.c.h.b16 %v458
        %v1705 = vunpack.c.l.b16 %v459
        %v1706 = vunpack.c.h.b16 %v459
        %v1707 = vunpack.c.l.b16 %v460
        %v1708 = vunpack.c.h.b16 %v460
        %v1709 = vunpack.c.l.b16 %v461
        %v1710 = vunpack.c.h.b16 %v461
        %v1711 = vunpack.c.l.b16 %v462
        %v1712 = vunpack.c.h.b16 %v462
        %v1713 = vunpack.c.l.b16 %v463
        %v1714 = vunpack.c.h.b16 %v463
        %v1715 = vunpack.c.l.b16 %v464
        %v1716 = vunpack.c.h.b16 %v464
        %v1717 = vunpack.c.l.b16 %v465
        %v1718 = vunpack.c.h.b16 %v465
        %v1719 = vunpack.c.l.b16 %v466
        %v1720 = vunpack.c.h.b16 %v466
        %v1721 = vunpack.c.l.b16 %v467
        %v1722 = vunpack.c.h.b16 %v467
        %v1723 = vunpack.c.l.b16 %v468
        %v1724 = vunpack.c.h.b16 %v468
        %v1725 = vunpack.c.l.b16 %v469
        %v1726 = vunpack.c.h.b16 %v469
        %v1727 = vunpack.c.l.b16 %v470
        %v1728 = vunpack.c.h.b16 %v470
        %v1729 = vunpack.c.l.b16 %v471
        %v1730 = vunpack.c.h.b16 %v471
        %v1731 = vunpack.c.l.b16 %v472
        %v1732 = vunpack.c.h.b16 %v472
        %v1733 = vunpack.c.l.b16 %v473
        %v1734 = vunpack.c.h.b16 %v473
        %v1735 = vunpack.c.l.b16 %v474
        %v1736 = vunpack.c.h.b16 %v474
        %v1737 = vunpack.c.l.b16 %v475
        %v1738 = vunpack.c.h.b16 %v475
        %v1739 = vunpack.c.l.b16 %v476
        %v1740 = vunpack.c.h.b16 %v476
        %v1741 = vunpack.c.l.b16 %v477
        %v1742 = vunpack.c.h.b16 %v477
        %v1743 = vunpack.c.l.b16 %v478
        %v1744 = vunpack.c.h.b16 %v478
        %v1745 = vunpack.c.l.b16 %v479
        %v1746 = vunpack.c.h.b16 %v479
        %v1747 = vunpack.c.l.b16 %v480
        %v1748 = vunpack.c.h.b16 %v480
        %v1749 = vunpack.c.l.b16 %v481
        %v1750 = vunpack.c.h.b16 %v481
        %v1751 = vunpack.c.l.b16 %v482
        %v1752 = vunpack.c.h.b16 %v482
        %v1753 = vunpack.c.l.b16 %v483
        %v1754 = vunpack.c.h.b16 %v483
        %v1755 = vunpack.c.l.b16 %v484
        %v1756 = vunpack.c.h.b16 %v484
        %v1757 = vunpack.c.l.b16 %v485
        %v1758 = vunpack.c.h.b16 %v485
        %v1759 = vunpack.c.l.b16 %v486
        %v1760 = vunpack.c.h.b16 %v486
        %v1761 = vunpack.c.l.b16 %v487
        %v1762 = vunpack.c.h.b16 %v487
        %v1763 = vunpack.c.l.b16 %v488
        %v1764 = vunpack.c.h.b16 %v488
        %v1765 = vunpack.c.l.b16 %v489
        %v1766 = vunpack.c.h.b16 %v489
        %v1767 = vunpack.c.l.b16 %v490
        %v1768 = vunpack.c.h.b16 %v490
        %v1769 = vunpack.c.l.b16 %v491
        %v1770 = vunpack.c.h.b16 %v491
        %v1771 = vunpack.c.l.b16 %v492
        %v1772 = vunpack.c.h.b16 %v492
        %v1773 = vunpack.c.l.b16 %v493
        %v1774 = vunpack.c.h.b16 %v493
        %v1775 = vunpack.c.l.b16 %v494
        %v1776 = vunpack.c.h.b16 %v494
        %v1777 = vunpack.c.l.b16 %v495
        %v1778 = vunpack.c.h.b16 %v495
        %v1779 = vunpack.c.l.b16 %v496
        %v1780 = vunpack.c.h.b16 %v496
        %v1781 = vunpack.c.l.b16 %v497
        %v1782 = vunpack.c.h.b16 %v497
        %v1783 = vunpack.c.l.b16 %v498
        %v1784 = vunpack.c.h.b16 %v498
        %v1785 = vunpack.c.l.b16 %v499
        %v1786 = vunpack.c.h.b16 %v499
        %v1787 = vunpack.c.l.b16 %v500
        %v1788 = vunpack.c.h.b16 %v500
        %v1789 = vunpack.c.l.b16 %v501
        %v1790 = vunpack.c.h.b16 %v501
        %v1791 = vunpack.c.l.b16 %v502
        %v1792 = vunpack.c.h.b16 %v502
        %v1793 = vunpack.c.l.b16 %v503
        %v1794 = vunpack.c.h.b16 %v503
        %v1795 = vunpack.c.l.b16 %v504
        %v1796 = vunpack.c.h.b16 %v504
        %v1797 = vunpack.c.l.b16 %v505
        %v1798 = vunpack.c.h.b16 %v505
        %v1799 = vunpack.c.l.b16 %v506
        %v1800 = vunpack.c.h.b16 %v506
        %v1801 = vunpack.c.l.b16 %v507
        %v1802 = vunpack.c.h.b16 %v507
        %v1803 = vunpack.c.l.b16 %v508
        %v1804 = vunpack.c.h.b16 %v508
        %v1805 = vunpack.c.l.b16 %v509
        %v1806 = vunpack.c.h.b16 %v509
        %v1807 = vunpack.c.l.b16 %v510
        %v1808 = vunpack.c.h.b16 %v510
        %v1809 = vunpack.c.l.b16 %v511
        %v1810 = vunpack.c.h.b16 %v511
        %v1811 = vunpack.c.l.b16 %v512
        %v1812 = vunpack.c.h.b16 %v512
        %v1813 = vunpack.c.l.b16 %v513
        %v1814 = vunpack.c.h.b16 %v513
        %v1815 = vunpack.c.l.b16 %v514
        %v1816 = vunpack.c.h.b16 %v514
        %v1817 = vunpack.c.l.b16 %v515
        %v1818 = vunpack.c.h.b16 %v515
        %v1819 = vunpack.c.l.b16 %v516
        %v1820 = vunpack.c.h.b16 %v516
        %v1821 = vunpack.c.l.b16 %v517
        %v1822 = vunpack.c.h.b16 %v517
        %v1823 = vunpack.c.l.b16 %v518
        %v1824 = vunpack.c.h.b16 %v518
        %v1825 = vunpack.c.l.b16 %v519
        %v1826 = vunpack.c.h.b16 %v519
        %v1827 = vunpack.c.l.b16 %v520
        %v1828 = vunpack.c.h.b16 %v520
        %v1829 = vunpack.c.l.b16 %v521
        %v1830 = vunpack.c.h.b16 %v521
        %v1831 = vunpack.c.l.b16 %v522
        %v1832 = vunpack.c.h.b16 %v522
        %v1833 = vunpack.c.l.b16 %v523
        %v1834 = vunpack.c.h.b16 %v523
        %v1835 = vunpack.c.l.b16 %v524
        %v1836 = vunpack.c.h.b16 %v524
        %v1837 = vunpack.c.l.b16 %v525
        %v1838 = vunpack.c.h.b16 %v525
        %v1839 = vunpack.c.l.b16 %v526
        %v1840 = vunpack.c.h.b16 %v526
        %v1841 = vunpack.c.l.b16 %v527
        %v1842 = vunpack.c.h.b16 %v527
        %v1843 = vunpack.c.l.b16 %v528
        %v1844 = vunpack.c.h.b16 %v528
        %v1845 = vunpack.c.l.b16 %v529
        %v1846 = vunpack.c.h.b16 %v529
        %v1847 = vunpack.c.l.b16 %v530
        %v1848 = vunpack.c.h.b16 %v530
        %v1849 = vunpack.c.l.b16 %v531
        %v1850 = vunpack.c.h.b16 %v531
        %v1851 = vunpack.c.l.b16 %v532
        %v1852 = vunpack.c.h.b16 %v532
        %v1853 = vunpack.c.l.b16 %v533
        %v1854 = vunpack.c.h.b16 %v533
        %v1855 = vunpack.c.l.b16 %v534
        %v1856 = vunpack.c.h.b16 %v534
        %v1857 = vunpack.c.l.b16 %v535
        %v1858 = vunpack.c.h.b16 %v535
        %v1859 = vunpack.c.l.b16 %v536
        %v1860 = vunpack.c.h.b16 %v536
        %v1861 = vunpack.c.l.b16 %v537
        %v1862 = vunpack.c.h.b16 %v537
        %v1863 = vunpack.c.l.b16 %v538
        %v1864 = vunpack.c.h.b16 %v538
        %v1865 = vunpack.c.l.b16 %v539
        %v1866 = vunpack.c.h.b16 %v539
        %v1867 = vunpack.c.l.b16 %v540
        %v1868 = vunpack.c.h.b16 %v540
        %v1869 = vunpack.c.l.b16 %v541
        %v1870 = vunpack.c.h.b16 %v541
        %v1871 = vunpack.c.l.b16 %v542
        %v1872 = vunpack.c.h.b16 %v542
        %v1873 = vunpack.c.l.b16 %v543
        %v1874 = vunpack.c.h.b16 %v543
        %v1875 = vunpack.c.l.b16 %v544
        %v1876 = vunpack.c.h.b16 %v544
        %v1877 = vunpack.c.l.b16 %v545
        %v1878 = vunpack.c.h.b16 %v545
        %v1879 = vunpack.c.l.b16 %v546
        %v1880 = vunpack.c.h.b16 %v546
        %v1881 = vunpack.c.l.b16 %v547
        %v1882 = vunpack.c.h.b16 %v547
        %v1883 = vunpack.c.l.b16 %v548
        %v1884 = vunpack.c.h.b16 %v548
        %v1885 = vunpack.c.l.b16 %v549
        %v1886 = vunpack.c.h.b16 %v549
        %v1887 = vunpack.c.l.b16 %v550
        %v1888 = vunpack.c.h.b16 %v550
        %v1889 = vunpack.c.l.b16 %v551
        %v1890 = vunpack.c.h.b16 %v551
        %v1891 = vunpack.c.l.b16 %v552
        %v1892 = vunpack.c.h.b16 %v552
        %v1893 = vunpack.c.l.b16 %v553
        %v1894 = vunpack.c.h.b16 %v553
        %v1895 = vunpack.c.l.b16 %v554
        %v1896 = vunpack.c.h.b16 %v554
        %v1897 = vunpack.c.l.b16 %v555
        %v1898 = vunpack.c.h.b16 %v555
        %v1899 = vunpack.c.l.b16 %v556
        %v1900 = vunpack.c.h.b16 %v556
        %v1901 = vunpack.c.l.b16 %v557
        %v1902 = vunpack.c.h.b16 %v557
        %v1903 = vunpack.c.l.b16 %v558
        %v1904 = vunpack.c.h.b16 %v558
        %v1905 = vunpack.c.l.b16 %v559
        %v1906 = vunpack.c.h.b16 %v559
        %v1907 = vunpack.c.l.b16 %v560
        %v1908 = vunpack.c.h.b16 %v560
        %v1909 = vunpack.c.l.b16 %v561
        %v1910 = vunpack.c.h.b16 %v561
        %v1911 = vunpack.c.l.b16 %v562
        %v1912 = vunpack.c.h.b16 %v562
        %v1913 = vunpack.c.l.b16 %v563
        %v1914 = vunpack.c.h.b16 %v563
        %v1915 = vunpack.c.l.b16 %v564
        %v1916 = vunpack.c.h.b16 %v564
        %v1917 = vunpack.c.l.b16 %v565
        %v1918 = vunpack.c.h.b16 %v565
        %v1919 = vunpack.c.l.b16 %v566
        %v1920 = vunpack.c.h.b16 %v566
        %v1921 = vunpack.c.l.b16 %v567
        %v1922 = vunpack.c.h.b16 %v567
        %v1923 = vunpack.c.l.b16 %v568
        %v1924 = vunpack.c.h.b16 %v568
        %v1925 = vunpack.c.l.b16 %v569
        %v1926 = vunpack.c.h.b16 %v569
        %v1927 = vunpack.c.l.b16 %v570
        %v1928 = vunpack.c.h.b16 %v570
        %v1929 = vunpack.c.l.b16 %v571
        %v1930 = vunpack.c.h.b16 %v571
        %v1931 = vunpack.c.l.b16 %v572
        %v1932 = vunpack.c.h.b16 %v572
        %v1933 = vunpack.c.l.b16 %v573
        %v1934 = vunpack.c.h.b16 %v573
        %v1935 = vunpack.c.l.b16 %v574
        %v1936 = vunpack.c.h.b16 %v574
        %v1937 = vunpack.c.l.b16 %v575
        %v1938 = vunpack.c.h.b16 %v575
        %v1939 = vunpack.c.l.b16 %v576
        %v1940 = vunpack.c.h.b16 %v576
        %v1941 = vunpack.c.l.b16 %v577
        %v1942 = vunpack.c.h.b16 %v577
        %v1943 = vunpack.c.l.b16 %v578
        %v1944 = vunpack.c.h.b16 %v578
        %v1945 = vunpack.c.l.b16 %v579
        %v1946 = vunpack.c.h.b16 %v579
        %v1947 = vunpack.c.l.b16 %v580
        %v1948 = vunpack.c.h.b16 %v580
        %v1949 = vunpack.c.l.b16 %v581
        %v1950 = vunpack.c.h.b16 %v581
        %v1951 = vunpack.c.l.b16 %v582
        %v1952 = vunpack.c.h.b16 %v582
        %v1953 = vunpack.c.l.b16 %v583
        %v1954 = vunpack.c.h.b16 %v583
        %v1955 = vunpack.c.l.b16 %v584
        %v1956 = vunpack.c.h.b16 %v584
        %v1957 = vunpack.c.l.b16 %v585
        %v1958 = vunpack.c.h.b16 %v585
        %v1959 = vunpack.c.l.b16 %v586
        %v1960 = vunpack.c.h.b16 %v586
        %v1961 = vunpack.c.l.b16 %v587
        %v1962 = vunpack.c.h.b16 %v587
        %v1963 = vunpack.c.l.b16 %v588
        %v1964 = vunpack.c.h.b16 %v588
        %v1965 = vunpack.c.l.b16 %v589
        %v1966 = vunpack.c.h.b16 %v589
        %v1967 = vunpack.c.l.b16 %v590
        %v1968 = vunpack.c.h.b16 %v590
        %v1969 = vunpack.c.l.b16 %v591
        %v1970 = vunpack.c.h.b16 %v591
        %v1971 = vunpack.c.l.b16 %v592
        %v1972 = vunpack.c.h.b16 %v592
        %v1973 = vunpack.c.l.b16 %v593
        %v1974 = vunpack.c.h.b16 %v593
        %v1975 = vunpack.c.l.b16 %v594
        %v1976 = vunpack.c.h.b16 %v594
        %v1977 = vunpack.c.l.b16 %v595
        %v1978 = vunpack.c.h.b16 %v595
        %v1979 = vunpack.c.l.b16 %v596
        %v1980 = vunpack.c.h.b16 %v596
        %v1981 = vunpack.c.l.b16 %v597
        %v1982 = vunpack.c.h.b16 %v597
        %v1983 = vunpack.c.l.b16 %v598
        %v1984 = vunpack.c.h.b16 %v598
        %v1985 = vunpack.c.l.b16 %v599
        %v1986 = vunpack.c.h.b16 %v599
        %v1987 = vunpack.c.l.b16 %v600
        %v1988 = vunpack.c.h.b16 %v600
        %v1989 = vunpack.c.l.b16 %v601
        %v1990 = vunpack.c.h.b16 %v601
        %v1991 = vunpack.c.l.b16 %v602
        %v1992 = vunpack.c.h.b16 %v602
        %v1993 = vunpack.c.l.b16 %v603
        %v1994 = vunpack.c.h.b16 %v603
        %v1995 = vunpack.c.l.b16 %v604
        %v1996 = vunpack.c.h.b16 %v604
        %v1997 = vunpack.c.l.b16 %v605
        %v1998 = vunpack.c.h.b16 %v605
        %v1999 = vunpack.c.l.b16 %v606
        %v2000 = vunpack.c.h.b16 %v606
        %v2001 = vunpack.c.l.b16 %v607
        %v2002 = vunpack.c.h.b16 %v607
        %v2003 = vunpack.c.l.b16 %v608
        %v2004 = vunpack.c.h.b16 %v608
        %v2005 = vunpack.c.l.b16 %v609
        %v2006 = vunpack.c.h.b16 %v609
        %v2007 = vunpack.c.l.b16 %v610
        %v2008 = vunpack.c.h.b16 %v610
        %v2009 = vunpack.c.l.b16 %v611
        %v2010 = vunpack.c.h.b16 %v611
        %v2011 = vunpack.c.l.b16 %v612
        %v2012 = vunpack.c.h.b16 %v612
        %v2013 = vunpack.c.l.b16 %v613
        %v2014 = vunpack.c.h.b16 %v613
        %v2015 = vunpack.c.l.b16 %v614
        %v2016 = vunpack.c.h.b16 %v614
        %v2017 = vunpack.c.l.b16 %v615
        %v2018 = vunpack.c.h.b16 %v615
        %v2019 = vunpack.c.l.b16 %v616
        %v2020 = vunpack.c.h.b16 %v616
        %v2021 = vunpack.c.l.b16 %v617
        %v2022 = vunpack.c.h.b16 %v617
        %v2023 = vunpack.c.l.b16 %v618
        %v2024 = vunpack.c.h.b16 %v618
        %v2025 = vunpack.c.l.b16 %v619
        %v2026 = vunpack.c.h.b16 %v619
        %v2027 = vunpack.c.l.b16 %v620
        %v2028 = vunpack.c.h.b16 %v620
        %v2029 = vunpack.c.l.b16 %v621
        %v2030 = vunpack.c.h.b16 %v621
        %v2031 = vunpack.c.l.b16 %v622
        %v2032 = vunpack.c.h.b16 %v622
        %v2033 = vunpack.c.l.b16 %v623
        %v2034 = vunpack.c.h.b16 %v623
        %v2035 = vunpack.c.l.b16 %v624
        %v2036 = vunpack.c.h.b16 %v624
        %v2037 = vunpack.c.l.b16 %v625
        %v2038 = vunpack.c.h.b16 %v625
        %v2039 = vunpack.c.l.b16 %v626
        %v2040 = vunpack.c.h.b16 %v626
        %v2041 = vunpack.c.l.b16 %v627
        %v2042 = vunpack.c.h.b16 %v627
        %v2043 = vunpack.c.l.b16 %v628
        %v2044 = vunpack.c.h.b16 %v628
        %v2045 = vunpack.c.l.b16 %v629
        %v2046 = vunpack.c.h.b16 %v629
        %v2047 = vunpack.c.l.b16 %v630
        %v2048 = vunpack.c.h.b16 %v630
        %v2049 = vunpack.c.l.b16 %v631
        %v2050 = vunpack.c.h.b16 %v631
        %v2051 = vunpack.c.l.b16 %v632
        %v2052 = vunpack.c.h.b16 %v632
        %v2053 = vunpack.c.l.b16 %v633
        %v2054 = vunpack.c.h.b16 %v633
        %v2055 = vunpack.c.l.b16 %v634
        %v2056 = vunpack.c.h.b16 %v634
        %v2057 = vunpack.c.l.b16 %v635
        %v2058 = vunpack.c.h.b16 %v635
        %v2059 = vunpack.c.l.b16 %v636
        %v2060 = vunpack.c.h.b16 %v636
        %v2061 = vunpack.c.l.b16 %v637
        %v2062 = vunpack.c.h.b16 %v637
        %v2063 = vunpack.c.l.b16 %v638
        %v2064 = vunpack.c.h.b16 %v638
        %v2065 = vunpack.c.l.b16 %v639
        %v2066 = vunpack.c.h.b16 %v639
        %v2067 = vunpack.c.l.b16 %v640
        %v2068 = vunpack.c.h.b16 %v640
        %v2069 = vunpack.c.l.b16 %v641
        %v2070 = vunpack.c.h.b16 %v641
        %v2071 = vunpack.c.l.b16 %v642
        %v2072 = vunpack.c.h.b16 %v642
        %v2073 = vunpack.c.l.b16 %v643
        %v2074 = vunpack.c.h.b16 %v643
        %v2075 = vunpack.c.l.b16 %v644
        %v2076 = vunpack.c.h.b16 %v644
        %v2077 = vunpack.c.l.b16 %v645
        %v2078 = vunpack.c.h.b16 %v645
        %v2079 = vunpack.c.l.b16 %v646
        %v2080 = vunpack.c.h.b16 %v646
        %v2081 = vunpack.c.l.b16 %v647
        %v2082 = vunpack.c.h.b16 %v647
        %v2083 = vunpack.c.l.b16 %v648
        %v2084 = vunpack.c.h.b16 %v648
        %v2085 = vunpack.c.l.b16 %v649
        %v2086 = vunpack.c.h.b16 %v649
        %v2087 = vunpack.c.l.b16 %v650
        %v2088 = vunpack.c.h.b16 %v650
        %v2089 = vunpack.c.l.b16 %v651
        %v2090 = vunpack.c.h.b16 %v651
        %v2091 = vunpack.c.l.b16 %v652
        %v2092 = vunpack.c.h.b16 %v652
        %v2093 = vunpack.c.l.b16 %v653
        %v2094 = vunpack.c.h.b16 %v653
        %v2095 = vunpack.c.l.b16 %v654
        %v2096 = vunpack.c.h.b16 %v654
        %v2097 = vunpack.c.l.b16 %v655
        %v2098 = vunpack.c.h.b16 %v655
        %v2099 = vunpack.c.l.b16 %v656
        %v2100 = vunpack.c.h.b16 %v656
        %v2101 = vunpack.c.l.b16 %v657
        %v2102 = vunpack.c.h.b16 %v657
        %v2103 = vunpack.c.l.b16 %v658
        %v2104 = vunpack.c.h.b16 %v658
        %v2105 = vunpack.c.l.b16 %v659
        %v2106 = vunpack.c.h.b16 %v659
        %v2107 = vunpack.c.l.b16 %v660
        %v2108 = vunpack.c.h.b16 %v660
        %v2109 = vunpack.c.l.b16 %v661
        %v2110 = vunpack.c.h.b16 %v661
        %v2111 = vunpack.c.l.b16 %v662
        %v2112 = vunpack.c.h.b16 %v662
        %v2113 = vunpack.c.l.b16 %v663
        %v2114 = vunpack.c.h.b16 %v663
        %v2115 = vunpack.c.l.b16 %v664
        %v2116 = vunpack.c.h.b16 %v664
        %v2117 = vunpack.c.l.b16 %v665
        %v2118 = vunpack.c.h.b16 %v665
        %v2119 = vunpack.c.l.b16 %v666
        %v2120 = vunpack.c.h.b16 %v666
        %v2121 = vunpack.c.l.b16 %v667
        %v2122 = vunpack.c.h.b16 %v667
        %v2123 = vunpack.c.l.b16 %v668
        %v2124 = vunpack.c.h.b16 %v668
        %v2125 = vunpack.c.l.b16 %v669
        %v2126 = vunpack.c.h.b16 %v669
        %v2127 = vunpack.c.l.b16 %v670
        %v2128 = vunpack.c.h.b16 %v670
        %v2129 = vunpack.c.l.b16 %v671
        %v2130 = vunpack.c.h.b16 %v671
        %v2131 = vunpack.c.l.b16 %v672
        %v2132 = vunpack.c.h.b16 %v672
        %v2133 = vunpack.c.l.b16 %v673
        %v2134 = vunpack.c.h.b16 %v673
        %v2135 = vunpack.c.l.b16 %v674
        %v2136 = vunpack.c.h.b16 %v674
        %v2137 = vunpack.c.l.b16 %v675
        %v2138 = vunpack.c.h.b16 %v675
        %v2139 = vunpack.c.l.b16 %v676
        %v2140 = vunpack.c.h.b16 %v676
        %v2141 = vunpack.c.l.b16 %v677
        %v2142 = vunpack.c.h.b16 %v677
        %v2143 = vunpack.c.l.b16 %v678
        %v2144 = vunpack.c.h.b16 %v678
        %v2145 = vunpack.c.l.b16 %v679
        %v2146 = vunpack.c.h.b16 %v679
        %v2147 = vunpack.c.l.b16 %v680
        %v2148 = vunpack.c.h.b16 %v680
        %v2149 = vunpack.c.l.b16 %v681
        %v2150 = vunpack.c.h.b16 %v681
        %v2151 = vunpack.c.l.b16 %v682
        %v2152 = vunpack.c.h.b16 %v682
        %v2153 = vunpack.c.l.b16 %v683
        %v2154 = vunpack.c.h.b16 %v683
        %v2155 = vunpack.c.l.b16 %v684
        %v2156 = vunpack.c.h.b16 %v684
        %v2157 = vunpack.c.l.b16 %v685
        %v2158 = vunpack.c.h.b16 %v685
        %v2159 = vunpack.c.l.b16 %v686
        %v2160 = vunpack.c.h.b16 %v686
        %v2161 = vunpack.c.l.b16 %v687
        %v2162 = vunpack.c.h.b16 %v687
        %v2163 = vunpack.c.l.b16 %v688
        %v2164 = vunpack.c.h.b16 %v688
        %v2165 = vunpack.c.l.b16 %v689
        %v2166 = vunpack.c.h.b16 %v689
        %v2167 = vunpack.c.l.b16 %v690
        %v2168 = vunpack.c.h.b16 %v690
        %v2169 = vunpack.c.l.b16 %v691
        %v2170 = vunpack.c.h.b16 %v691
        %v2171 = vunpack.c.l.b16 %v692
        %v2172 = vunpack.c.h.b16 %v692
        %v2173 = vunpack.c.l.b16 %v693
        %v2174 = vunpack.c.h.b16 %v693
        %v2175 = vunpack.c.l.b16 %v694
        %v2176 = vunpack.c.h.b16 %v694
        %v2177 = vunpack.c.l.b16 %v695
        %v2178 = vunpack.c.h.b16 %v695
        %v2179 = vunpack.c.l.b16 %v696
        %v2180 = vunpack.c.h.b16 %v696
        %v2181 = vunpack.c.l.b16 %v697
        %v2182 = vunpack.c.h.b16 %v697
        %v2183 = vunpack.c.l.b16 %v698
        %v2184 = vunpack.c.h.b16 %v698
        %v2185 = vunpack.c.l.b16 %v699
        %v2186 = vunpack.c.h.b16 %v699
        %v2187 = vunpack.c.l.b16 %v700
        %v2188 = vunpack.c.h.b16 %v700
        %v2189 = vunpack.c.l.b16 %v701
        %v2190 = vunpack.c.h.b16 %v701
        %v2191 = vunpack.c.l.b16 %v702
        %v2192 = vunpack.c.h.b16 %v702
        %v2193 = vunpack.c.l.b16 %v703
        %v2194 = vunpack.c.h.b16 %v703
        %v2195 = vunpack.c.l.b16 %v704
        %v2196 = vunpack.c.h.b16 %v704
        %v2197 = vunpack.c.l.b16 %v705
        %v2198 = vunpack.c.h.b16 %v705
        %v2199 = vunpack.c.l.b16 %v706
        %v2200 = vunpack.c.h.b16 %v706
        %v2201 = vunpack.c.l.b16 %v707
        %v2202 = vunpack.c.h.b16 %v707
        %v2203 = vunpack.c.l.b16 %v708
        %v2204 = vunpack.c.h.b16 %v708
        %v2205 = vunpack.c.l.b16 %v709
        %v2206 = vunpack.c.h.b16 %v709
        %v2207 = vunpack.c.l.b16 %v710
        %v2208 = vunpack.c.h.b16 %v710
        %v2209 = vunpack.c.l.b16 %v711
        %v2210 = vunpack.c.h.b16 %v711
        %v2211 = vunpack.c.l.b16 %v712
        %v2212 = vunpack.c.h.b16 %v712
        %v2213 = vunpack.c.l.b16 %v713
        %v2214 = vunpack.c.h.b16 %v713
        %v2215 = vunpack.c.l.b16 %v714
        %v2216 = vunpack.c.h.b16 %v714
        %v2217 = vunpack.c.l.b16 %v715
        %v2218 = vunpack.c.h.b16 %v715
        %v2219 = vunpack.c.l.b16 %v716
        %v2220 = vunpack.c.h.b16 %v716
        %v2221 = vunpack.c.l.b16 %v717
        %v2222 = vunpack.c.h.b16 %v717
        %v2223 = vunpack.c.l.b16 %v718
        %v2224 = vunpack.c.h.b16 %v718
        %v2225 = vunpack.c.l.b16 %v719
        %v2226 = vunpack.c.h.b16 %v719
        %v2227 = vunpack.c.l.b16 %v720
        %v2228 = vunpack.c.h.b16 %v720
        %v2229 = vunpack.c.l.b16 %v721
        %v2230 = vunpack.c.h.b16 %v721
        %v2231 = vunpack.c.l.b16 %v722
        %v2232 = vunpack.c.h.b16 %v722
        %v2233 = vunpack.c.l.b16 %v723
        %v2234 = vunpack.c.h.b16 %v723
        %v2235 = vunpack.c.l.b16 %v724
        %v2236 = vunpack.c.h.b16 %v724
        %v2237 = vunpack.c.l.b16 %v725
        %v2238 = vunpack.c.h.b16 %v725
        %v2239 = vunpack.c.l.b16 %v726
        %v2240 = vunpack.c.h.b16 %v726
        %v2241 = vunpack.c.l.b16 %v727
        %v2242 = vunpack.c.h.b16 %v727
        %v2243 = vunpack.c.l.b16 %v728
        %v2244 = vunpack.c.h.b16 %v728
        %v2245 = vunpack.c.l.b16 %v729
        %v2246 = vunpack.c.h.b16 %v729
        %v2247 = vunpack.c.l.b16 %v730
        %v2248 = vunpack.c.h.b16 %v730
        %v2249 = vunpack.c.l.b16 %v731
        %v2250 = vunpack.c.h.b16 %v731
        %v2251 = vunpack.c.l.b16 %v732
        %v2252 = vunpack.c.h.b16 %v732
        %v2253 = vunpack.c.l.b16 %v733
        %v2254 = vunpack.c.h.b16 %v733
        %v2255 = vunpack.c.l.b16 %v734
        %v2256 = vunpack.c.h.b16 %v734
        %v2257 = vunpack.c.l.b16 %v735
        %v2258 = vunpack.c.h.b16 %v735
        %v2259 = vunpack.c.l.b16 %v736
        %v2260 = vunpack.c.h.b16 %v736
        %v2261 = vunpack.c.l.b16 %v737
        %v2262 = vunpack.c.h.b16 %v737
        %v2263 = vunpack.c.l.b16 %v738
        %v2264 = vunpack.c.h.b16 %v738
        %v2265 = vunpack.c.l.b16 %v739
        %v2266 = vunpack.c.h.b16 %v739
        %v2267 = vunpack.c.l.b16 %v740
        %v2268 = vunpack.c.h.b16 %v740
        %v2269 = vunpack.c.l.b16 %v741
        %v2270 = vunpack.c.h.b16 %v741
        %v2271 = vunpack.c.l.b16 %v742
        %v2272 = vunpack.c.h.b16 %v742
        %v2273 = vunpack.c.l.b16 %v743
        %v2274 = vunpack.c.h.b16 %v743
        %v2275 = vunpack.c.l.b16 %v744
        %v2276 = vunpack.c.h.b16 %v744
        %v2277 = vunpack.c.l.b16 %v745
        %v2278 = vunpack.c.h.b16 %v745
        %v2279 = vunpack.c.l.b16 %v746
        %v2280 = vunpack.c.h.b16 %v746
        %v2281 = vunpack.c.l.b16 %v747
        %v2282 = vunpack.c.h.b16 %v747
        %v2283 = vunpack.c.l.b16 %v748
        %v2284 = vunpack.c.h.b16 %v748
        %v2285 = vunpack.c.l.b16 %v749
        %v2286 = vunpack.c.h.b16 %v749
        %v2287 = vunpack.c.l.b16 %v750
        %v2288 = vunpack.c.h.b16 %v750
        %v2289 = vunpack.c.l.b16 %v751
        %v2290 = vunpack.c.h.b16 %v751
        %v2291 = vunpack.c.l.b16 %v752
        %v2292 = vunpack.c.h.b16 %v752
        %v2293 = vunpack.c.l.b16 %v753
        %v2294 = vunpack.c.h.b16 %v753
        %v2295 = vunpack.c.l.b16 %v754
        %v2296 = vunpack.c.h.b16 %v754
        %v2297 = vunpack.c.l.b16 %v755
        %v2298 = vunpack.c.h.b16 %v755
        %v2299 = vunpack.c.l.b16 %v756
        %v2300 = vunpack.c.h.b16 %v756
        %v2301 = vunpack.c.l.b16 %v757
        %v2302 = vunpack.c.h.b16 %v757
        %v2303 = vunpack.c.l.b16 %v758
        %v2304 = vunpack.c.h.b16 %v758
        %v2305 = vpack.c.b16 %v1297, %v1281
        %v2306 = vpack.c.b16 %v1298, %v1282
        %v2307 = vpack.c.b16 %v1299, %v1283
        %v2308 = vpack.c.b16 %v1300, %v1284
        %v2309 = vpack.c.b16 %v1301, %v1285
        %v2310 = vpack.c.b16 %v1302, %v1286
        %v2311 = vpack.c.b16 %v1303, %v1287
        %v2312 = vpack.c.b16 %v1304, %v1288
        %v2313 = vpack.c.b16 %v1305, %v1289
        %v2314 = vpack.c.b16 %v1306, %v1290
        %v2315 = vpack.c.b16 %v1307, %v1291
        %v2316 = vpack.c.b16 %v1308, %v1292
        %v2317 = vpack.c.b16 %v1309, %v1293
        %v2318 = vpack.c.b16 %v1310, %v1294
        %v2319 = vpack.c.b16 %v1311, %v1295
        %v2320 = vpack.c.b16 %v1312, %v1296
        %v2321 = vpack.c.b16 %v1329, %v1313
        %v2322 = vpack.c.b16 %v1330, %v1314
        %v2323 = vpack.c.b16 %v1331, %v1315
        %v2324 = vpack.c.b16 %v1332, %v1316
        %v2325 = vpack.c.b16 %v1333, %v1317
        %v2326 = vpack.c.b16 %v1334, %v1318
        %v2327 = vpack.c.b16 %v1335, %v1319
        %v2328 = vpack.c.b16 %v1336, %v1320
        %v2329 = vpack.c.b16 %v1337, %v1321
        %v2330 = vpack.c.b16 %v1338, %v1322
        %v2331 = vpack.c.b16 %v1339, %v1323
        %v2332 = vpack.c.b16 %v1340, %v1324
        %v2333 = vpack.c.b16 %v1341, %v1325
        %v2334 = vpack.c.b16 %v1342, %v1326
        %v2335 = vpack.c.b16 %v1343, %v1327
        %v2336 = vpack.c.b16 %v1344, %v1328
        %v2337 = vpack.c.b16 %v1361, %v1345
        %v2338 = vpack.c.b16 %v1362, %v1346
        %v2339 = vpack.c.b16 %v1363, %v1347
        %v2340 = vpack.c.b16 %v1364, %v1348
        %v2341 = vpack.c.b16 %v1365, %v1349
        %v2342 = vpack.c.b16 %v1366, %v1350
        %v2343 = vpack.c.b16 %v1367, %v1351
        %v2344 = vpack.c.b16 %v1368, %v1352
        %v2345 = vpack.c.b16 %v1369, %v1353
        %v2346 = vpack.c.b16 %v1370, %v1354
        %v2347 = vpack.c.b16 %v1371, %v1355
        %v2348 = vpack.c.b16 %v1372, %v1356
        %v2349 = vpack.c.b16 %v1373, %v1357
        %v2350 = vpack.c.b16 %v1374, %v1358
        %v2351 = vpack.c.b16 %v1375, %v1359
        %v2352 = vpack.c.b16 %v1376, %v1360
        %v2353 = vpack.c.b16 %v1393, %v1377
        %v2354 = vpack.c.b16 %v1394, %v1378
        %v2355 = vpack.c.b16 %v1395, %v1379
        %v2356 = vpack.c.b16 %v1396, %v1380
        %v2357 = vpack.c.b16 %v1397, %v1381
        %v2358 = vpack.c.b16 %v1398, %v1382
        %v2359 = vpack.c.b16 %v1399, %v1383
        %v2360 = vpack.c.b16 %v1400, %v1384
        %v2361 = vpack.c.b16 %v1401, %v1385
        %v2362 = vpack.c.b16 %v1402, %v1386
        %v2363 = vpack.c.b16 %v1403, %v1387
        %v2364 = vpack.c.b16 %v1404, %v1388
        %v2365 = vpack.c.b16 %v1405, %v1389
        %v2366 = vpack.c.b16 %v1406, %v1390
        %v2367 = vpack.c.b16 %v1407, %v1391
        %v2368 = vpack.c.b16 %v1408, %v1392
        %v2369 = vpack.c.b16 %v1425, %v1409
        %v2370 = vpack.c.b16 %v1426, %v1410
        %v2371 = vpack.c.b16 %v1427, %v1411
        %v2372 = vpack.c.b16 %v1428, %v1412
        %v2373 = vpack.c.b16 %v1429, %v1413
        %v2374 = vpack.c.b16 %v1430, %v1414
        %v2375 = vpack.c.b16 %v1431, %v1415
        %v2376 = vpack.c.b16 %v1432, %v1416
        %v2377 = vpack.c.b16 %v1433, %v1417
        %v2378 = vpack.c.b16 %v1434, %v1418
        %v2379 = vpack.c.b16 %v1435, %v1419
        %v2380 = vpack.c.b16 %v1436, %v1420
        %v2381 = vpack.c.b16 %v1437, %v1421
        %v2382 = vpack.c.b16 %v1438, %v1422
        %v2383 = vpack.c.b16 %v1439, %v1423
        %v2384 = vpack.c.b16 %v1440, %v1424
        %v2385 = vpack.c.b16 %v1457, %v1441
        %v2386 = vpack.c.b16 %v1458, %v1442
        %v2387 = vpack.c.b16 %v1459, %v1443
        %v2388 = vpack.c.b16 %v1460, %v1444
        %v2389 = vpack.c.b16 %v1461, %v1445
        %v2390 = vpack.c.b16 %v1462, %v1446
        %v2391 = vpack.c.b16 %v1463, %v1447
        %v2392 = vpack.c.b16 %v1464, %v1448
        %v2393 = vpack.c.b16 %v1465, %v1449
        %v2394 = vpack.c.b16 %v1466, %v1450
        %v2395 = vpack.c.b16 %v1467, %v1451
        %v2396 = vpack.c.b16 %v1468, %v1452
        %v2397 = vpack.c.b16 %v1469, %v1453
        %v2398 = vpack.c.b16 %v1470, %v1454
        %v2399 = vpack.c.b16 %v1471, %v1455
        %v2400 = vpack.c.b16 %v1472, %v1456
        %v2401 = vpack.c.b16 %v1489, %v1473
        %v2402 = vpack.c.b16 %v1490, %v1474
        %v2403 = vpack.c.b16 %v1491, %v1475
        %v2404 = vpack.c.b16 %v1492, %v1476
        %v2405 = vpack.c.b16 %v1493, %v1477
        %v2406 = vpack.c.b16 %v1494, %v1478
        %v2407 = vpack.c.b16 %v1495, %v1479
        %v2408 = vpack.c.b16 %v1496, %v1480
        %v2409 = vpack.c.b16 %v1497, %v1481
        %v2410 = vpack.c.b16 %v1498, %v1482
        %v2411 = vpack.c.b16 %v1499, %v1483
        %v2412 = vpack.c.b16 %v1500, %v1484
        %v2413 = vpack.c.b16 %v1501, %v1485
        %v2414 = vpack.c.b16 %v1502, %v1486
        %v2415 = vpack.c.b16 %v1503, %v1487
        %v2416 = vpack.c.b16 %v1504, %v1488
        %v2417 = vpack.c.b16 %v1521, %v1505
        %v2418 = vpack.c.b16 %v1522, %v1506
        %v2419 = vpack.c.b16 %v1523, %v1507
        %v2420 = vpack.c.b16 %v1524, %v1508
        %v2421 = vpack.c.b16 %v1525, %v1509
        %v2422 = vpack.c.b16 %v1526, %v1510
        %v2423 = vpack.c.b16 %v1527, %v1511
        %v2424 = vpack.c.b16 %v1528, %v1512
        %v2425 = vpack.c.b16 %v1529, %v1513
        %v2426 = vpack.c.b16 %v1530, %v1514
        %v2427 = vpack.c.b16 %v1531, %v1515
        %v2428 = vpack.c.b16 %v1532, %v1516
        %v2429 = vpack.c.b16 %v1533, %v1517
        %v2430 = vpack.c.b16 %v1534, %v1518
        %v2431 = vpack.c.b16 %v1535, %v1519
        %v2432 = vpack.c.b16 %v1536, %v1520
        %v2433 = vpack.c.b16 %v1553, %v1537
        %v2434 = vpack.c.b16 %v1554, %v1538
        %v2435 = vpack.c.b16 %v1555, %v1539
        %v2436 = vpack.c.b16 %v1556, %v1540
        %v2437 = vpack.c.b16 %v1557, %v1541
        %v2438 = vpack.c.b16 %v1558, %v1542
        %v2439 = vpack.c.b16 %v1559, %v1543
        %v2440 = vpack.c.b16 %v1560, %v1544
        %v2441 = vpack.c.b16 %v1561, %v1545
        %v2442 = vpack.c.b16 %v1562, %v1546
        %v2443 = vpack.c.b16 %v1563, %v1547
        %v2444 = vpack.c.b16 %v1564, %v1548
        %v2445 = vpack.c.b16 %v1565, %v1549
        %v2446 = vpack.c.b16 %v1566, %v1550
        %v2447 = vpack.c.b16 %v1567, %v1551
        %v2448 = vpack.c.b16 %v1568, %v1552
        %v2449 = vpack.c.b16 %v1585, %v1569
        %v2450 = vpack.c.b16 %v1586, %v1570
        %v2451 = vpack.c.b16 %v1587, %v1571
        %v2452 = vpack.c.b16 %v1588, %v1572
        %v2453 = vpack.c.b16 %v1589, %v1573
        %v2454 = vpack.c.b16 %v1590, %v1574
        %v2455 = vpack.c.b16 %v1591, %v1575
        %v2456 = vpack.c.b16 %v1592, %v1576
        %v2457 = vpack.c.b16 %v1593, %v1577
        %v2458 = vpack.c.b16 %v1594, %v1578
        %v2459 = vpack.c.b16 %v1595, %v1579
        %v2460 = vpack.c.b16 %v1596, %v1580
        %v2461 = vpack.c.b16 %v1597, %v1581
        %v2462 = vpack.c.b16 %v1598, %v1582
        %v2463 = vpack.c.b16 %v1599, %v1583
        %v2464 = vpack.c.b16 %v1600, %v1584
        %v2465 = vpack.c.b16 %v1617, %v1601
        %v2466 = vpack.c.b16 %v1618, %v1602
        %v2467 = vpack.c.b16 %v1619, %v1603
        %v2468 = vpack.c.b16 %v1620, %v1604
        %v2469 = vpack.c.b16 %v1621, %v1605
        %v2470 = vpack.c.b16 %v1622, %v1606
        %v2471 = vpack.c.b16 %v1623, %v1607
        %v2472 = vpack.c.b16 %v1624, %v1608
        %v2473 = vpack.c.b16 %v1625, %v1609
        %v2474 = vpack.c.b16 %v1626, %v1610
        %v2475 = vpack.c.b16 %v1627, %v1611
        %v2476 = vpack.c.b16 %v1628, %v1612
        %v2477 = vpack.c.b16 %v1629, %v1613
        %v2478 = vpack.c.b16 %v1630, %v1614
        %v2479 = vpack.c.b16 %v1631, %v1615
        %v2480 = vpack.c.b16 %v1632, %v1616
        %v2481 = vpack.c.b16 %v1649, %v1633
        %v2482 = vpack.c.b16 %v1650, %v1634
        %v2483 = vpack.c.b16 %v1651, %v1635
        %v2484 = vpack.c.b16 %v1652, %v1636
        %v2485 = vpack.c.b16 %v1653, %v1637
        %v2486 = vpack.c.b16 %v1654, %v1638
        %v2487 = vpack.c.b16 %v1655, %v1639
        %v2488 = vpack.c.b16 %v1656, %v1640
        %v2489 = vpack.c.b16 %v1657, %v1641
        %v2490 = vpack.c.b16 %v1658, %v1642
        %v2491 = vpack.c.b16 %v1659, %v1643
        %v2492 = vpack.c.b16 %v1660, %v1644
        %v2493 = vpack.c.b16 %v1661, %v1645
        %v2494 = vpack.c.b16 %v1662, %v1646
        %v2495 = vpack.c.b16 %v1663, %v1647
        %v2496 = vpack.c.b16 %v1664, %v1648
        %v2497 = vpack.c.b16 %v1681, %v1665
        %v2498 = vpack.c.b16 %v1682, %v1666
        %v2499 = vpack.c.b16 %v1683, %v1667
        %v2500 = vpack.c.b16 %v1684, %v1668
        %v2501 = vpack.c.b16 %v1685, %v1669
        %v2502 = vpack.c.b16 %v1686, %v1670
        %v2503 = vpack.c.b16 %v1687, %v1671
        %v2504 = vpack.c.b16 %v1688, %v1672
        %v2505 = vpack.c.b16 %v1689, %v1673
        %v2506 = vpack.c.b16 %v1690, %v1674
        %v2507 = vpack.c.b16 %v1691, %v1675
        %v2508 = vpack.c.b16 %v1692, %v1676
        %v2509 = vpack.c.b16 %v1693, %v1677
        %v2510 = vpack.c.b16 %v1694, %v1678
        %v2511 = vpack.c.b16 %v1695, %v1679
        %v2512 = vpack.c.b16 %v1696, %v1680
        %v2513 = vpack.c.b16 %v1713, %v1697
        %v2514 = vpack.c.b16 %v1714, %v1698
        %v2515 = vpack.c.b16 %v1715, %v1699
        %v2516 = vpack.c.b16 %v1716, %v1700
        %v2517 = vpack.c.b16 %v1717, %v1701
        %v2518 = vpack.c.b16 %v1718, %v1702
        %v2519 = vpack.c.b16 %v1719, %v1703
        %v2520 = vpack.c.b16 %v1720, %v1704
        %v2521 = vpack.c.b16 %v1721, %v1705
        %v2522 = vpack.c.b16 %v1722, %v1706
        %v2523 = vpack.c.b16 %v1723, %v1707
        %v2524 = vpack.c.b16 %v1724, %v1708
        %v2525 = vpack.c.b16 %v1725, %v1709
        %v2526 = vpack.c.b16 %v1726, %v1710
        %v2527 = vpack.c.b16 %v1727, %v1711
        %v2528 = vpack.c.b16 %v1728, %v1712
        %v2529 = vpack.c.b16 %v1745, %v1729
        %v2530 = vpack.c.b16 %v1746, %v1730
        %v2531 = vpack.c.b16 %v1747, %v1731
        %v2532 = vpack.c.b16 %v1748, %v1732
        %v2533 = vpack.c.b16 %v1749, %v1733
        %v2534 = vpack.c.b16 %v1750, %v1734
        %v2535 = vpack.c.b16 %v1751, %v1735
        %v2536 = vpack.c.b16 %v1752, %v1736
        %v2537 = vpack.c.b16 %v1753, %v1737
        %v2538 = vpack.c.b16 %v1754, %v1738
        %v2539 = vpack.c.b16 %v1755, %v1739
        %v2540 = vpack.c.b16 %v1756, %v1740
        %v2541 = vpack.c.b16 %v1757, %v1741
        %v2542 = vpack.c.b16 %v1758, %v1742
        %v2543 = vpack.c.b16 %v1759, %v1743
        %v2544 = vpack.c.b16 %v1760, %v1744
        %v2545 = vpack.c.b16 %v1777, %v1761
        %v2546 = vpack.c.b16 %v1778, %v1762
        %v2547 = vpack.c.b16 %v1779, %v1763
        %v2548 = vpack.c.b16 %v1780, %v1764
        %v2549 = vpack.c.b16 %v1781, %v1765
        %v2550 = vpack.c.b16 %v1782, %v1766
        %v2551 = vpack.c.b16 %v1783, %v1767
        %v2552 = vpack.c.b16 %v1784, %v1768
        %v2553 = vpack.c.b16 %v1785, %v1769
        %v2554 = vpack.c.b16 %v1786, %v1770
        %v2555 = vpack.c.b16 %v1787, %v1771
        %v2556 = vpack.c.b16 %v1788, %v1772
        %v2557 = vpack.c.b16 %v1789, %v1773
        %v2558 = vpack.c.b16 %v1790, %v1774
        %v2559 = vpack.c.b16 %v1791, %v1775
        %v2560 = vpack.c.b16 %v1792, %v1776
        %v2561 = vpack.c.b16 %v1809, %v1793
        %v2562 = vpack.c.b16 %v1810, %v1794
        %v2563 = vpack.c.b16 %v1811, %v1795
        %v2564 = vpack.c.b16 %v1812, %v1796
        %v2565 = vpack.c.b16 %v1813, %v1797
        %v2566 = vpack.c.b16 %v1814, %v1798
        %v2567 = vpack.c.b16 %v1815, %v1799
        %v2568 = vpack.c.b16 %v1816, %v1800
        %v2569 = vpack.c.b16 %v1817, %v1801
        %v2570 = vpack.c.b16 %v1818, %v1802
        %v2571 = vpack.c.b16 %v1819, %v1803
        %v2572 = vpack.c.b16 %v1820, %v1804
        %v2573 = vpack.c.b16 %v1821, %v1805
        %v2574 = vpack.c.b16 %v1822, %v1806
        %v2575 = vpack.c.b16 %v1823, %v1807
        %v2576 = vpack.c.b16 %v1824, %v1808
        %v2577 = vpack.c.b16 %v1841, %v1825
        %v2578 = vpack.c.b16 %v1842, %v1826
        %v2579 = vpack.c.b16 %v1843, %v1827
        %v2580 = vpack.c.b16 %v1844, %v1828
        %v2581 = vpack.c.b16 %v1845, %v1829
        %v2582 = vpack.c.b16 %v1846, %v1830
        %v2583 = vpack.c.b16 %v1847, %v1831
        %v2584 = vpack.c.b16 %v1848, %v1832
        %v2585 = vpack.c.b16 %v1849, %v1833
        %v2586 = vpack.c.b16 %v1850, %v1834
        %v2587 = vpack.c.b16 %v1851, %v1835
        %v2588 = vpack.c.b16 %v1852, %v1836
        %v2589 = vpack.c.b16 %v1853, %v1837
        %v2590 = vpack.c.b16 %v1854, %v1838
        %v2591 = vpack.c.b16 %v1855, %v1839
        %v2592 = vpack.c.b16 %v1856, %v1840
        %v2593 = vpack.c.b16 %v1873, %v1857
        %v2594 = vpack.c.b16 %v1874, %v1858
        %v2595 = vpack.c.b16 %v1875, %v1859
        %v2596 = vpack.c.b16 %v1876, %v1860
        %v2597 = vpack.c.b16 %v1877, %v1861
        %v2598 = vpack.c.b16 %v1878, %v1862
        %v2599 = vpack.c.b16 %v1879, %v1863
        %v2600 = vpack.c.b16 %v1880, %v1864
        %v2601 = vpack.c.b16 %v1881, %v1865
        %v2602 = vpack.c.b16 %v1882, %v1866
        %v2603 = vpack.c.b16 %v1883, %v1867
        %v2604 = vpack.c.b16 %v1884, %v1868
        %v2605 = vpack.c.b16 %v1885, %v1869
        %v2606 = vpack.c.b16 %v1886, %v1870
        %v2607 = vpack.c.b16 %v1887, %v1871
        %v2608 = vpack.c.b16 %v1888, %v1872
        %v2609 = vpack.c.b16 %v1905, %v1889
        %v2610 = vpack.c.b16 %v1906, %v1890
        %v2611 = vpack.c.b16 %v1907, %v1891
        %v2612 = vpack.c.b16 %v1908, %v1892
        %v2613 = vpack.c.b16 %v1909, %v1893
        %v2614 = vpack.c.b16 %v1910, %v1894
        %v2615 = vpack.c.b16 %v1911, %v1895
        %v2616 = vpack.c.b16 %v1912, %v1896
        %v2617 = vpack.c.b16 %v1913, %v1897
        %v2618 = vpack.c.b16 %v1914, %v1898
        %v2619 = vpack.c.b16 %v1915, %v1899
        %v2620 = vpack.c.b16 %v1916, %v1900
        %v2621 = vpack.c.b16 %v1917, %v1901
        %v2622 = vpack.c.b16 %v1918, %v1902
        %v2623 = vpack.c.b16 %v1919, %v1903
        %v2624 = vpack.c.b16 %v1920, %v1904
        %v2625 = vpack.c.b16 %v1937, %v1921
        %v2626 = vpack.c.b16 %v1938, %v1922
        %v2627 = vpack.c.b16 %v1939, %v1923
        %v2628 = vpack.c.b16 %v1940, %v1924
        %v2629 = vpack.c.b16 %v1941, %v1925
        %v2630 = vpack.c.b16 %v1942, %v1926
        %v2631 = vpack.c.b16 %v1943, %v1927
        %v2632 = vpack.c.b16 %v1944, %v1928
        %v2633 = vpack.c.b16 %v1945, %v1929
        %v2634 = vpack.c.b16 %v1946, %v1930
        %v2635 = vpack.c.b16 %v1947, %v1931
        %v2636 = vpack.c.b16 %v1948, %v1932
        %v2637 = vpack.c.b16 %v1949, %v1933
        %v2638 = vpack.c.b16 %v1950, %v1934
        %v2639 = vpack.c.b16 %v1951, %v1935
        %v2640 = vpack.c.b16 %v1952, %v1936
        %v2641 = vpack.c.b16 %v1969, %v1953
        %v2642 = vpack.c.b16 %v1970, %v1954
        %v2643 = vpack.c.b16 %v1971, %v1955
        %v2644 = vpack.c.b16 %v1972, %v1956
        %v2645 = vpack.c.b16 %v1973, %v1957
        %v2646 = vpack.c.b16 %v1974, %v1958
        %v2647 = vpack.c.b16 %v1975, %v1959
        %v2648 = vpack.c.b16 %v1976, %v1960
        %v2649 = vpack.c.b16 %v1977, %v1961
        %v2650 = vpack.c.b16 %v1978, %v1962
        %v2651 = vpack.c.b16 %v1979, %v1963
        %v2652 = vpack.c.b16 %v1980, %v1964
        %v2653 = vpack.c.b16 %v1981, %v1965
        %v2654 = vpack.c.b16 %v1982, %v1966
        %v2655 = vpack.c.b16 %v1983, %v1967
        %v2656 = vpack.c.b16 %v1984, %v1968
        %v2657 = vpack.c.b16 %v2001, %v1985
        %v2658 = vpack.c.b16 %v2002, %v1986
        %v2659 = vpack.c.b16 %v2003, %v1987
        %v2660 = vpack.c.b16 %v2004, %v1988
        %v2661 = vpack.c.b16 %v2005, %v1989
        %v2662 = vpack.c.b16 %v2006, %v1990
        %v2663 = vpack.c.b16 %v2007, %v1991
        %v2664 = vpack.c.b16 %v2008, %v1992
        %v2665 = vpack.c.b16 %v2009, %v1993
        %v2666 = vpack.c.b16 %v2010, %v1994
        %v2667 = vpack.c.b16 %v2011, %v1995
        %v2668 = vpack.c.b16 %v2012, %v1996
        %v2669 = vpack.c.b16 %v2013, %v1997
        %v2670 = vpack.c.b16 %v2014, %v1998
        %v2671 = vpack.c.b16 %v2015, %v1999
        %v2672 = vpack.c.b16 %v2016, %v2000
        %v2673 = vpack.c.b16 %v2033, %v2017
        %v2674 = vpack.c.b16 %v2034, %v2018
        %v2675 = vpack.c.b16 %v2035, %v2019
        %v2676 = vpack.c.b16 %v2036, %v2020
        %v2677 = vpack.c.b16 %v2037, %v2021
        %v2678 = vpack.c.b16 %v2038, %v2022
        %v2679 = vpack.c.b16 %v2039, %v2023
        %v2680 = vpack.c.b16 %v2040, %v2024
        %v2681 = vpack.c.b16 %v2041, %v2025
        %v2682 = vpack.c.b16 %v2042, %v2026
        %v2683 = vpack.c.b16 %v2043, %v2027
        %v2684 = vpack.c.b16 %v2044, %v2028
        %v2685 = vpack.c.b16 %v2045, %v2029
        %v2686 = vpack.c.b16 %v2046, %v2030
        %v2687 = vpack.c.b16 %v2047, %v2031
        %v2688 = vpack.c.b16 %v2048, %v2032
        %v2689 = vpack.c.b16 %v2065, %v2049
        %v2690 = vpack.c.b16 %v2066, %v2050
        %v2691 = vpack.c.b16 %v2067, %v2051
        %v2692 = vpack.c.b16 %v2068, %v2052
        %v2693 = vpack.c.b16 %v2069, %v2053
        %v2694 = vpack.c.b16 %v2070, %v2054
        %v2695 = vpack.c.b16 %v2071, %v2055
        %v2696 = vpack.c.b16 %v2072, %v2056
        %v2697 = vpack.c.b16 %v2073, %v2057
        %v2698 = vpack.c.b16 %v2074, %v2058
        %v2699 = vpack.c.b16 %v2075, %v2059
        %v2700 = vpack.c.b16 %v2076, %v2060
        %v2701 = vpack.c.b16 %v2077, %v2061
        %v2702 = vpack.c.b16 %v2078, %v2062
        %v2703 = vpack.c.b16 %v2079, %v2063
        %v2704 = vpack.c.b16 %v2080, %v2064
        %v2705 = vpack.c.b16 %v2097, %v2081
        %v2706 = vpack.c.b16 %v2098, %v2082
        %v2707 = vpack.c.b16 %v2099, %v2083
        %v2708 = vpack.c.b16 %v2100, %v2084
        %v2709 = vpack.c.b16 %v2101, %v2085
        %v2710 = vpack.c.b16 %v2102, %v2086
        %v2711 = vpack.c.b16 %v2103, %v2087
        %v2712 = vpack.c.b16 %v2104, %v2088
        %v2713 = vpack.c.b16 %v2105, %v2089
        %v2714 = vpack.c.b16 %v2106, %v2090
        %v2715 = vpack.c.b16 %v2107, %v2091
        %v2716 = vpack.c.b16 %v2108, %v2092
        %v2717 = vpack.c.b16 %v2109, %v2093
        %v2718 = vpack.c.b16 %v2110, %v2094
        %v2719 = vpack.c.b16 %v2111, %v2095
        %v2720 = vpack.c.b16 %v2112, %v2096
        %v2721 = vpack.c.b16 %v2129, %v2113
        %v2722 = vpack.c.b16 %v2130, %v2114
        %v2723 = vpack.c.b16 %v2131, %v2115
        %v2724 = vpack.c.b16 %v2132, %v2116
        %v2725 = vpack.c.b16 %v2133, %v2117
        %v2726 = vpack.c.b16 %v2134, %v2118
        %v2727 = vpack.c.b16 %v2135, %v2119
        %v2728 = vpack.c.b16 %v2136, %v2120
        %v2729 = vpack.c.b16 %v2137, %v2121
        %v2730 = vpack.c.b16 %v2138, %v2122
        %v2731 = vpack.c.b16 %v2139, %v2123
        %v2732 = vpack.c.b16 %v2140, %v2124
        %v2733 = vpack.c.b16 %v2141, %v2125
        %v2734 = vpack.c.b16 %v2142, %v2126
        %v2735 = vpack.c.b16 %v2143, %v2127
        %v2736 = vpack.c.b16 %v2144, %v2128
        %v2737 = vpack.c.b16 %v2161, %v2145
        %v2738 = vpack.c.b16 %v2162, %v2146
        %v2739 = vpack.c.b16 %v2163, %v2147
        %v2740 = vpack.c.b16 %v2164, %v2148
        %v2741 = vpack.c.b16 %v2165, %v2149
        %v2742 = vpack.c.b16 %v2166, %v2150
        %v2743 = vpack.c.b16 %v2167, %v2151
        %v2744 = vpack.c.b16 %v2168, %v2152
        %v2745 = vpack.c.b16 %v2169, %v2153
        %v2746 = vpack.c.b16 %v2170, %v2154
        %v2747 = vpack.c.b16 %v2171, %v2155
        %v2748 = vpack.c.b16 %v2172, %v2156
        %v2749 = vpack.c.b16 %v2173, %v2157
        %v2750 = vpack.c.b16 %v2174, %v2158
        %v2751 = vpack.c.b16 %v2175, %v2159
        %v2752 = vpack.c.b16 %v2176, %v2160
        %v2753 = vpack.c.b16 %v2193, %v2177
        %v2754 = vpack.c.b16 %v2194, %v2178
        %v2755 = vpack.c.b16 %v2195, %v2179
        %v2756 = vpack.c.b16 %v2196, %v2180
        %v2757 = vpack.c.b16 %v2197, %v2181
        %v2758 = vpack.c.b16 %v2198, %v2182
        %v2759 = vpack.c.b16 %v2199, %v2183
        %v2760 = vpack.c.b16 %v2200, %v2184
        %v2761 = vpack.c.b16 %v2201, %v2185
        %v2762 = vpack.c.b16 %v2202, %v2186
        %v2763 = vpack.c.b16 %v2203, %v2187
        %v2764 = vpack.c.b16 %v2204, %v2188
        %v2765 = vpack.c.b16 %v2205, %v2189
        %v2766 = vpack.c.b16 %v2206, %v2190
        %v2767 = vpack.c.b16 %v2207, %v2191
        %v2768 = vpack.c.b16 %v2208, %v2192
        %v2769 = vpack.c.b16 %v2225, %v2209
        %v2770 = vpack.c.b16 %v2226, %v2210
        %v2771 = vpack.c.b16 %v2227, %v2211
        %v2772 = vpack.c.b16 %v2228, %v2212
        %v2773 = vpack.c.b16 %v2229, %v2213
        %v2774 = vpack.c.b16 %v2230, %v2214
        %v2775 = vpack.c.b16 %v2231, %v2215
        %v2776 = vpack.c.b16 %v2232, %v2216
        %v2777 = vpack.c.b16 %v2233, %v2217
        %v2778 = vpack.c.b16 %v2234, %v2218
        %v2779 = vpack.c.b16 %v2235, %v2219
        %v2780 = vpack.c.b16 %v2236, %v2220
        %v2781 = vpack.c.b16 %v2237, %v2221
        %v2782 = vpack.c.b16 %v2238, %v2222
        %v2783 = vpack.c.b16 %v2239, %v2223
        %v2784 = vpack.c.b16 %v2240, %v2224
        %v2785 = vpack.c.b16 %v2257, %v2241
        %v2786 = vpack.c.b16 %v2258, %v2242
        %v2787 = vpack.c.b16 %v2259, %v2243
        %v2788 = vpack.c.b16 %v2260, %v2244
        %v2789 = vpack.c.b16 %v2261, %v2245
        %v2790 = vpack.c.b16 %v2262, %v2246
        %v2791 = vpack.c.b16 %v2263, %v2247
        %v2792 = vpack.c.b16 %v2264, %v2248
        %v2793 = vpack.c.b16 %v2265, %v2249
        %v2794 = vpack.c.b16 %v2266, %v2250
        %v2795 = vpack.c.b16 %v2267, %v2251
        %v2796 = vpack.c.b16 %v2268, %v2252
        %v2797 = vpack.c.b16 %v2269, %v2253
        %v2798 = vpack.c.b16 %v2270, %v2254
        %v2799 = vpack.c.b16 %v2271, %v2255
        %v2800 = vpack.c.b16 %v2272, %v2256
        %v2801 = vpack.c.b16 %v2289, %v2273
        %v2802 = vpack.c.b16 %v2290, %v2274
        %v2803 = vpack.c.b16 %v2291, %v2275
        %v2804 = vpack.c.b16 %v2292, %v2276
        %v2805 = vpack.c.b16 %v2293, %v2277
        %v2806 = vpack.c.b16 %v2294, %v2278
        %v2807 = vpack.c.b16 %v2295, %v2279
        %v2808 = vpack.c.b16 %v2296, %v2280
        %v2809 = vpack.c.b16 %v2297, %v2281
        %v2810 = vpack.c.b16 %v2298, %v2282
        %v2811 = vpack.c.b16 %v2299, %v2283
        %v2812 = vpack.c.b16 %v2300, %v2284
        %v2813 = vpack.c.b16 %v2301, %v2285
        %v2814 = vpack.c.b16 %v2302, %v2286
        %v2815 = vpack.c.b16 %v2303, %v2287
        %v2816 = vpack.c.b16 %v2304, %v2288
        %3329 = vmatpush.bf16.msra.mxu0 %v2417
        %3330 = vmatpush.bf16.msra.mxu0 %v2401
        %3331 = vmatpush.bf16.msra.mxu0 %v2385
        %3332 = vmatpush.bf16.msra.mxu0 %v2369
        %3333 = vmatpush.bf16.msra.mxu0 %v2353
        %3334 = vmatpush.bf16.msra.mxu0 %v2337
        %3335 = vmatpush.bf16.msra.mxu0 %v2321
        %3336 = vmatpush.bf16.msra.mxu0 %v2305
        %3337 = vmatmul.bf16.gmra.mxu0 %v761
        %v3338 = vpop.f32.mrf.mxu0
        %v3339 = vadd.f32 0.0, %v3338
        %v3340 = vpop.f32.mrf.mxu0
        %3341 = vdwg.mxu0
        %3342 = vmatpush.bf16.msra.mxu0 %v2545
        %3343 = vmatpush.bf16.msra.mxu0 %v2529
        %3344 = vmatpush.bf16.msra.mxu0 %v2513
        %3345 = vmatpush.bf16.msra.mxu0 %v2497
        %3346 = vmatpush.bf16.msra.mxu0 %v2481
        %3347 = vmatpush.bf16.msra.mxu0 %v2465
        %3348 = vmatpush.bf16.msra.mxu0 %v2449
        %3349 = vmatpush.bf16.msra.mxu0 %v2433
        %3350 = vmatmul.bf16.gmra.mxu0 %v762
        %v3351 = vpop.f32.mrf.mxu0
        %v3352 = vadd.f32 %v3339, %v3351
        %v3353 = vpop.f32.mrf.mxu0
        %3354 = vdwg.mxu0
        %3355 = vmatpush.bf16.msra.mxu0 %v2673
        %3356 = vmatpush.bf16.msra.mxu0 %v2657
        %3357 = vmatpush.bf16.msra.mxu0 %v2641
        %3358 = vmatpush.bf16.msra.mxu0 %v2625
        %3359 = vmatpush.bf16.msra.mxu0 %v2609
        %3360 = vmatpush.bf16.msra.mxu0 %v2593
        %3361 = vmatpush.bf16.msra.mxu0 %v2577
        %3362 = vmatpush.bf16.msra.mxu0 %v2561
        %3363 = vmatmul.bf16.gmra.mxu0 %v763
        %v3364 = vpop.f32.mrf.mxu0
        %v3365 = vadd.f32 %v3352, %v3364
        %v3366 = vpop.f32.mrf.mxu0
        %3367 = vdwg.mxu0
        %3368 = vmatpush.bf16.msra.mxu0 %v2801
        %3369 = vmatpush.bf16.msra.mxu0 %v2785
        %3370 = vmatpush.bf16.msra.mxu0 %v2769
        %3371 = vmatpush.bf16.msra.mxu0 %v2753
        %3372 = vmatpush.bf16.msra.mxu0 %v2737
        %3373 = vmatpush.bf16.msra.mxu0 %v2721
        %3374 = vmatpush.bf16.msra.mxu0 %v2705
        %3375 = vmatpush.bf16.msra.mxu0 %v2689
        %3376 = vmatmul.bf16.gmra.mxu0 %v764
        %v3377 = vpop.f32.mrf.mxu0
        %v3378 = vadd.f32 %v3365, %v3377
        %v3379 = vpop.f32.mrf.mxu0
        %3380 = vdwg.mxu0
        %3381 = vmatpush.bf16.msra.mxu0 %v2418
        %3382 = vmatpush.bf16.msra.mxu0 %v2402
        %3383 = vmatpush.bf16.msra.mxu0 %v2386
        %3384 = vmatpush.bf16.msra.mxu0 %v2370
        %3385 = vmatpush.bf16.msra.mxu0 %v2354
        %3386 = vmatpush.bf16.msra.mxu0 %v2338
        %3387 = vmatpush.bf16.msra.mxu0 %v2322
        %3388 = vmatpush.bf16.msra.mxu0 %v2306
        %3389 = vmatmul.bf16.gmra.mxu0 %v761
        %v3390 = vpop.f32.mrf.mxu0
        %v3391 = vadd.f32 0.0, %v3390
        %v3392 = vpop.f32.mrf.mxu0
        %3393 = vdwg.mxu0
        %3394 = vmatpush.bf16.msra.mxu0 %v2546
        %3395 = vmatpush.bf16.msra.mxu0 %v2530
        %3396 = vmatpush.bf16.msra.mxu0 %v2514
        %3397 = vmatpush.bf16.msra.mxu0 %v2498
        %3398 = vmatpush.bf16.msra.mxu0 %v2482
        %3399 = vmatpush.bf16.msra.mxu0 %v2466
        %3400 = vmatpush.bf16.msra.mxu0 %v2450
        %3401 = vmatpush.bf16.msra.mxu0 %v2434
        %3402 = vmatmul.bf16.gmra.mxu0 %v762
        %v3403 = vpop.f32.mrf.mxu0
        %v3404 = vadd.f32 %v3391, %v3403
        %v3405 = vpop.f32.mrf.mxu0
        %3406 = vdwg.mxu0
        %3407 = vmatpush.bf16.msra.mxu0 %v2674
        %3408 = vmatpush.bf16.msra.mxu0 %v2658
        %3409 = vmatpush.bf16.msra.mxu0 %v2642
        %3410 = vmatpush.bf16.msra.mxu0 %v2626
        %3411 = vmatpush.bf16.msra.mxu0 %v2610
        %3412 = vmatpush.bf16.msra.mxu0 %v2594
        %3413 = vmatpush.bf16.msra.mxu0 %v2578
        %3414 = vmatpush.bf16.msra.mxu0 %v2562
        %3415 = vmatmul.bf16.gmra.mxu0 %v763
        %v3416 = vpop.f32.mrf.mxu0
        %v3417 = vadd.f32 %v3404, %v3416
        %v3418 = vpop.f32.mrf.mxu0
        %3419 = vdwg.mxu0
        %3420 = vmatpush.bf16.msra.mxu0 %v2802
        %3421 = vmatpush.bf16.msra.mxu0 %v2786
        %3422 = vmatpush.bf16.msra.mxu0 %v2770
        %3423 = vmatpush.bf16.msra.mxu0 %v2754
        %3424 = vmatpush.bf16.msra.mxu0 %v2738
        %3425 = vmatpush.bf16.msra.mxu0 %v2722
        %3426 = vmatpush.bf16.msra.mxu0 %v2706
        %3427 = vmatpush.bf16.msra.mxu0 %v2690
        %3428 = vmatmul.bf16.gmra.mxu0 %v764
        %v3429 = vpop.f32.mrf.mxu0
        %v3430 = vadd.f32 %v3417, %v3429
        %v3431 = vpop.f32.mrf.mxu0
        %3432 = vdwg.mxu0
        %3433 = vmatpush.bf16.msra.mxu0 %v2419
        %3434 = vmatpush.bf16.msra.mxu0 %v2403
        %3435 = vmatpush.bf16.msra.mxu0 %v2387
        %3436 = vmatpush.bf16.msra.mxu0 %v2371
        %3437 = vmatpush.bf16.msra.mxu0 %v2355
        %3438 = vmatpush.bf16.msra.mxu0 %v2339
        %3439 = vmatpush.bf16.msra.mxu0 %v2323
        %3440 = vmatpush.bf16.msra.mxu0 %v2307
        %3441 = vmatmul.bf16.gmra.mxu0 %v761
        %v3442 = vpop.f32.mrf.mxu0
        %v3443 = vadd.f32 0.0, %v3442
        %v3444 = vpop.f32.mrf.mxu0
        %3445 = vdwg.mxu0
        %3446 = vmatpush.bf16.msra.mxu0 %v2547
        %3447 = vmatpush.bf16.msra.mxu0 %v2531
        %3448 = vmatpush.bf16.msra.mxu0 %v2515
        %3449 = vmatpush.bf16.msra.mxu0 %v2499
        %3450 = vmatpush.bf16.msra.mxu0 %v2483
        %3451 = vmatpush.bf16.msra.mxu0 %v2467
        %3452 = vmatpush.bf16.msra.mxu0 %v2451
        %3453 = vmatpush.bf16.msra.mxu0 %v2435
        %3454 = vmatmul.bf16.gmra.mxu0 %v762
        %v3455 = vpop.f32.mrf.mxu0
        %v3456 = vadd.f32 %v3443, %v3455
        %v3457 = vpop.f32.mrf.mxu0
        %3458 = vdwg.mxu0
        %3459 = vmatpush.bf16.msra.mxu0 %v2675
        %3460 = vmatpush.bf16.msra.mxu0 %v2659
        %3461 = vmatpush.bf16.msra.mxu0 %v2643
        %3462 = vmatpush.bf16.msra.mxu0 %v2627
        %3463 = vmatpush.bf16.msra.mxu0 %v2611
        %3464 = vmatpush.bf16.msra.mxu0 %v2595
        %3465 = vmatpush.bf16.msra.mxu0 %v2579
        %3466 = vmatpush.bf16.msra.mxu0 %v2563
        %3467 = vmatmul.bf16.gmra.mxu0 %v763
        %v3468 = vpop.f32.mrf.mxu0
        %v3469 = vadd.f32 %v3456, %v3468
        %v3470 = vpop.f32.mrf.mxu0
        %3471 = vdwg.mxu0
        %3472 = vmatpush.bf16.msra.mxu0 %v2803
        %3473 = vmatpush.bf16.msra.mxu0 %v2787
        %3474 = vmatpush.bf16.msra.mxu0 %v2771
        %3475 = vmatpush.bf16.msra.mxu0 %v2755
        %3476 = vmatpush.bf16.msra.mxu0 %v2739
        %3477 = vmatpush.bf16.msra.mxu0 %v2723
        %3478 = vmatpush.bf16.msra.mxu0 %v2707
        %3479 = vmatpush.bf16.msra.mxu0 %v2691
        %3480 = vmatmul.bf16.gmra.mxu0 %v764
        %v3481 = vpop.f32.mrf.mxu0
        %v3482 = vadd.f32 %v3469, %v3481
        %v3483 = vpop.f32.mrf.mxu0
        %3484 = vdwg.mxu0
        %3485 = vmatpush.bf16.msra.mxu0 %v2420
        %3486 = vmatpush.bf16.msra.mxu0 %v2404
        %3487 = vmatpush.bf16.msra.mxu0 %v2388
        %3488 = vmatpush.bf16.msra.mxu0 %v2372
        %3489 = vmatpush.bf16.msra.mxu0 %v2356
        %3490 = vmatpush.bf16.msra.mxu0 %v2340
        %3491 = vmatpush.bf16.msra.mxu0 %v2324
        %3492 = vmatpush.bf16.msra.mxu0 %v2308
        %3493 = vmatmul.bf16.gmra.mxu0 %v761
        %v3494 = vpop.f32.mrf.mxu0
        %v3495 = vadd.f32 0.0, %v3494
        %v3496 = vpop.f32.mrf.mxu0
        %3497 = vdwg.mxu0
        %3498 = vmatpush.bf16.msra.mxu0 %v2548
        %3499 = vmatpush.bf16.msra.mxu0 %v2532
        %3500 = vmatpush.bf16.msra.mxu0 %v2516
        %3501 = vmatpush.bf16.msra.mxu0 %v2500
        %3502 = vmatpush.bf16.msra.mxu0 %v2484
        %3503 = vmatpush.bf16.msra.mxu0 %v2468
        %3504 = vmatpush.bf16.msra.mxu0 %v2452
        %3505 = vmatpush.bf16.msra.mxu0 %v2436
        %3506 = vmatmul.bf16.gmra.mxu0 %v762
        %v3507 = vpop.f32.mrf.mxu0
        %v3508 = vadd.f32 %v3495, %v3507
        %v3509 = vpop.f32.mrf.mxu0
        %3510 = vdwg.mxu0
        %3511 = vmatpush.bf16.msra.mxu0 %v2676
        %3512 = vmatpush.bf16.msra.mxu0 %v2660
        %3513 = vmatpush.bf16.msra.mxu0 %v2644
        %3514 = vmatpush.bf16.msra.mxu0 %v2628
        %3515 = vmatpush.bf16.msra.mxu0 %v2612
        %3516 = vmatpush.bf16.msra.mxu0 %v2596
        %3517 = vmatpush.bf16.msra.mxu0 %v2580
        %3518 = vmatpush.bf16.msra.mxu0 %v2564
        %3519 = vmatmul.bf16.gmra.mxu0 %v763
        %v3520 = vpop.f32.mrf.mxu0
        %v3521 = vadd.f32 %v3508, %v3520
        %v3522 = vpop.f32.mrf.mxu0
        %3523 = vdwg.mxu0
        %3524 = vmatpush.bf16.msra.mxu0 %v2804
        %3525 = vmatpush.bf16.msra.mxu0 %v2788
        %3526 = vmatpush.bf16.msra.mxu0 %v2772
        %3527 = vmatpush.bf16.msra.mxu0 %v2756
        %3528 = vmatpush.bf16.msra.mxu0 %v2740
        %3529 = vmatpush.bf16.msra.mxu0 %v2724
        %3530 = vmatpush.bf16.msra.mxu0 %v2708
        %3531 = vmatpush.bf16.msra.mxu0 %v2692
        %3532 = vmatmul.bf16.gmra.mxu0 %v764
        %v3533 = vpop.f32.mrf.mxu0
        %v3534 = vadd.f32 %v3521, %v3533
        %v3535 = vpop.f32.mrf.mxu0
        %3536 = vdwg.mxu0
        %3537 = vmatpush.bf16.msra.mxu0 %v2421
        %3538 = vmatpush.bf16.msra.mxu0 %v2405
        %3539 = vmatpush.bf16.msra.mxu0 %v2389
        %3540 = vmatpush.bf16.msra.mxu0 %v2373
        %3541 = vmatpush.bf16.msra.mxu0 %v2357
        %3542 = vmatpush.bf16.msra.mxu0 %v2341
        %3543 = vmatpush.bf16.msra.mxu0 %v2325
        %3544 = vmatpush.bf16.msra.mxu0 %v2309
        %3545 = vmatmul.bf16.gmra.mxu0 %v761
        %v3546 = vpop.f32.mrf.mxu0
        %v3547 = vadd.f32 0.0, %v3546
        %v3548 = vpop.f32.mrf.mxu0
        %3549 = vdwg.mxu0
        %3550 = vmatpush.bf16.msra.mxu0 %v2549
        %3551 = vmatpush.bf16.msra.mxu0 %v2533
        %3552 = vmatpush.bf16.msra.mxu0 %v2517
        %3553 = vmatpush.bf16.msra.mxu0 %v2501
        %3554 = vmatpush.bf16.msra.mxu0 %v2485
        %3555 = vmatpush.bf16.msra.mxu0 %v2469
        %3556 = vmatpush.bf16.msra.mxu0 %v2453
        %3557 = vmatpush.bf16.msra.mxu0 %v2437
        %3558 = vmatmul.bf16.gmra.mxu0 %v762
        %v3559 = vpop.f32.mrf.mxu0
        %v3560 = vadd.f32 %v3547, %v3559
        %v3561 = vpop.f32.mrf.mxu0
        %3562 = vdwg.mxu0
        %3563 = vmatpush.bf16.msra.mxu0 %v2677
        %3564 = vmatpush.bf16.msra.mxu0 %v2661
        %3565 = vmatpush.bf16.msra.mxu0 %v2645
        %3566 = vmatpush.bf16.msra.mxu0 %v2629
        %3567 = vmatpush.bf16.msra.mxu0 %v2613
        %3568 = vmatpush.bf16.msra.mxu0 %v2597
        %3569 = vmatpush.bf16.msra.mxu0 %v2581
        %3570 = vmatpush.bf16.msra.mxu0 %v2565
        %3571 = vmatmul.bf16.gmra.mxu0 %v763
        %v3572 = vpop.f32.mrf.mxu0
        %v3573 = vadd.f32 %v3560, %v3572
        %v3574 = vpop.f32.mrf.mxu0
        %3575 = vdwg.mxu0
        %3576 = vmatpush.bf16.msra.mxu0 %v2805
        %3577 = vmatpush.bf16.msra.mxu0 %v2789
        %3578 = vmatpush.bf16.msra.mxu0 %v2773
        %3579 = vmatpush.bf16.msra.mxu0 %v2757
        %3580 = vmatpush.bf16.msra.mxu0 %v2741
        %3581 = vmatpush.bf16.msra.mxu0 %v2725
        %3582 = vmatpush.bf16.msra.mxu0 %v2709
        %3583 = vmatpush.bf16.msra.mxu0 %v2693
        %3584 = vmatmul.bf16.gmra.mxu0 %v764
        %v3585 = vpop.f32.mrf.mxu0
        %v3586 = vadd.f32 %v3573, %v3585
        %v3587 = vpop.f32.mrf.mxu0
        %3588 = vdwg.mxu0
        %3589 = vmatpush.bf16.msra.mxu0 %v2422
        %3590 = vmatpush.bf16.msra.mxu0 %v2406
        %3591 = vmatpush.bf16.msra.mxu0 %v2390
        %3592 = vmatpush.bf16.msra.mxu0 %v2374
        %3593 = vmatpush.bf16.msra.mxu0 %v2358
        %3594 = vmatpush.bf16.msra.mxu0 %v2342
        %3595 = vmatpush.bf16.msra.mxu0 %v2326
        %3596 = vmatpush.bf16.msra.mxu0 %v2310
        %3597 = vmatmul.bf16.gmra.mxu0 %v761
        %v3598 = vpop.f32.mrf.mxu0
        %v3599 = vadd.f32 0.0, %v3598
        %v3600 = vpop.f32.mrf.mxu0
        %3601 = vdwg.mxu0
        %3602 = vmatpush.bf16.msra.mxu0 %v2550
        %3603 = vmatpush.bf16.msra.mxu0 %v2534
        %3604 = vmatpush.bf16.msra.mxu0 %v2518
        %3605 = vmatpush.bf16.msra.mxu0 %v2502
        %3606 = vmatpush.bf16.msra.mxu0 %v2486
        %3607 = vmatpush.bf16.msra.mxu0 %v2470
        %3608 = vmatpush.bf16.msra.mxu0 %v2454
        %3609 = vmatpush.bf16.msra.mxu0 %v2438
        %3610 = vmatmul.bf16.gmra.mxu0 %v762
        %v3611 = vpop.f32.mrf.mxu0
        %v3612 = vadd.f32 %v3599, %v3611
        %v3613 = vpop.f32.mrf.mxu0
        %3614 = vdwg.mxu0
        %3615 = vmatpush.bf16.msra.mxu0 %v2678
        %3616 = vmatpush.bf16.msra.mxu0 %v2662
        %3617 = vmatpush.bf16.msra.mxu0 %v2646
        %3618 = vmatpush.bf16.msra.mxu0 %v2630
        %3619 = vmatpush.bf16.msra.mxu0 %v2614
        %3620 = vmatpush.bf16.msra.mxu0 %v2598
        %3621 = vmatpush.bf16.msra.mxu0 %v2582
        %3622 = vmatpush.bf16.msra.mxu0 %v2566
        %3623 = vmatmul.bf16.gmra.mxu0 %v763
        %v3624 = vpop.f32.mrf.mxu0
        %v3625 = vadd.f32 %v3612, %v3624
        %v3626 = vpop.f32.mrf.mxu0
        %3627 = vdwg.mxu0
        %3628 = vmatpush.bf16.msra.mxu0 %v2806
        %3629 = vmatpush.bf16.msra.mxu0 %v2790
        %3630 = vmatpush.bf16.msra.mxu0 %v2774
        %3631 = vmatpush.bf16.msra.mxu0 %v2758
        %3632 = vmatpush.bf16.msra.mxu0 %v2742
        %3633 = vmatpush.bf16.msra.mxu0 %v2726
        %3634 = vmatpush.bf16.msra.mxu0 %v2710
        %3635 = vmatpush.bf16.msra.mxu0 %v2694
        %3636 = vmatmul.bf16.gmra.mxu0 %v764
        %v3637 = vpop.f32.mrf.mxu0
        %v3638 = vadd.f32 %v3625, %v3637
        %v3639 = vpop.f32.mrf.mxu0
        %3640 = vdwg.mxu0
        %3641 = vmatpush.bf16.msra.mxu0 %v2423
        %3642 = vmatpush.bf16.msra.mxu0 %v2407
        %3643 = vmatpush.bf16.msra.mxu0 %v2391
        %3644 = vmatpush.bf16.msra.mxu0 %v2375
        %3645 = vmatpush.bf16.msra.mxu0 %v2359
        %3646 = vmatpush.bf16.msra.mxu0 %v2343
        %3647 = vmatpush.bf16.msra.mxu0 %v2327
        %3648 = vmatpush.bf16.msra.mxu0 %v2311
        %3649 = vmatmul.bf16.gmra.mxu0 %v761
        %v3650 = vpop.f32.mrf.mxu0
        %v3651 = vadd.f32 0.0, %v3650
        %v3652 = vpop.f32.mrf.mxu0
        %3653 = vdwg.mxu0
        %3654 = vmatpush.bf16.msra.mxu0 %v2551
        %3655 = vmatpush.bf16.msra.mxu0 %v2535
        %3656 = vmatpush.bf16.msra.mxu0 %v2519
        %3657 = vmatpush.bf16.msra.mxu0 %v2503
        %3658 = vmatpush.bf16.msra.mxu0 %v2487
        %3659 = vmatpush.bf16.msra.mxu0 %v2471
        %3660 = vmatpush.bf16.msra.mxu0 %v2455
        %3661 = vmatpush.bf16.msra.mxu0 %v2439
        %3662 = vmatmul.bf16.gmra.mxu0 %v762
        %v3663 = vpop.f32.mrf.mxu0
        %v3664 = vadd.f32 %v3651, %v3663
        %v3665 = vpop.f32.mrf.mxu0
        %3666 = vdwg.mxu0
        %3667 = vmatpush.bf16.msra.mxu0 %v2679
        %3668 = vmatpush.bf16.msra.mxu0 %v2663
        %3669 = vmatpush.bf16.msra.mxu0 %v2647
        %3670 = vmatpush.bf16.msra.mxu0 %v2631
        %3671 = vmatpush.bf16.msra.mxu0 %v2615
        %3672 = vmatpush.bf16.msra.mxu0 %v2599
        %3673 = vmatpush.bf16.msra.mxu0 %v2583
        %3674 = vmatpush.bf16.msra.mxu0 %v2567
        %3675 = vmatmul.bf16.gmra.mxu0 %v763
        %v3676 = vpop.f32.mrf.mxu0
        %v3677 = vadd.f32 %v3664, %v3676
        %v3678 = vpop.f32.mrf.mxu0
        %3679 = vdwg.mxu0
        %3680 = vmatpush.bf16.msra.mxu0 %v2807
        %3681 = vmatpush.bf16.msra.mxu0 %v2791
        %3682 = vmatpush.bf16.msra.mxu0 %v2775
        %3683 = vmatpush.bf16.msra.mxu0 %v2759
        %3684 = vmatpush.bf16.msra.mxu0 %v2743
        %3685 = vmatpush.bf16.msra.mxu0 %v2727
        %3686 = vmatpush.bf16.msra.mxu0 %v2711
        %3687 = vmatpush.bf16.msra.mxu0 %v2695
        %3688 = vmatmul.bf16.gmra.mxu0 %v764
        %v3689 = vpop.f32.mrf.mxu0
        %v3690 = vadd.f32 %v3677, %v3689
        %v3691 = vpop.f32.mrf.mxu0
        %3692 = vdwg.mxu0
        %3693 = vmatpush.bf16.msra.mxu0 %v2424
        %3694 = vmatpush.bf16.msra.mxu0 %v2408
        %3695 = vmatpush.bf16.msra.mxu0 %v2392
        %3696 = vmatpush.bf16.msra.mxu0 %v2376
        %3697 = vmatpush.bf16.msra.mxu0 %v2360
        %3698 = vmatpush.bf16.msra.mxu0 %v2344
        %3699 = vmatpush.bf16.msra.mxu0 %v2328
        %3700 = vmatpush.bf16.msra.mxu0 %v2312
        %3701 = vmatmul.bf16.gmra.mxu0 %v761
        %v3702 = vpop.f32.mrf.mxu0
        %v3703 = vadd.f32 0.0, %v3702
        %v3704 = vpop.f32.mrf.mxu0
        %3705 = vdwg.mxu0
        %3706 = vmatpush.bf16.msra.mxu0 %v2552
        %3707 = vmatpush.bf16.msra.mxu0 %v2536
        %3708 = vmatpush.bf16.msra.mxu0 %v2520
        %3709 = vmatpush.bf16.msra.mxu0 %v2504
        %3710 = vmatpush.bf16.msra.mxu0 %v2488
        %3711 = vmatpush.bf16.msra.mxu0 %v2472
        %3712 = vmatpush.bf16.msra.mxu0 %v2456
        %3713 = vmatpush.bf16.msra.mxu0 %v2440
        %3714 = vmatmul.bf16.gmra.mxu0 %v762
        %v3715 = vpop.f32.mrf.mxu0
        %v3716 = vadd.f32 %v3703, %v3715
        %v3717 = vpop.f32.mrf.mxu0
        %3718 = vdwg.mxu0
        %3719 = vmatpush.bf16.msra.mxu0 %v2680
        %3720 = vmatpush.bf16.msra.mxu0 %v2664
        %3721 = vmatpush.bf16.msra.mxu0 %v2648
        %3722 = vmatpush.bf16.msra.mxu0 %v2632
        %3723 = vmatpush.bf16.msra.mxu0 %v2616
        %3724 = vmatpush.bf16.msra.mxu0 %v2600
        %3725 = vmatpush.bf16.msra.mxu0 %v2584
        %3726 = vmatpush.bf16.msra.mxu0 %v2568
        %3727 = vmatmul.bf16.gmra.mxu0 %v763
        %v3728 = vpop.f32.mrf.mxu0
        %v3729 = vadd.f32 %v3716, %v3728
        %v3730 = vpop.f32.mrf.mxu0
        %3731 = vdwg.mxu0
        %3732 = vmatpush.bf16.msra.mxu0 %v2808
        %3733 = vmatpush.bf16.msra.mxu0 %v2792
        %3734 = vmatpush.bf16.msra.mxu0 %v2776
        %3735 = vmatpush.bf16.msra.mxu0 %v2760
        %3736 = vmatpush.bf16.msra.mxu0 %v2744
        %3737 = vmatpush.bf16.msra.mxu0 %v2728
        %3738 = vmatpush.bf16.msra.mxu0 %v2712
        %3739 = vmatpush.bf16.msra.mxu0 %v2696
        %3740 = vmatmul.bf16.gmra.mxu0 %v764
        %v3741 = vpop.f32.mrf.mxu0
        %v3742 = vadd.f32 %v3729, %v3741
        %v3743 = vpop.f32.mrf.mxu0
        %3744 = vdwg.mxu0
        %3745 = vmatpush.bf16.msra.mxu0 %v2425
        %3746 = vmatpush.bf16.msra.mxu0 %v2409
        %3747 = vmatpush.bf16.msra.mxu0 %v2393
        %3748 = vmatpush.bf16.msra.mxu0 %v2377
        %3749 = vmatpush.bf16.msra.mxu0 %v2361
        %3750 = vmatpush.bf16.msra.mxu0 %v2345
        %3751 = vmatpush.bf16.msra.mxu0 %v2329
        %3752 = vmatpush.bf16.msra.mxu0 %v2313
        %3753 = vmatmul.bf16.gmra.mxu0 %v761
        %v3754 = vpop.f32.mrf.mxu0
        %v3755 = vadd.f32 0.0, %v3754
        %v3756 = vpop.f32.mrf.mxu0
        %3757 = vdwg.mxu0
        %3758 = vmatpush.bf16.msra.mxu0 %v2553
        %3759 = vmatpush.bf16.msra.mxu0 %v2537
        %3760 = vmatpush.bf16.msra.mxu0 %v2521
        %3761 = vmatpush.bf16.msra.mxu0 %v2505
        %3762 = vmatpush.bf16.msra.mxu0 %v2489
        %3763 = vmatpush.bf16.msra.mxu0 %v2473
        %3764 = vmatpush.bf16.msra.mxu0 %v2457
        %3765 = vmatpush.bf16.msra.mxu0 %v2441
        %3766 = vmatmul.bf16.gmra.mxu0 %v762
        %v3767 = vpop.f32.mrf.mxu0
        %v3768 = vadd.f32 %v3755, %v3767
        %v3769 = vpop.f32.mrf.mxu0
        %3770 = vdwg.mxu0
        %3771 = vmatpush.bf16.msra.mxu0 %v2681
        %3772 = vmatpush.bf16.msra.mxu0 %v2665
        %3773 = vmatpush.bf16.msra.mxu0 %v2649
        %3774 = vmatpush.bf16.msra.mxu0 %v2633
        %3775 = vmatpush.bf16.msra.mxu0 %v2617
        %3776 = vmatpush.bf16.msra.mxu0 %v2601
        %3777 = vmatpush.bf16.msra.mxu0 %v2585
        %3778 = vmatpush.bf16.msra.mxu0 %v2569
        %3779 = vmatmul.bf16.gmra.mxu0 %v763
        %v3780 = vpop.f32.mrf.mxu0
        %v3781 = vadd.f32 %v3768, %v3780
        %v3782 = vpop.f32.mrf.mxu0
        %3783 = vdwg.mxu0
        %3784 = vmatpush.bf16.msra.mxu0 %v2809
        %3785 = vmatpush.bf16.msra.mxu0 %v2793
        %3786 = vmatpush.bf16.msra.mxu0 %v2777
        %3787 = vmatpush.bf16.msra.mxu0 %v2761
        %3788 = vmatpush.bf16.msra.mxu0 %v2745
        %3789 = vmatpush.bf16.msra.mxu0 %v2729
        %3790 = vmatpush.bf16.msra.mxu0 %v2713
        %3791 = vmatpush.bf16.msra.mxu0 %v2697
        %3792 = vmatmul.bf16.gmra.mxu0 %v764
        %v3793 = vpop.f32.mrf.mxu0
        %v3794 = vadd.f32 %v3781, %v3793
        %v3795 = vpop.f32.mrf.mxu0
        %3796 = vdwg.mxu0
        %3797 = vmatpush.bf16.msra.mxu0 %v2426
        %3798 = vmatpush.bf16.msra.mxu0 %v2410
        %3799 = vmatpush.bf16.msra.mxu0 %v2394
        %3800 = vmatpush.bf16.msra.mxu0 %v2378
        %3801 = vmatpush.bf16.msra.mxu0 %v2362
        %3802 = vmatpush.bf16.msra.mxu0 %v2346
        %3803 = vmatpush.bf16.msra.mxu0 %v2330
        %3804 = vmatpush.bf16.msra.mxu0 %v2314
        %3805 = vmatmul.bf16.gmra.mxu0 %v761
        %v3806 = vpop.f32.mrf.mxu0
        %v3807 = vadd.f32 0.0, %v3806
        %v3808 = vpop.f32.mrf.mxu0
        %3809 = vdwg.mxu0
        %3810 = vmatpush.bf16.msra.mxu0 %v2554
        %3811 = vmatpush.bf16.msra.mxu0 %v2538
        %3812 = vmatpush.bf16.msra.mxu0 %v2522
        %3813 = vmatpush.bf16.msra.mxu0 %v2506
        %3814 = vmatpush.bf16.msra.mxu0 %v2490
        %3815 = vmatpush.bf16.msra.mxu0 %v2474
        %3816 = vmatpush.bf16.msra.mxu0 %v2458
        %3817 = vmatpush.bf16.msra.mxu0 %v2442
        %3818 = vmatmul.bf16.gmra.mxu0 %v762
        %v3819 = vpop.f32.mrf.mxu0
        %v3820 = vadd.f32 %v3807, %v3819
        %v3821 = vpop.f32.mrf.mxu0
        %3822 = vdwg.mxu0
        %3823 = vmatpush.bf16.msra.mxu0 %v2682
        %3824 = vmatpush.bf16.msra.mxu0 %v2666
        %3825 = vmatpush.bf16.msra.mxu0 %v2650
        %3826 = vmatpush.bf16.msra.mxu0 %v2634
        %3827 = vmatpush.bf16.msra.mxu0 %v2618
        %3828 = vmatpush.bf16.msra.mxu0 %v2602
        %3829 = vmatpush.bf16.msra.mxu0 %v2586
        %3830 = vmatpush.bf16.msra.mxu0 %v2570
        %3831 = vmatmul.bf16.gmra.mxu0 %v763
        %v3832 = vpop.f32.mrf.mxu0
        %v3833 = vadd.f32 %v3820, %v3832
        %v3834 = vpop.f32.mrf.mxu0
        %3835 = vdwg.mxu0
        %3836 = vmatpush.bf16.msra.mxu0 %v2810
        %3837 = vmatpush.bf16.msra.mxu0 %v2794
        %3838 = vmatpush.bf16.msra.mxu0 %v2778
        %3839 = vmatpush.bf16.msra.mxu0 %v2762
        %3840 = vmatpush.bf16.msra.mxu0 %v2746
        %3841 = vmatpush.bf16.msra.mxu0 %v2730
        %3842 = vmatpush.bf16.msra.mxu0 %v2714
        %3843 = vmatpush.bf16.msra.mxu0 %v2698
        %3844 = vmatmul.bf16.gmra.mxu0 %v764
        %v3845 = vpop.f32.mrf.mxu0
        %v3846 = vadd.f32 %v3833, %v3845
        %v3847 = vpop.f32.mrf.mxu0
        %3848 = vdwg.mxu0
        %3849 = vmatpush.bf16.msra.mxu0 %v2427
        %3850 = vmatpush.bf16.msra.mxu0 %v2411
        %3851 = vmatpush.bf16.msra.mxu0 %v2395
        %3852 = vmatpush.bf16.msra.mxu0 %v2379
        %3853 = vmatpush.bf16.msra.mxu0 %v2363
        %3854 = vmatpush.bf16.msra.mxu0 %v2347
        %3855 = vmatpush.bf16.msra.mxu0 %v2331
        %3856 = vmatpush.bf16.msra.mxu0 %v2315
        %3857 = vmatmul.bf16.gmra.mxu0 %v761
        %v3858 = vpop.f32.mrf.mxu0
        %v3859 = vadd.f32 0.0, %v3858
        %v3860 = vpop.f32.mrf.mxu0
        %3861 = vdwg.mxu0
        %3862 = vmatpush.bf16.msra.mxu0 %v2555
        %3863 = vmatpush.bf16.msra.mxu0 %v2539
        %3864 = vmatpush.bf16.msra.mxu0 %v2523
        %3865 = vmatpush.bf16.msra.mxu0 %v2507
        %3866 = vmatpush.bf16.msra.mxu0 %v2491
        %3867 = vmatpush.bf16.msra.mxu0 %v2475
        %3868 = vmatpush.bf16.msra.mxu0 %v2459
        %3869 = vmatpush.bf16.msra.mxu0 %v2443
        %3870 = vmatmul.bf16.gmra.mxu0 %v762
        %v3871 = vpop.f32.mrf.mxu0
        %v3872 = vadd.f32 %v3859, %v3871
        %v3873 = vpop.f32.mrf.mxu0
        %3874 = vdwg.mxu0
        %3875 = vmatpush.bf16.msra.mxu0 %v2683
        %3876 = vmatpush.bf16.msra.mxu0 %v2667
        %3877 = vmatpush.bf16.msra.mxu0 %v2651
        %3878 = vmatpush.bf16.msra.mxu0 %v2635
        %3879 = vmatpush.bf16.msra.mxu0 %v2619
        %3880 = vmatpush.bf16.msra.mxu0 %v2603
        %3881 = vmatpush.bf16.msra.mxu0 %v2587
        %3882 = vmatpush.bf16.msra.mxu0 %v2571
        %3883 = vmatmul.bf16.gmra.mxu0 %v763
        %v3884 = vpop.f32.mrf.mxu0
        %v3885 = vadd.f32 %v3872, %v3884
        %v3886 = vpop.f32.mrf.mxu0
        %3887 = vdwg.mxu0
        %3888 = vmatpush.bf16.msra.mxu0 %v2811
        %3889 = vmatpush.bf16.msra.mxu0 %v2795
        %3890 = vmatpush.bf16.msra.mxu0 %v2779
        %3891 = vmatpush.bf16.msra.mxu0 %v2763
        %3892 = vmatpush.bf16.msra.mxu0 %v2747
        %3893 = vmatpush.bf16.msra.mxu0 %v2731
        %3894 = vmatpush.bf16.msra.mxu0 %v2715
        %3895 = vmatpush.bf16.msra.mxu0 %v2699
        %3896 = vmatmul.bf16.gmra.mxu0 %v764
        %v3897 = vpop.f32.mrf.mxu0
        %v3898 = vadd.f32 %v3885, %v3897
        %v3899 = vpop.f32.mrf.mxu0
        %3900 = vdwg.mxu0
        %3901 = vmatpush.bf16.msra.mxu0 %v2428
        %3902 = vmatpush.bf16.msra.mxu0 %v2412
        %3903 = vmatpush.bf16.msra.mxu0 %v2396
        %3904 = vmatpush.bf16.msra.mxu0 %v2380
        %3905 = vmatpush.bf16.msra.mxu0 %v2364
        %3906 = vmatpush.bf16.msra.mxu0 %v2348
        %3907 = vmatpush.bf16.msra.mxu0 %v2332
        %3908 = vmatpush.bf16.msra.mxu0 %v2316
        %3909 = vmatmul.bf16.gmra.mxu0 %v761
        %v3910 = vpop.f32.mrf.mxu0
        %v3911 = vadd.f32 0.0, %v3910
        %v3912 = vpop.f32.mrf.mxu0
        %3913 = vdwg.mxu0
        %3914 = vmatpush.bf16.msra.mxu0 %v2556
        %3915 = vmatpush.bf16.msra.mxu0 %v2540
        %3916 = vmatpush.bf16.msra.mxu0 %v2524
        %3917 = vmatpush.bf16.msra.mxu0 %v2508
        %3918 = vmatpush.bf16.msra.mxu0 %v2492
        %3919 = vmatpush.bf16.msra.mxu0 %v2476
        %3920 = vmatpush.bf16.msra.mxu0 %v2460
        %3921 = vmatpush.bf16.msra.mxu0 %v2444
        %3922 = vmatmul.bf16.gmra.mxu0 %v762
        %v3923 = vpop.f32.mrf.mxu0
        %v3924 = vadd.f32 %v3911, %v3923
        %v3925 = vpop.f32.mrf.mxu0
        %3926 = vdwg.mxu0
        %3927 = vmatpush.bf16.msra.mxu0 %v2684
        %3928 = vmatpush.bf16.msra.mxu0 %v2668
        %3929 = vmatpush.bf16.msra.mxu0 %v2652
        %3930 = vmatpush.bf16.msra.mxu0 %v2636
        %3931 = vmatpush.bf16.msra.mxu0 %v2620
        %3932 = vmatpush.bf16.msra.mxu0 %v2604
        %3933 = vmatpush.bf16.msra.mxu0 %v2588
        %3934 = vmatpush.bf16.msra.mxu0 %v2572
        %3935 = vmatmul.bf16.gmra.mxu0 %v763
        %v3936 = vpop.f32.mrf.mxu0
        %v3937 = vadd.f32 %v3924, %v3936
        %v3938 = vpop.f32.mrf.mxu0
        %3939 = vdwg.mxu0
        %3940 = vmatpush.bf16.msra.mxu0 %v2812
        %3941 = vmatpush.bf16.msra.mxu0 %v2796
        %3942 = vmatpush.bf16.msra.mxu0 %v2780
        %3943 = vmatpush.bf16.msra.mxu0 %v2764
        %3944 = vmatpush.bf16.msra.mxu0 %v2748
        %3945 = vmatpush.bf16.msra.mxu0 %v2732
        %3946 = vmatpush.bf16.msra.mxu0 %v2716
        %3947 = vmatpush.bf16.msra.mxu0 %v2700
        %3948 = vmatmul.bf16.gmra.mxu0 %v764
        %v3949 = vpop.f32.mrf.mxu0
        %v3950 = vadd.f32 %v3937, %v3949
        %v3951 = vpop.f32.mrf.mxu0
        %3952 = vdwg.mxu0
        %3953 = vmatpush.bf16.msra.mxu0 %v2429
        %3954 = vmatpush.bf16.msra.mxu0 %v2413
        %3955 = vmatpush.bf16.msra.mxu0 %v2397
        %3956 = vmatpush.bf16.msra.mxu0 %v2381
        %3957 = vmatpush.bf16.msra.mxu0 %v2365
        %3958 = vmatpush.bf16.msra.mxu0 %v2349
        %3959 = vmatpush.bf16.msra.mxu0 %v2333
        %3960 = vmatpush.bf16.msra.mxu0 %v2317
        %3961 = vmatmul.bf16.gmra.mxu0 %v761
        %v3962 = vpop.f32.mrf.mxu0
        %v3963 = vadd.f32 0.0, %v3962
        %v3964 = vpop.f32.mrf.mxu0
        %3965 = vdwg.mxu0
        %3966 = vmatpush.bf16.msra.mxu0 %v2557
        %3967 = vmatpush.bf16.msra.mxu0 %v2541
        %3968 = vmatpush.bf16.msra.mxu0 %v2525
        %3969 = vmatpush.bf16.msra.mxu0 %v2509
        %3970 = vmatpush.bf16.msra.mxu0 %v2493
        %3971 = vmatpush.bf16.msra.mxu0 %v2477
        %3972 = vmatpush.bf16.msra.mxu0 %v2461
        %3973 = vmatpush.bf16.msra.mxu0 %v2445
        %3974 = vmatmul.bf16.gmra.mxu0 %v762
        %v3975 = vpop.f32.mrf.mxu0
        %v3976 = vadd.f32 %v3963, %v3975
        %v3977 = vpop.f32.mrf.mxu0
        %3978 = vdwg.mxu0
        %3979 = vmatpush.bf16.msra.mxu0 %v2685
        %3980 = vmatpush.bf16.msra.mxu0 %v2669
        %3981 = vmatpush.bf16.msra.mxu0 %v2653
        %3982 = vmatpush.bf16.msra.mxu0 %v2637
        %3983 = vmatpush.bf16.msra.mxu0 %v2621
        %3984 = vmatpush.bf16.msra.mxu0 %v2605
        %3985 = vmatpush.bf16.msra.mxu0 %v2589
        %3986 = vmatpush.bf16.msra.mxu0 %v2573
        %3987 = vmatmul.bf16.gmra.mxu0 %v763
        %v3988 = vpop.f32.mrf.mxu0
        %v3989 = vadd.f32 %v3976, %v3988
        %v3990 = vpop.f32.mrf.mxu0
        %3991 = vdwg.mxu0
        %3992 = vmatpush.bf16.msra.mxu0 %v2813
        %3993 = vmatpush.bf16.msra.mxu0 %v2797
        %3994 = vmatpush.bf16.msra.mxu0 %v2781
        %3995 = vmatpush.bf16.msra.mxu0 %v2765
        %3996 = vmatpush.bf16.msra.mxu0 %v2749
        %3997 = vmatpush.bf16.msra.mxu0 %v2733
        %3998 = vmatpush.bf16.msra.mxu0 %v2717
        %3999 = vmatpush.bf16.msra.mxu0 %v2701
        %4000 = vmatmul.bf16.gmra.mxu0 %v764
        %v4001 = vpop.f32.mrf.mxu0
        %v4002 = vadd.f32 %v3989, %v4001
        %v4003 = vpop.f32.mrf.mxu0
        %4004 = vdwg.mxu0
        %4005 = vmatpush.bf16.msra.mxu0 %v2430
        %4006 = vmatpush.bf16.msra.mxu0 %v2414
        %4007 = vmatpush.bf16.msra.mxu0 %v2398
        %4008 = vmatpush.bf16.msra.mxu0 %v2382
        %4009 = vmatpush.bf16.msra.mxu0 %v2366
        %4010 = vmatpush.bf16.msra.mxu0 %v2350
        %4011 = vmatpush.bf16.msra.mxu0 %v2334
        %4012 = vmatpush.bf16.msra.mxu0 %v2318
        %4013 = vmatmul.bf16.gmra.mxu0 %v761
        %v4014 = vpop.f32.mrf.mxu0
        %v4015 = vadd.f32 0.0, %v4014
        %v4016 = vpop.f32.mrf.mxu0
        %4017 = vdwg.mxu0
        %4018 = vmatpush.bf16.msra.mxu0 %v2558
        %4019 = vmatpush.bf16.msra.mxu0 %v2542
        %4020 = vmatpush.bf16.msra.mxu0 %v2526
        %4021 = vmatpush.bf16.msra.mxu0 %v2510
        %4022 = vmatpush.bf16.msra.mxu0 %v2494
        %4023 = vmatpush.bf16.msra.mxu0 %v2478
        %4024 = vmatpush.bf16.msra.mxu0 %v2462
        %4025 = vmatpush.bf16.msra.mxu0 %v2446
        %4026 = vmatmul.bf16.gmra.mxu0 %v762
        %v4027 = vpop.f32.mrf.mxu0
        %v4028 = vadd.f32 %v4015, %v4027
        %v4029 = vpop.f32.mrf.mxu0
        %4030 = vdwg.mxu0
        %4031 = vmatpush.bf16.msra.mxu0 %v2686
        %4032 = vmatpush.bf16.msra.mxu0 %v2670
        %4033 = vmatpush.bf16.msra.mxu0 %v2654
        %4034 = vmatpush.bf16.msra.mxu0 %v2638
        %4035 = vmatpush.bf16.msra.mxu0 %v2622
        %4036 = vmatpush.bf16.msra.mxu0 %v2606
        %4037 = vmatpush.bf16.msra.mxu0 %v2590
        %4038 = vmatpush.bf16.msra.mxu0 %v2574
        %4039 = vmatmul.bf16.gmra.mxu0 %v763
        %v4040 = vpop.f32.mrf.mxu0
        %v4041 = vadd.f32 %v4028, %v4040
        %v4042 = vpop.f32.mrf.mxu0
        %4043 = vdwg.mxu0
        %4044 = vmatpush.bf16.msra.mxu0 %v2814
        %4045 = vmatpush.bf16.msra.mxu0 %v2798
        %4046 = vmatpush.bf16.msra.mxu0 %v2782
        %4047 = vmatpush.bf16.msra.mxu0 %v2766
        %4048 = vmatpush.bf16.msra.mxu0 %v2750
        %4049 = vmatpush.bf16.msra.mxu0 %v2734
        %4050 = vmatpush.bf16.msra.mxu0 %v2718
        %4051 = vmatpush.bf16.msra.mxu0 %v2702
        %4052 = vmatmul.bf16.gmra.mxu0 %v764
        %v4053 = vpop.f32.mrf.mxu0
        %v4054 = vadd.f32 %v4041, %v4053
        %v4055 = vpop.f32.mrf.mxu0
        %4056 = vdwg.mxu0
        %4057 = vmatpush.bf16.msra.mxu0 %v2431
        %4058 = vmatpush.bf16.msra.mxu0 %v2415
        %4059 = vmatpush.bf16.msra.mxu0 %v2399
        %4060 = vmatpush.bf16.msra.mxu0 %v2383
        %4061 = vmatpush.bf16.msra.mxu0 %v2367
        %4062 = vmatpush.bf16.msra.mxu0 %v2351
        %4063 = vmatpush.bf16.msra.mxu0 %v2335
        %4064 = vmatpush.bf16.msra.mxu0 %v2319
        %4065 = vmatmul.bf16.gmra.mxu0 %v761
        %v4066 = vpop.f32.mrf.mxu0
        %v4067 = vadd.f32 0.0, %v4066
        %v4068 = vpop.f32.mrf.mxu0
        %4069 = vdwg.mxu0
        %4070 = vmatpush.bf16.msra.mxu0 %v2559
        %4071 = vmatpush.bf16.msra.mxu0 %v2543
        %4072 = vmatpush.bf16.msra.mxu0 %v2527
        %4073 = vmatpush.bf16.msra.mxu0 %v2511
        %4074 = vmatpush.bf16.msra.mxu0 %v2495
        %4075 = vmatpush.bf16.msra.mxu0 %v2479
        %4076 = vmatpush.bf16.msra.mxu0 %v2463
        %4077 = vmatpush.bf16.msra.mxu0 %v2447
        %4078 = vmatmul.bf16.gmra.mxu0 %v762
        %v4079 = vpop.f32.mrf.mxu0
        %v4080 = vadd.f32 %v4067, %v4079
        %v4081 = vpop.f32.mrf.mxu0
        %4082 = vdwg.mxu0
        %4083 = vmatpush.bf16.msra.mxu0 %v2687
        %4084 = vmatpush.bf16.msra.mxu0 %v2671
        %4085 = vmatpush.bf16.msra.mxu0 %v2655
        %4086 = vmatpush.bf16.msra.mxu0 %v2639
        %4087 = vmatpush.bf16.msra.mxu0 %v2623
        %4088 = vmatpush.bf16.msra.mxu0 %v2607
        %4089 = vmatpush.bf16.msra.mxu0 %v2591
        %4090 = vmatpush.bf16.msra.mxu0 %v2575
        %4091 = vmatmul.bf16.gmra.mxu0 %v763
        %v4092 = vpop.f32.mrf.mxu0
        %v4093 = vadd.f32 %v4080, %v4092
        %v4094 = vpop.f32.mrf.mxu0
        %4095 = vdwg.mxu0
        %4096 = vmatpush.bf16.msra.mxu0 %v2815
        %4097 = vmatpush.bf16.msra.mxu0 %v2799
        %4098 = vmatpush.bf16.msra.mxu0 %v2783
        %4099 = vmatpush.bf16.msra.mxu0 %v2767
        %4100 = vmatpush.bf16.msra.mxu0 %v2751
        %4101 = vmatpush.bf16.msra.mxu0 %v2735
        %4102 = vmatpush.bf16.msra.mxu0 %v2719
        %4103 = vmatpush.bf16.msra.mxu0 %v2703
        %4104 = vmatmul.bf16.gmra.mxu0 %v764
        %v4105 = vpop.f32.mrf.mxu0
        %v4106 = vadd.f32 %v4093, %v4105
        %v4107 = vpop.f32.mrf.mxu0
        %4108 = vdwg.mxu0
        %4109 = vmatpush.bf16.msra.mxu0 %v2432
        %4110 = vmatpush.bf16.msra.mxu0 %v2416
        %4111 = vmatpush.bf16.msra.mxu0 %v2400
        %4112 = vmatpush.bf16.msra.mxu0 %v2384
        %4113 = vmatpush.bf16.msra.mxu0 %v2368
        %4114 = vmatpush.bf16.msra.mxu0 %v2352
        %4115 = vmatpush.bf16.msra.mxu0 %v2336
        %4116 = vmatpush.bf16.msra.mxu0 %v2320
        %4117 = vmatmul.bf16.gmra.mxu0 %v761
        %v4118 = vpop.f32.mrf.mxu0
        %v4119 = vadd.f32 0.0, %v4118
        %v4120 = vpop.f32.mrf.mxu0
        %4121 = vdwg.mxu0
        %4122 = vmatpush.bf16.msra.mxu0 %v2560
        %4123 = vmatpush.bf16.msra.mxu0 %v2544
        %4124 = vmatpush.bf16.msra.mxu0 %v2528
        %4125 = vmatpush.bf16.msra.mxu0 %v2512
        %4126 = vmatpush.bf16.msra.mxu0 %v2496
        %4127 = vmatpush.bf16.msra.mxu0 %v2480
        %4128 = vmatpush.bf16.msra.mxu0 %v2464
        %4129 = vmatpush.bf16.msra.mxu0 %v2448
        %4130 = vmatmul.bf16.gmra.mxu0 %v762
        %v4131 = vpop.f32.mrf.mxu0
        %v4132 = vadd.f32 %v4119, %v4131
        %v4133 = vpop.f32.mrf.mxu0
        %4134 = vdwg.mxu0
        %4135 = vmatpush.bf16.msra.mxu0 %v2688
        %4136 = vmatpush.bf16.msra.mxu0 %v2672
        %4137 = vmatpush.bf16.msra.mxu0 %v2656
        %4138 = vmatpush.bf16.msra.mxu0 %v2640
        %4139 = vmatpush.bf16.msra.mxu0 %v2624
        %4140 = vmatpush.bf16.msra.mxu0 %v2608
        %4141 = vmatpush.bf16.msra.mxu0 %v2592
        %4142 = vmatpush.bf16.msra.mxu0 %v2576
        %4143 = vmatmul.bf16.gmra.mxu0 %v763
        %v4144 = vpop.f32.mrf.mxu0
        %v4145 = vadd.f32 %v4132, %v4144
        %v4146 = vpop.f32.mrf.mxu0
        %4147 = vdwg.mxu0
        %4148 = vmatpush.bf16.msra.mxu0 %v2816
        %4149 = vmatpush.bf16.msra.mxu0 %v2800
        %4150 = vmatpush.bf16.msra.mxu0 %v2784
        %4151 = vmatpush.bf16.msra.mxu0 %v2768
        %4152 = vmatpush.bf16.msra.mxu0 %v2752
        %4153 = vmatpush.bf16.msra.mxu0 %v2736
        %4154 = vmatpush.bf16.msra.mxu0 %v2720
        %4155 = vmatpush.bf16.msra.mxu0 %v2704
        %4156 = vmatmul.bf16.gmra.mxu0 %v764
        %v4157 = vpop.f32.mrf.mxu0
        %v4158 = vadd.f32 %v4145, %v4157
        %v4159 = vpop.f32.mrf.mxu0
        %4160 = vdwg.mxu0
        %v4177 = vrot.slane %v3430, 6
        %v4178 = vrot.slane %v3482, 4
        %v4179 = vrot.slane %v3534, 2
        %v4180 = vrot.slane %v3638, 6
        %v4181 = vrot.slane %v3690, 4
        %v4182 = vrot.slane %v3742, 2
        %v4183 = vrot.slane %v3846, 6
        %v4184 = vrot.slane %v3898, 4
        %v4185 = vrot.slane %v3950, 2
        %v4186 = vrot.slane %v4054, 6
        %v4187 = vrot.slane %v4106, 4
        %v4188 = vrot.slane %v4158, 2
        %vm4189 = vcmask 1041408
        %v4190 = vsel %vm4189, %v3378, %v4177
        %vm4191 = vcmask 1045508
        %v4192 = vsel %vm4191, %v4178, %v4179
        %vm4193 = vcmask 1043456
        %v4194 = vsel %vm4193, %v4190, %v4192
        %v4195 = vsel %vm4189, %v3586, %v4180
        %v4196 = vsel %vm4191, %v4181, %v4182
        %v4197 = vsel %vm4193, %v4195, %v4196
        %v4198 = vsel %vm4189, %v3794, %v4183
        %v4199 = vsel %vm4191, %v4184, %v4185
        %v4200 = vsel %vm4193, %v4198, %v4199
        %v4201 = vsel %vm4189, %v4002, %v4186
        %v4202 = vsel %vm4191, %v4187, %v4188
        %v4203 = vsel %vm4193, %v4201, %v4202
        %v4208 = vadd.f32 %v242, %v4194
        %v4209 = vadd.f32 %v243, %v4197
        %v4210 = vadd.f32 %v244, %v4200
        %v4211 = vadd.f32 %v245, %v4203
        %4212 = vst [vmem:[#allocation2] sm:$0xff] %v4208
        %4213 = vst [vmem:[#allocation2 + $0x8] sm:$0xff] %v4209
        %4214 = vst [vmem:[#allocation2 + $0x10] sm:$0xff] %v4210
        %4215 = vst [vmem:[#allocation2 + $0x18] sm:$0xff] %v4211
        %p4216 = scmp.eq.s32.totalorder %s27, 3
        // Predicated region
        $region41: #{tpu_custom_call.1} parent=27 // pred_check
          %p4217 = pneg %p4216
        $region42: #{tpu_custom_call.1} parent=27 // pred_check_branch
          %4219 = sbr.rel (%p4217) target = $region44
        $region43: #{tpu_custom_call.1} parent=27 // pred_region
          %v4220 = vld [vmem:[#allocation2] sm:$0xff]
          %v4221 = vld [vmem:[#allocation2 + $0x8] sm:$0xff]
          %v4222 = vld [vmem:[#allocation2 + $0x10] sm:$0xff]
          %v4223 = vld [vmem:[#allocation2 + $0x18] sm:$0xff]
          %4224 = vst [vmem:[%s227] sm:$0xff] %v4220
          %4225 = vst [vmem:[%s227 + $0x8] sm:$0xff] %v4221
          %4226 = vst [vmem:[%s227 + $0x10] sm:$0xff] %v4222
          %4227 = vst [vmem:[%s227 + $0x18] sm:$0xff] %v4223
        $region44: #{tpu_custom_call.1} parent=27 // pred_fallthru
          _
        %s4228 = sand.u32 %s102, 1
        %s4229 = scalar_lea.sflag [#allocation5], %s4228
        %s4230 = sand.u32 %s102, 1
        %s4231 = smul.addr %s4230, 32
        %s4232 = scalar_lea.vmem [#allocation8], %s4231
        // Predicated region
        $region45: #{tpu_custom_call.1} parent=27 // pred_check
          %p4233 = pneg %p112
        $region46: #{tpu_custom_call.1} parent=27 // pred_check_branch
          %4235 = sbr.rel (%p4233) target = $region48
        $region47: #{tpu_custom_call.1} parent=27 // pred_region
          %4237 = vsyncadd %s4229, 0
          %s4238 = smul.addr %s26, 16
          %s4239 = smul.addr %s4238, 2
          %s4240 = scalar_lea.hbm %s2, %s4239
          %s4242 = sshll.u32 %s4232, 4
          %s4243 = int_to_ptr.vmem [resolvable:$true] %s4242
          %s4244 = sshll.u32 %s4240, 4
          %s4245 = int_to_ptr.hbm [resolvable:$true] %s4244
          %4247 = dma.vmem_to_hbm [thread:$0]  %s4243, 512, %s4245, %s4229
        $region48: #{tpu_custom_call.1} parent=27 // pred_fallthru
          _
      $region28: #{tpu_custom_call.1} parent=5 // pred_fallthru
        _
      %p4248 = scmp.le.s32.totalorder 2, %s17
      // Predicated region
      $region49: #{tpu_custom_call.1} parent=5 // pred_check
        %p4249 = pneg %p4248
      $region50: #{tpu_custom_call.1} parent=5 // pred_check_branch
        %4251 = sbr.rel (%p4249) target = $region52
      $region51: #{tpu_custom_call.1} parent=5 // pred_region
        %s4252 = ssub.s32 %s17, 2
        // Predicated region
        $region53: #{tpu_custom_call.1} parent=51 // pred_check
          %p4253 = pneg %p118
        $region54: #{tpu_custom_call.1} parent=51 // pred_check_branch
          %4255 = sbr.rel (%p4253) target = $region56
        $region55: #{tpu_custom_call.1} parent=51 // pred_region
          %s4256 = sand.u32 %s103, 1
          %s4257 = scalar_lea.sflag [#allocation5], %s4256
          %s4258 = sand.u32 %s103, 1
          %s4259 = smul.addr %s4258, 32
          %s4260 = scalar_lea.vmem [#allocation8], %s4259
          %4262 = dma.done %s4257, 512
        $region56: #{tpu_custom_call.1} parent=51 // pred_fallthru
          _
      $region52: #{tpu_custom_call.1} parent=5 // pred_fallthru
        _
    $region6: #{tpu_custom_call.1} parent=1 // loop_footer
      %s21 = sadd.s32 1, %s17
    $region7: #{tpu_custom_call.1} parent=1 // loop_footer_branch
      %16 = sbr.rel target = $region3
    $region8: #{tpu_custom_call.1} parent=1 // loop_exit
      _
    %4263 = vsyncpa [#allocation4], 1
    %s4264 = scalar_lea.sflag [#allocation4], 1
    %4265 = vsyncpa %s4264, 1
    %4266 = vsyncpa [#allocation7], 1
    %s4267 = scalar_lea.sflag [#allocation7], 1
    %4268 = vsyncpa %s4267, 1
    %4269 = vsyncpa [#allocation5], 1
    %s4270 = scalar_lea.sflag [#allocation5], 1
    %4271 = vsyncpa %s4270, 1

</llo_original>
